<compile_context>
chip_gen: v7x
topology: tpu7x:2x2x1
jax: 0.10.0
libtpu: 0.0.40
codegen_flags: <defaults>
</compile_context>

<pallas_src>
import functools

import jax
import jax.numpy as jnp
from jax.experimental import pallas as pl
from jax.experimental.pallas import tpu as pltpu

OUT_PAD = 128          # lane-dense padded width of the final layer
_TM_CAP = 1024         # max rows per batch tile (VMEM-safe on every generation)


def _round_up(n, m):
    return ((n + m - 1) // m) * m


def _device_kind():
    try:
        return jax.devices()[0].device_kind.lower()
    except Exception:
        return ""


def _num_tensorcores():
    # v7x exposes 2 TensorCores per chip; "parallel" grid axes shard across them.
    kind = _device_kind()
    return 2 if ("v7" in kind or "tpu7" in kind) else 1


def _use_bf16_epilogue():
    # v6e / v7x have a bf16 VPU path; v5e (and older) do not -> keep f32 epilogue there.
    kind = _device_kind()
    return ("v6" in kind) or ("v7" in kind) or ("tpu7" in kind)


def _pick_tm(batch, n_cores, cap=_TM_CAP):
    """Rows per batch tile: as big as possible (fewest grid steps), while giving
    every TensorCore at least one tile, capped so VMEM stays comfortable."""
    b = max(int(batch), 1)
    n_steps = max(n_cores, pl.cdiv(b, cap))
    return _round_up(pl.cdiv(b, n_steps), 8)


def mlp_kernel(x_ref,
               w1_ref, b1_ref,
               w2_ref, b2_ref,
               w3_ref, b3_ref,
               w4_ref, b4_ref,
               out_ref, *, act_dtype):
    """Entire fused forward pass for one (TM, K) batch tile.

    MXU operands in bf16, f32 accumulation; bias/ReLU epilogue in `act_dtype`
    (bf16 on v6e/v7x, f32 on v5e).  Final bias add + store stay f32.
    """
    def layer(h_bf16, w_ref, b_ref):
        acc = jnp.dot(h_bf16, w_ref[...], preferred_element_type=jnp.float32)
        acc = acc.astype(act_dtype) + b_ref[...].astype(act_dtype)
        acc = jnp.maximum(acc, 0.0)
        return acc.astype(jnp.bfloat16)          # MXU operand for the next layer

    h = layer(x_ref[...].astype(jnp.bfloat16), w1_ref, b1_ref)
    h = layer(h, w2_ref, b2_ref)
    h = layer(h, w3_ref, b3_ref)

    out = jnp.dot(h, w4_ref[...], preferred_element_type=jnp.float32) + b4_ref[...]
    out_ref[...] = out.astype(out_ref.dtype)


@functools.partial(
    jax.jit,
    static_argnames=("action_size", "tm", "bf16_epilogue", "padded_output",
                     "single_buffer_weights"))
def _nn_forward_impl(x, params, *, action_size, tm, bf16_epilogue,
                     padded_output, single_buffer_weights):
    B, K = x.shape
    Bp = _round_up(B, tm)
    if Bp != B:
        x = jnp.pad(x, ((0, Bp - B), (0, 0)))

    # Params are expected to already be bf16 (weights) / f32 (biases); the
    # astype below is then a trace-time no-op (no per-call HBM conversion pass).
    def as_bf16(w):
        return w if w.dtype == jnp.bfloat16 else w.astype(jnp.bfloat16)

    w1, w2, w3, w4 = (as_bf16(params[k]) for k in ("w1", "w2", "w3", "w4"))
    b1, b2, b3, b4 = (params[k].astype(jnp.float32)
                      for k in ("b1", "b2", "b3", "b4"))

    # Weights/biases: constant block index -> DMA'd once, resident in VMEM for
    # every grid step; single-buffered since the block never changes.
    if single_buffer_weights:
        def resident(a):
            return pl.BlockSpec(a.shape, lambda i: (0, 0),
                                pipeline_mode=pl.Buffered(1))
    else:
        def resident(a):
            return pl.BlockSpec(a.shape, lambda i: (0, 0))

    act_dtype = jnp.bfloat16 if bf16_epilogue else jnp.float32

    out = pl.pallas_call(
        functools.partial(mlp_kernel, act_dtype=act_dtype),
        out_shape=jax.ShapeDtypeStruct((Bp, OUT_PAD), jnp.float32),
        grid_spec=pltpu.PrefetchScalarGridSpec(
            num_scalar_prefetch=0,
            grid=(Bp // tm,),
            in_specs=[
                pl.BlockSpec((tm, K), lambda i: (i, 0)),
                resident(w1), resident(b1),
                resident(w2), resident(b2),
                resident(w3), resident(b3),
                resident(w4), resident(b4),
            ],
            out_specs=pl.BlockSpec((tm, OUT_PAD), lambda i: (i, 0)),
        ),
        compiler_params=pltpu.CompilerParams(
            dimension_semantics=("parallel",),   # shards batch tiles across v7x TCs
            vmem_limit_bytes=48 * 1024 * 1024,   # headroom for TM up to the cap,
                                                 # still under v7x's 64 MiB physical
        ),
    )(x, w1, b1, w2, b2, w3, b3, w4, b4)

    if padded_output:
        # Return the padded [Bp, OUT_PAD] slab (no extra slice pass over HBM);
        # padded action columns are the zero-padded w4/b4 lanes, padded rows are
        # the forward of zero input rows.
        return out
    return out[:B, :action_size]


def nn_forward(x, params, *, action_size, tm=None, padded_output=False):
    """Fused Pallas forward for the NN module.

    x:       [B, input_size * stack_frame] float32
    params:  dict with w1..w4 ([in, out], bf16, w4 lane-padded to OUT_PAD) and
             b1..b4 ([1, out], f32, b4 lane-padded to OUT_PAD).
    returns: [B, action_size] float32 (or the padded [Bp, OUT_PAD] slab).
    """
    if tm is None:
        tm = _pick_tm(x.shape[0], _num_tensorcores())
    kwargs = dict(action_size=action_size, tm=tm,
                  bf16_epilogue=_use_bf16_epilogue(),
                  padded_output=padded_output)
    try:
        return _nn_forward_impl(x, params, single_buffer_weights=True, **kwargs)
    except Exception:
        # Fallback only if single-buffered resident blocks (pl.Buffered(1)) are
        # rejected by this JAX/Mosaic build; semantics are identical.
        return _nn_forward_impl(x, params, single_buffer_weights=False, **kwargs)


def init_params(key, input_size, stack_frame, action_size):
    """Deterministic init mimicking nn.Linear.

    Weights are stored transposed ([in, out]) and cast to bf16 ONCE here (the
    kernel's MXU operand dtype); biases stay f32; fc4 is lane-padded to OUT_PAD
    with exact zeros (sliced off in the wrapper).
    """
    in_dim = input_size * stack_frame
    dims = [(in_dim, 128), (128, 512), (512, 512), (512, action_size)]
    params = {}
    for i, (fan_in, fan_out) in enumerate(dims, start=1):
        key, kw, kb = jax.random.split(key, 3)
        bound = 1.0 / jnp.sqrt(fan_in)
        w = jax.random.uniform(kw, (fan_in, fan_out), jnp.float32, -bound, bound)
        b = jax.random.uniform(kb, (1, fan_out), jnp.float32, -bound, bound)
        if i == 4:
            w = jnp.pad(w, ((0, 0), (0, OUT_PAD - fan_out)))
            b = jnp.pad(b, ((0, 0), (0, OUT_PAD - fan_out)))
        params[f"w{i}"] = w.astype(jnp.bfloat16)   # cast once at init, not per call
        params[f"b{i}"] = b
    return params


def nn_forward_ref(x, params, action_size, bf16_epilogue):
    """Pure-JAX reference with the same bf16-operand / f32-accumulate /
    (bf16|f32)-epilogue math as the kernel."""
    act_dtype = jnp.bfloat16 if bf16_epilogue else jnp.float32

    def layer(h, w, b):
        acc = jnp.dot(h.astype(jnp.bfloat16), w.astype(jnp.bfloat16),
                      preferred_element_type=jnp.float32)
        acc = acc.astype(act_dtype) + b.astype(act_dtype)
        return jnp.maximum(acc, 0.0)

    h = layer(x, params["w1"], params["b1"])
    h = layer(h, params["w2"], params["b2"])
    h = layer(h, params["w3"], params["b3"])
    out = jnp.dot(h.astype(jnp.bfloat16), params["w4"].astype(jnp.bfloat16),
                  preferred_element_type=jnp.float32) + params["b4"].astype(jnp.float32)
    return out[:, :action_size]


def nn_forward_ref_f32(x, params, action_size):
    """Full-f32 reference (PyTorch module semantics; only the one-time bf16
    weight quantization differs)."""
    def f32(a):
        return a.astype(jnp.float32)
    h = jnp.maximum(x @ f32(params["w1"]) + f32(params["b1"]), 0.0)
    h = jnp.maximum(h @ f32(params["w2"]) + f32(params["b2"]), 0.0)
    h = jnp.maximum(h @ f32(params["w3"]) + f32(params["b3"]), 0.0)
    return (h @ f32(params["w4"]) + f32(params["b4"]))[:, :action_size]


if __name__ == "__main__":
    # Small, forward-consistent sizes: input_size=8, stack_frame=4, action_size=6.
    input_size, stack_frame, action_size = 8, 4, 6
    key = jax.random.PRNGKey(0)
    key, kx1, kx2 = jax.random.split(key, 3)
    params = init_params(key, input_size, stack_frame, action_size)
    bf16_epi = _use_bf16_epilogue()

    # Small batch: single tile (single grid step on 1-TC chips).
    x = jax.random.normal(kx1, (8, input_size * stack_frame), jnp.float32)
    out = jax.block_until_ready(nn_forward(x, params, action_size=action_size))
    assert out.shape == (8, action_size)
    ref = nn_forward_ref(x, params, action_size, bf16_epi)
    assert jnp.allclose(out, ref, atol=5e-3, rtol=5e-3), "mismatch vs matched-precision reference"
    ref32 = nn_forward_ref_f32(x, params, action_size)
    assert jnp.allclose(out, ref32, atol=5e-2, rtol=5e-2), "mismatch vs f32 reference"
    # bf16 weights/activations can perturb Q-values by ~1e-2, which may flip
    # near-tied argmax actions vs the f32 PyTorch module (acknowledged tradeoff).

    # Non-multiple batch: exercises minimal row padding (130 -> 136, not 256)
    # and, on v7x, a 2-step "parallel" grid that feeds both TensorCores.
    xb = jax.random.normal(kx2, (130, input_size * stack_frame), jnp.float32)
    outb = jax.block_until_ready(nn_forward(xb, params, action_size=action_size))
    assert outb.shape == (130, action_size)
    refb = nn_forward_ref(xb, params, action_size, bf16_epi)
    assert jnp.allclose(outb, refb, atol=5e-3, rtol=5e-3), "mismatch vs matched-precision reference (B=130)"

    print("KERNEL_OK")
</pallas_src>

<mosaic_0001>
module attributes {stable_mosaic.version = 11 : i64} {
  func.func @mlp_kernel(%arg0: i32, %arg1: memref<8x32xf32, #tpu.memory_space<vmem>>, %arg2: memref<32x128xbf16, #tpu.memory_space<vmem>>, %arg3: memref<1x128xf32, #tpu.memory_space<vmem>>, %arg4: memref<128x512xbf16, #tpu.memory_space<vmem>>, %arg5: memref<1x512xf32, #tpu.memory_space<vmem>>, %arg6: memref<512x512xbf16, #tpu.memory_space<vmem>>, %arg7: memref<1x512xf32, #tpu.memory_space<vmem>>, %arg8: memref<512x128xbf16, #tpu.memory_space<vmem>>, %arg9: memref<1x128xf32, #tpu.memory_space<vmem>>, %arg10: memref<8x128xf32, #tpu.memory_space<vmem>>) attributes {dimension_semantics = [#tpu.dimension_semantics<parallel>], iteration_bounds = array<i64: 1>, scalar_prefetch = 0 : i64, scratch_operands = 0 : i64, tpu.core_type = #tpu.core_type<tc>, window_params = [{transform_indices = @transform_0, window_bounds = array<i64: 8, 32>}, {pipeline_mode = #tpu.pipeline_mode<synchronous>, transform_indices = @transform_1, window_bounds = array<i64: 32, 128>}, {pipeline_mode = #tpu.pipeline_mode<synchronous>, transform_indices = @transform_2, window_bounds = array<i64: 1, 128>}, {pipeline_mode = #tpu.pipeline_mode<synchronous>, transform_indices = @transform_3, window_bounds = array<i64: 128, 512>}, {pipeline_mode = #tpu.pipeline_mode<synchronous>, transform_indices = @transform_4, window_bounds = array<i64: 1, 512>}, {pipeline_mode = #tpu.pipeline_mode<synchronous>, transform_indices = @transform_5, window_bounds = array<i64: 512, 512>}, {pipeline_mode = #tpu.pipeline_mode<synchronous>, transform_indices = @transform_6, window_bounds = array<i64: 1, 512>}, {pipeline_mode = #tpu.pipeline_mode<synchronous>, transform_indices = @transform_7, window_bounds = array<i64: 512, 128>}, {pipeline_mode = #tpu.pipeline_mode<synchronous>, transform_indices = @transform_8, window_bounds = array<i64: 1, 128>}, {transform_indices = @transform_9, window_bounds = array<i64: 8, 128>}]} {
    %c0 = arith.constant 0 : index
    %c0_0 = arith.constant 0 : index
    %0 = vector.load %arg1[%c0, %c0_0] : memref<8x32xf32, #tpu.memory_space<vmem>>, vector<8x32xf32>
    %1 = arith.truncf %0 : vector<8x32xf32> to vector<8x32xbf16>
    %c0_1 = arith.constant 0 : index
    %c0_2 = arith.constant 0 : index
    %2 = vector.load %arg2[%c0_1, %c0_2] : memref<32x128xbf16, #tpu.memory_space<vmem>>, vector<32x128xbf16>
    %cst = arith.constant dense<0.000000e+00> : vector<8x128xf32>
    %3 = tpu.matmul %1, %2, %cst {dimension_numbers = #tpu.dot_dimension_numbers<[1], [0], [0], [1], [0, 0, 1, 1], [], []>} : vector<8x32xbf16>, vector<32x128xbf16>, vector<8x128xf32> -> vector<8x128xf32>
    %c0_3 = arith.constant 0 : index
    %c0_4 = arith.constant 0 : index
    %4 = vector.load %arg3[%c0_3, %c0_4] : memref<1x128xf32, #tpu.memory_space<vmem>>, vector<1x128xf32>
    %5 = vector.broadcast %4 : vector<1x128xf32> to vector<8x128xf32>
    %6 = arith.addf %3, %5 : vector<8x128xf32>
    %cst_5 = arith.constant 0.000000e+00 : f32
    %7 = vector.broadcast %cst_5 : f32 to vector<8x128xf32>
    %8 = arith.maximumf %6, %7 : vector<8x128xf32>
    %9 = arith.truncf %8 : vector<8x128xf32> to vector<8x128xbf16>
    %c0_6 = arith.constant 0 : index
    %c0_7 = arith.constant 0 : index
    %10 = vector.load %arg4[%c0_6, %c0_7] : memref<128x512xbf16, #tpu.memory_space<vmem>>, vector<128x512xbf16>
    %cst_8 = arith.constant dense<0.000000e+00> : vector<8x512xf32>
    %11 = tpu.matmul %9, %10, %cst_8 {dimension_numbers = #tpu.dot_dimension_numbers<[1], [0], [0], [1], [0, 0, 1, 1], [], []>} : vector<8x128xbf16>, vector<128x512xbf16>, vector<8x512xf32> -> vector<8x512xf32>
    %c0_9 = arith.constant 0 : index
    %c0_10 = arith.constant 0 : index
    %12 = vector.load %arg5[%c0_9, %c0_10] : memref<1x512xf32, #tpu.memory_space<vmem>>, vector<1x512xf32>
    %13 = vector.broadcast %12 : vector<1x512xf32> to vector<8x512xf32>
    %14 = arith.addf %11, %13 : vector<8x512xf32>
    %cst_11 = arith.constant 0.000000e+00 : f32
    %15 = vector.broadcast %cst_11 : f32 to vector<8x512xf32>
    %16 = arith.maximumf %14, %15 : vector<8x512xf32>
    %17 = arith.truncf %16 : vector<8x512xf32> to vector<8x512xbf16>
    %c0_12 = arith.constant 0 : index
    %c0_13 = arith.constant 0 : index
    %18 = vector.load %arg6[%c0_12, %c0_13] : memref<512x512xbf16, #tpu.memory_space<vmem>>, vector<512x512xbf16>
    %cst_14 = arith.constant dense<0.000000e+00> : vector<8x512xf32>
    %19 = tpu.matmul %17, %18, %cst_14 {dimension_numbers = #tpu.dot_dimension_numbers<[1], [0], [0], [1], [0, 0, 1, 1], [], []>} : vector<8x512xbf16>, vector<512x512xbf16>, vector<8x512xf32> -> vector<8x512xf32>
    %c0_15 = arith.constant 0 : index
    %c0_16 = arith.constant 0 : index
    %20 = vector.load %arg7[%c0_15, %c0_16] : memref<1x512xf32, #tpu.memory_space<vmem>>, vector<1x512xf32>
    %21 = vector.broadcast %20 : vector<1x512xf32> to vector<8x512xf32>
    %22 = arith.addf %19, %21 : vector<8x512xf32>
    %cst_17 = arith.constant 0.000000e+00 : f32
    %23 = vector.broadcast %cst_17 : f32 to vector<8x512xf32>
    %24 = arith.maximumf %22, %23 : vector<8x512xf32>
    %25 = arith.truncf %24 : vector<8x512xf32> to vector<8x512xbf16>
    %c0_18 = arith.constant 0 : index
    %c0_19 = arith.constant 0 : index
    %26 = vector.load %arg8[%c0_18, %c0_19] : memref<512x128xbf16, #tpu.memory_space<vmem>>, vector<512x128xbf16>
    %cst_20 = arith.constant dense<0.000000e+00> : vector<8x128xf32>
    %27 = tpu.matmul %25, %26, %cst_20 {dimension_numbers = #tpu.dot_dimension_numbers<[1], [0], [0], [1], [0, 0, 1, 1], [], []>} : vector<8x512xbf16>, vector<512x128xbf16>, vector<8x128xf32> -> vector<8x128xf32>
    %c0_21 = arith.constant 0 : index
    %c0_22 = arith.constant 0 : index
    %28 = vector.load %arg9[%c0_21, %c0_22] : memref<1x128xf32, #tpu.memory_space<vmem>>, vector<1x128xf32>
    %29 = vector.broadcast %28 : vector<1x128xf32> to vector<8x128xf32>
    %30 = arith.addf %27, %29 : vector<8x128xf32>
    %c0_23 = arith.constant 0 : index
    %c0_24 = arith.constant 0 : index
    %31 = vector.load %arg10[%c0_23, %c0_24] : memref<8x128xf32, #tpu.memory_space<vmem>>, vector<8x128xf32>
    tpu.vector_store %arg10[%c0_23, %c0_24], %30 {strides = array<i32>} : memref<8x128xf32, #tpu.memory_space<vmem>>, vector<8x128xf32>,
    return
  }
  func.func @transform_0(%arg0: i32) -> (i32, i32) {
    %c0_i32 = arith.constant 0 : i32
    %c0_i32_0 = arith.constant 0 : i32
    return %arg0, %c0_i32 : i32, i32
  }
  func.func @transform_1(%arg0: i32) -> (i32, i32) {
    %c0_i32 = arith.constant 0 : i32
    %c0_i32_0 = arith.constant 0 : i32
    %c0_i32_1 = arith.constant 0 : i32
    return %c0_i32, %c0_i32_0 : i32, i32
  }
  func.func @transform_2(%arg0: i32) -> (i32, i32) {
    %c0_i32 = arith.constant 0 : i32
    %c0_i32_0 = arith.constant 0 : i32
    %c0_i32_1 = arith.constant 0 : i32
    return %c0_i32, %c0_i32_0 : i32, i32
  }
  func.func @transform_3(%arg0: i32) -> (i32, i32) {
    %c0_i32 = arith.constant 0 : i32
    %c0_i32_0 = arith.constant 0 : i32
    %c0_i32_1 = arith.constant 0 : i32
    return %c0_i32, %c0_i32_0 : i32, i32
  }
  func.func @transform_4(%arg0: i32) -> (i32, i32) {
    %c0_i32 = arith.constant 0 : i32
    %c0_i32_0 = arith.constant 0 : i32
    %c0_i32_1 = arith.constant 0 : i32
    return %c0_i32, %c0_i32_0 : i32, i32
  }
  func.func @transform_5(%arg0: i32) -> (i32, i32) {
    %c0_i32 = arith.constant 0 : i32
    %c0_i32_0 = arith.constant 0 : i32
    %c0_i32_1 = arith.constant 0 : i32
    return %c0_i32, %c0_i32_0 : i32, i32
  }
  func.func @transform_6(%arg0: i32) -> (i32, i32) {
    %c0_i32 = arith.constant 0 : i32
    %c0_i32_0 = arith.constant 0 : i32
    %c0_i32_1 = arith.constant 0 : i32
    return %c0_i32, %c0_i32_0 : i32, i32
  }
  func.func @transform_7(%arg0: i32) -> (i32, i32) {
    %c0_i32 = arith.constant 0 : i32
    %c0_i32_0 = arith.constant 0 : i32
    %c0_i32_1 = arith.constant 0 : i32
    return %c0_i32, %c0_i32_0 : i32, i32
  }
  func.func @transform_8(%arg0: i32) -> (i32, i32) {
    %c0_i32 = arith.constant 0 : i32
    %c0_i32_0 = arith.constant 0 : i32
    %c0_i32_1 = arith.constant 0 : i32
    return %c0_i32, %c0_i32_0 : i32, i32
  }
  func.func @transform_9(%arg0: i32) -> (i32, i32) {
    %c0_i32 = arith.constant 0 : i32
    %c0_i32_0 = arith.constant 0 : i32
    return %arg0, %c0_i32 : i32, i32
  }
}

module attributes {stable_mosaic.version = 11 : i64} {
  func.func @mlp_kernel(%arg0: i32, %arg1: memref<8x32xf32, #tpu.memory_space<vmem>>, %arg2: memref<32x128xbf16, #tpu.memory_space<vmem>>, %arg3: memref<1x128xf32, #tpu.memory_space<vmem>>, %arg4: memref<128x512xbf16, #tpu.memory_space<vmem>>, %arg5: memref<1x512xf32, #tpu.memory_space<vmem>>, %arg6: memref<512x512xbf16, #tpu.memory_space<vmem>>, %arg7: memref<1x512xf32, #tpu.memory_space<vmem>>, %arg8: memref<512x128xbf16, #tpu.memory_space<vmem>>, %arg9: memref<1x128xf32, #tpu.memory_space<vmem>>, %arg10: memref<8x128xf32, #tpu.memory_space<vmem>>) attributes {dimension_semantics = [#tpu.dimension_semantics<parallel>], iteration_bounds = array<i64: 1>, scalar_prefetch = 0 : i64, scratch_operands = 0 : i64, tpu.core_type = #tpu.core_type<tc>, window_params = [{transform_indices = @transform_0, window_bounds = array<i64: 8, 32>}, {pipeline_mode = #tpu.pipeline_mode<synchronous>, transform_indices = @transform_1, window_bounds = array<i64: 32, 128>}, {pipeline_mode = #tpu.pipeline_mode<synchronous>, transform_indices = @transform_2, window_bounds = array<i64: 1, 128>}, {pipeline_mode = #tpu.pipeline_mode<synchronous>, transform_indices = @transform_3, window_bounds = array<i64: 128, 512>}, {pipeline_mode = #tpu.pipeline_mode<synchronous>, transform_indices = @transform_4, window_bounds = array<i64: 1, 512>}, {pipeline_mode = #tpu.pipeline_mode<synchronous>, transform_indices = @transform_5, window_bounds = array<i64: 512, 512>}, {pipeline_mode = #tpu.pipeline_mode<synchronous>, transform_indices = @transform_6, window_bounds = array<i64: 1, 512>}, {pipeline_mode = #tpu.pipeline_mode<synchronous>, transform_indices = @transform_7, window_bounds = array<i64: 512, 128>}, {pipeline_mode = #tpu.pipeline_mode<synchronous>, transform_indices = @transform_8, window_bounds = array<i64: 1, 128>}, {transform_indices = @transform_9, window_bounds = array<i64: 8, 128>}]} {
    %c0 = arith.constant 0 : index
    %c0_0 = arith.constant 0 : index
    %0 = vector.load %arg1[%c0, %c0_0] : memref<8x32xf32, #tpu.memory_space<vmem>>, vector<8x32xf32>
    %1 = arith.truncf %0 : vector<8x32xf32> to vector<8x32xbf16>
    %c0_1 = arith.constant 0 : index
    %c0_2 = arith.constant 0 : index
    %2 = vector.load %arg2[%c0_1, %c0_2] : memref<32x128xbf16, #tpu.memory_space<vmem>>, vector<32x128xbf16>
    %cst = arith.constant dense<0.000000e+00> : vector<8x128xf32>
    %3 = tpu.matmul %1, %2, %cst {dimension_numbers = #tpu.dot_dimension_numbers<[1], [0], [0], [1], [0, 0, 1, 1], [], []>} : vector<8x32xbf16>, vector<32x128xbf16>, vector<8x128xf32> -> vector<8x128xf32>
    %c0_3 = arith.constant 0 : index
    %c0_4 = arith.constant 0 : index
    %4 = vector.load %arg3[%c0_3, %c0_4] : memref<1x128xf32, #tpu.memory_space<vmem>>, vector<1x128xf32>
    %5 = vector.broadcast %4 : vector<1x128xf32> to vector<8x128xf32>
    %6 = arith.addf %3, %5 : vector<8x128xf32>
    %cst_5 = arith.constant 0.000000e+00 : f32
    %7 = vector.broadcast %cst_5 : f32 to vector<8x128xf32>
    %8 = arith.maximumf %6, %7 : vector<8x128xf32>
    %9 = arith.truncf %8 : vector<8x128xf32> to vector<8x128xbf16>
    %c0_6 = arith.constant 0 : index
    %c0_7 = arith.constant 0 : index
    %10 = vector.load %arg4[%c0_6, %c0_7] : memref<128x512xbf16, #tpu.memory_space<vmem>>, vector<128x512xbf16>
    %cst_8 = arith.constant dense<0.000000e+00> : vector<8x512xf32>
    %11 = tpu.matmul %9, %10, %cst_8 {dimension_numbers = #tpu.dot_dimension_numbers<[1], [0], [0], [1], [0, 0, 1, 1], [], []>} : vector<8x128xbf16>, vector<128x512xbf16>, vector<8x512xf32> -> vector<8x512xf32>
    %c0_9 = arith.constant 0 : index
    %c0_10 = arith.constant 0 : index
    %12 = vector.load %arg5[%c0_9, %c0_10] : memref<1x512xf32, #tpu.memory_space<vmem>>, vector<1x512xf32>
    %13 = vector.broadcast %12 : vector<1x512xf32> to vector<8x512xf32>
    %14 = arith.addf %11, %13 : vector<8x512xf32>
    %cst_11 = arith.constant 0.000000e+00 : f32
    %15 = vector.broadcast %cst_11 : f32 to vector<8x512xf32>
    %16 = arith.maximumf %14, %15 : vector<8x512xf32>
    %17 = arith.truncf %16 : vector<8x512xf32> to vector<8x512xbf16>
    %c0_12 = arith.constant 0 : index
    %c0_13 = arith.constant 0 : index
    %18 = vector.load %arg6[%c0_12, %c0_13] : memref<512x512xbf16, #tpu.memory_space<vmem>>, vector<512x512xbf16>
    %cst_14 = arith.constant dense<0.000000e+00> : vector<8x512xf32>
    %19 = tpu.matmul %17, %18, %cst_14 {dimension_numbers = #tpu.dot_dimension_numbers<[1], [0], [0], [1], [0, 0, 1, 1], [], []>} : vector<8x512xbf16>, vector<512x512xbf16>, vector<8x512xf32> -> vector<8x512xf32>
    %c0_15 = arith.constant 0 : index
    %c0_16 = arith.constant 0 : index
    %20 = vector.load %arg7[%c0_15, %c0_16] : memref<1x512xf32, #tpu.memory_space<vmem>>, vector<1x512xf32>
    %21 = vector.broadcast %20 : vector<1x512xf32> to vector<8x512xf32>
    %22 = arith.addf %19, %21 : vector<8x512xf32>
    %cst_17 = arith.constant 0.000000e+00 : f32
    %23 = vector.broadcast %cst_17 : f32 to vector<8x512xf32>
    %24 = arith.maximumf %22, %23 : vector<8x512xf32>
    %25 = arith.truncf %24 : vector<8x512xf32> to vector<8x512xbf16>
    %c0_18 = arith.constant 0 : index
    %c0_19 = arith.constant 0 : index
    %26 = vector.load %arg8[%c0_18, %c0_19] : memref<512x128xbf16, #tpu.memory_space<vmem>>, vector<512x128xbf16>
    %cst_20 = arith.constant dense<0.000000e+00> : vector<8x128xf32>
    %27 = tpu.matmul %25, %26, %cst_20 {dimension_numbers = #tpu.dot_dimension_numbers<[1], [0], [0], [1], [0, 0, 1, 1], [], []>} : vector<8x512xbf16>, vector<512x128xbf16>, vector<8x128xf32> -> vector<8x128xf32>
    %c0_21 = arith.constant 0 : index
    %c0_22 = arith.constant 0 : index
    %28 = vector.load %arg9[%c0_21, %c0_22] : memref<1x128xf32, #tpu.memory_space<vmem>>, vector<1x128xf32>
    %29 = vector.broadcast %28 : vector<1x128xf32> to vector<8x128xf32>
    %30 = arith.addf %27, %29 : vector<8x128xf32>
    %c0_23 = arith.constant 0 : index
    %c0_24 = arith.constant 0 : index
    %31 = vector.load %arg10[%c0_23, %c0_24] : memref<8x128xf32, #tpu.memory_space<vmem>>, vector<8x128xf32>
    tpu.vector_store %arg10[%c0_23, %c0_24], %30 {strides = array<i32>} : memref<8x128xf32, #tpu.memory_space<vmem>>, vector<8x128xf32>,
    return
  }
  func.func @transform_0(%arg0: i32) -> (i32, i32) {
    %c0_i32 = arith.constant 0 : i32
    %c0_i32_0 = arith.constant 0 : i32
    return %arg0, %c0_i32 : i32, i32
  }
  func.func @transform_1(%arg0: i32) -> (i32, i32) {
    %c0_i32 = arith.constant 0 : i32
    %c0_i32_0 = arith.constant 0 : i32
    %c0_i32_1 = arith.constant 0 : i32
    return %c0_i32, %c0_i32_0 : i32, i32
  }
  func.func @transform_2(%arg0: i32) -> (i32, i32) {
    %c0_i32 = arith.constant 0 : i32
    %c0_i32_0 = arith.constant 0 : i32
    %c0_i32_1 = arith.constant 0 : i32
    return %c0_i32, %c0_i32_0 : i32, i32
  }
  func.func @transform_3(%arg0: i32) -> (i32, i32) {
    %c0_i32 = arith.constant 0 : i32
    %c0_i32_0 = arith.constant 0 : i32
    %c0_i32_1 = arith.constant 0 : i32
    return %c0_i32, %c0_i32_0 : i32, i32
  }
  func.func @transform_4(%arg0: i32) -> (i32, i32) {
    %c0_i32 = arith.constant 0 : i32
    %c0_i32_0 = arith.constant 0 : i32
    %c0_i32_1 = arith.constant 0 : i32
    return %c0_i32, %c0_i32_0 : i32, i32
  }
  func.func @transform_5(%arg0: i32) -> (i32, i32) {
    %c0_i32 = arith.constant 0 : i32
    %c0_i32_0 = arith.constant 0 : i32
    %c0_i32_1 = arith.constant 0 : i32
    return %c0_i32, %c0_i32_0 : i32, i32
  }
  func.func @transform_6(%arg0: i32) -> (i32, i32) {
    %c0_i32 = arith.constant 0 : i32
    %c0_i32_0 = arith.constant 0 : i32
    %c0_i32_1 = arith.constant 0 : i32
    return %c0_i32, %c0_i32_0 : i32, i32
  }
  func.func @transform_7(%arg0: i32) -> (i32, i32) {
    %c0_i32 = arith.constant 0 : i32
    %c0_i32_0 = arith.constant 0 : i32
    %c0_i32_1 = arith.constant 0 : i32
    return %c0_i32, %c0_i32_0 : i32, i32
  }
  func.func @transform_8(%arg0: i32) -> (i32, i32) {
    %c0_i32 = arith.constant 0 : i32
    %c0_i32_0 = arith.constant 0 : i32
    %c0_i32_1 = arith.constant 0 : i32
    return %c0_i32, %c0_i32_0 : i32, i32
  }
  func.func @transform_9(%arg0: i32) -> (i32, i32) {
    %c0_i32 = arith.constant 0 : i32
    %c0_i32_0 = arith.constant 0 : i32
    return %arg0, %c0_i32 : i32, i32
  }
}

</mosaic_0001>

<llo_original>
// kernel: _nn_forward_impl.1
$region0: #{_nn_forward_impl.1}
  #allocation0 [shape = 'u32[]', space=smem, size = 0x4, offset = 0x4, fixed_abs, tag = 'smem constant byte address 0x4 - core index']
  #allocation1 [shape = 'u32[144,128]{1,0:T(1,128)}', space=vmem, size = 0x12000, scoped, tag = 'internal scratch']
  %s0 = inlined_call_operand.hbm [shape: f32[8,32], index: 0, kind: input, shape index: {}]
  %s1 = inlined_call_operand.vmem [shape: bf16[32,128], index: 1, kind: input, shape index: {}]
  %s2 = inlined_call_operand.vmem [shape: f32[1,128], index: 2, kind: input, shape index: {}]
  %s3 = inlined_call_operand.hbm [shape: bf16[128,512], index: 3, kind: input, shape index: {}]
  %s4 = inlined_call_operand.hbm [shape: f32[1,512], index: 4, kind: input, shape index: {}]
  %s5 = inlined_call_operand.hbm [shape: bf16[512,512], index: 5, kind: input, shape index: {}]
  %s6 = inlined_call_operand.hbm [shape: f32[1,512], index: 6, kind: input, shape index: {}]
  %s7 = inlined_call_operand.hbm [shape: bf16[512,128], index: 7, kind: input, shape index: {}]
  %s8 = inlined_call_operand.vmem [shape: f32[1,128], index: 8, kind: input, shape index: {}]
  %s9 = inlined_call_operand.hbm [shape: f32[8,128], index: 9, kind: output, shape index: {}]
  %s10 = sld [smem:[#allocation0]]
  $region70: #{_nn_forward_impl.1} parent=0
    _
  %s12 = ssub.s32 1, %s10
  %s13 = scalar_select 0, %s12, %s10
  $region1: #{_nn_forward_impl.1} parent=0
    #allocation2 [shape = 'u8[4096]{0}', space=vmem, size = 0x1000, scoped, tag = 'input window, operand 0, single buffered']
    #allocation3 [shape = 's32[1]{0}', space=sflag, size = 0x4, scoped, tag = 'scoped memory for _nn_forward_impl.1']
    #allocation4 [shape = 's32[1]{0}', space=sflag, size = 0x4, scoped, tag = 'scoped memory for _nn_forward_impl.1']
    #allocation5 [shape = 'u8[131072]{0}', space=vmem, size = 0x20000, scoped, tag = 'input window, operand 3, single buffered']
    #allocation6 [shape = 's32[1]{0}', space=sflag, size = 0x4, scoped, tag = 'scoped memory for _nn_forward_impl.1']
    #allocation7 [shape = 'u8[2048]{0}', space=vmem, size = 0x800, scoped, tag = 'input window, operand 4, single buffered']
    #allocation8 [shape = 'u8[524288]{0}', space=vmem, size = 0x80000, scoped, tag = 'input window, operand 5, single buffered']
    #allocation9 [shape = 's32[1]{0}', space=sflag, size = 0x4, scoped, tag = 'scoped memory for _nn_forward_impl.1']
    #allocation10 [shape = 'u8[2048]{0}', space=vmem, size = 0x800, scoped, tag = 'input window, operand 6, single buffered']
    #allocation11 [shape = 'u8[131072]{0}', space=vmem, size = 0x20000, scoped, tag = 'input window, operand 7, single buffered']
    #allocation12 [shape = 's32[1]{0}', space=sflag, size = 0x4, scoped, tag = 'scoped memory for _nn_forward_impl.1']
    #allocation13 [shape = 'u8[4096]{0}', space=vmem, size = 0x1000, scoped, tag = 'output window, operand 0, single buffered']
    %14 = vsyncpa [#allocation3], 0
    %15 = vsyncpa [#allocation6], 0
    %16 = vsyncpa [#allocation9], 0
    %17 = vsyncpa [#allocation12], 0
    %18 = vsyncpa [#allocation4], 0
    // Predicated region
    $region2: #{_nn_forward_impl.1} parent=1 // pred_check
      _
    $region3: #{_nn_forward_impl.1} parent=1 // pred_check_branch
      %20 = sbr.rel (0) target = $region5
    $region4: #{_nn_forward_impl.1} parent=1 // pred_region
      %s22 = ssub.s32 128, 128
      %23 = vsyncadd [#allocation3], %s22
      %s25 = sshll.u32 [#allocation2], 4
      %s26 = int_to_ptr.vmem [resolvable:$true] %s25
      %28 = dma.hbm_to_vmem [thread:$0]  %s0, 128, %s26, [#allocation3]
    $region5: #{_nn_forward_impl.1} parent=1 // pred_fallthru
      _
    // Predicated region
    $region6: #{_nn_forward_impl.1} parent=1 // pred_check
      _
    $region7: #{_nn_forward_impl.1} parent=1 // pred_check_branch
      %30 = sbr.rel (0) target = $region9
    $region8: #{_nn_forward_impl.1} parent=1 // pred_region
      _
    $region9: #{_nn_forward_impl.1} parent=1 // pred_fallthru
      _
    // Predicated region
    $region10: #{_nn_forward_impl.1} parent=1 // pred_check
      _
    $region11: #{_nn_forward_impl.1} parent=1 // pred_check_branch
      %32 = sbr.rel (0) target = $region13
    $region12: #{_nn_forward_impl.1} parent=1 // pred_region
      _
    $region13: #{_nn_forward_impl.1} parent=1 // pred_fallthru
      _
    // Predicated region
    $region14: #{_nn_forward_impl.1} parent=1 // pred_check
      _
    $region15: #{_nn_forward_impl.1} parent=1 // pred_check_branch
      %34 = sbr.rel (0) target = $region17
    $region16: #{_nn_forward_impl.1} parent=1 // pred_region
      %s36 = ssub.s32 4096, 4096
      %37 = vsyncadd [#allocation6], %s36
      %s38 = sshll.u32 [#allocation5], 4
      %s39 = int_to_ptr.vmem [resolvable:$true] %s38
      %44 = dma.hbm_to_vmem [thread:$0]  %s3, 4096, %s39, [#allocation6], 256, 256, 16
    $region17: #{_nn_forward_impl.1} parent=1 // pred_fallthru
      _
    // Predicated region
    $region18: #{_nn_forward_impl.1} parent=1 // pred_check
      _
    $region19: #{_nn_forward_impl.1} parent=1 // pred_check_branch
      %46 = sbr.rel (0) target = $region21
    $region20: #{_nn_forward_impl.1} parent=1 // pred_region
      %s48 = ssub.s32 64, 64
      %49 = vsyncadd [#allocation6], %s48
      %s51 = sshll.u32 [#allocation7], 4
      %s52 = int_to_ptr.vmem [resolvable:$true] %s51
      %54 = dma.hbm_to_vmem [thread:$0]  %s4, 64, %s52, [#allocation6]
    $region21: #{_nn_forward_impl.1} parent=1 // pred_fallthru
      _
    // Predicated region
    $region22: #{_nn_forward_impl.1} parent=1 // pred_check
      _
    $region23: #{_nn_forward_impl.1} parent=1 // pred_check_branch
      %56 = sbr.rel (0) target = $region25
    $region24: #{_nn_forward_impl.1} parent=1 // pred_region
      %s58 = ssub.s32 16384, 16384
      %59 = vsyncadd [#allocation9], %s58
      %s60 = sshll.u32 [#allocation8], 4
      %s61 = int_to_ptr.vmem [resolvable:$true] %s60
      %66 = dma.hbm_to_vmem [thread:$0]  %s5, 16384, %s61, [#allocation9], 256, 256, 16
    $region25: #{_nn_forward_impl.1} parent=1 // pred_fallthru
      _
    // Predicated region
    $region26: #{_nn_forward_impl.1} parent=1 // pred_check
      _
    $region27: #{_nn_forward_impl.1} parent=1 // pred_check_branch
      %68 = sbr.rel (0) target = $region29
    $region28: #{_nn_forward_impl.1} parent=1 // pred_region
      %s70 = ssub.s32 64, 64
      %71 = vsyncadd [#allocation9], %s70
      %s73 = sshll.u32 [#allocation10], 4
      %s74 = int_to_ptr.vmem [resolvable:$true] %s73
      %76 = dma.hbm_to_vmem [thread:$0]  %s6, 64, %s74, [#allocation9]
    $region29: #{_nn_forward_impl.1} parent=1 // pred_fallthru
      _
    // Predicated region
    $region30: #{_nn_forward_impl.1} parent=1 // pred_check
      _
    $region31: #{_nn_forward_impl.1} parent=1 // pred_check_branch
      %78 = sbr.rel (0) target = $region33
    $region32: #{_nn_forward_impl.1} parent=1 // pred_region
      %s80 = ssub.s32 4096, 4096
      %81 = vsyncadd [#allocation12], %s80
      %s82 = sshll.u32 [#allocation11], 4
      %s83 = int_to_ptr.vmem [resolvable:$true] %s82
      %88 = dma.hbm_to_vmem [thread:$0]  %s7, 4096, %s83, [#allocation12], 64, 64, 4
    $region33: #{_nn_forward_impl.1} parent=1 // pred_fallthru
      _
    // Predicated region
    $region34: #{_nn_forward_impl.1} parent=1 // pred_check
      _
    $region35: #{_nn_forward_impl.1} parent=1 // pred_check_branch
      %90 = sbr.rel (0) target = $region37
    $region36: #{_nn_forward_impl.1} parent=1 // pred_region
      _
    $region37: #{_nn_forward_impl.1} parent=1 // pred_fallthru
      _
    // Predicated region
    $region38: #{_nn_forward_impl.1} parent=1 // pred_check
      _
    $region39: #{_nn_forward_impl.1} parent=1 // pred_check_branch
      %92 = sbr.rel (0) target = $region41
    $region40: #{_nn_forward_impl.1} parent=1 // pred_region
      %93 = dma.done [#allocation3], 128
    $region41: #{_nn_forward_impl.1} parent=1 // pred_fallthru
      _
    // Predicated region
    $region42: #{_nn_forward_impl.1} parent=1 // pred_check
      _
    $region43: #{_nn_forward_impl.1} parent=1 // pred_check_branch
      %95 = sbr.rel (0) target = $region45
    $region44: #{_nn_forward_impl.1} parent=1 // pred_region
      %96 = dma.done [#allocation6], 4096
    $region45: #{_nn_forward_impl.1} parent=1 // pred_fallthru
      _
    // Predicated region
    $region46: #{_nn_forward_impl.1} parent=1 // pred_check
      _
    $region47: #{_nn_forward_impl.1} parent=1 // pred_check_branch
      %98 = sbr.rel (0) target = $region49
    $region48: #{_nn_forward_impl.1} parent=1 // pred_region
      %99 = dma.done [#allocation6], 64
    $region49: #{_nn_forward_impl.1} parent=1 // pred_fallthru
      _
    // Predicated region
    $region50: #{_nn_forward_impl.1} parent=1 // pred_check
      _
    $region51: #{_nn_forward_impl.1} parent=1 // pred_check_branch
      %101 = sbr.rel (0) target = $region53
    $region52: #{_nn_forward_impl.1} parent=1 // pred_region
      %102 = dma.done [#allocation9], 16384
    $region53: #{_nn_forward_impl.1} parent=1 // pred_fallthru
      _
    // Predicated region
    $region54: #{_nn_forward_impl.1} parent=1 // pred_check
      _
    $region55: #{_nn_forward_impl.1} parent=1 // pred_check_branch
      %104 = sbr.rel (0) target = $region57
    $region56: #{_nn_forward_impl.1} parent=1 // pred_region
      %105 = dma.done [#allocation9], 64
    $region57: #{_nn_forward_impl.1} parent=1 // pred_fallthru
      _
    // Predicated region
    $region58: #{_nn_forward_impl.1} parent=1 // pred_check
      _
    $region59: #{_nn_forward_impl.1} parent=1 // pred_check_branch
      %107 = sbr.rel (0) target = $region61
    $region60: #{_nn_forward_impl.1} parent=1 // pred_region
      %108 = dma.done [#allocation12], 4096
    $region61: #{_nn_forward_impl.1} parent=1 // pred_fallthru
      _
    %v110 = vld [vmem:[#allocation2] sm:$0xff]
    %v111 = vpack.c.bf16 %v110, %v110
    %v112 = vld [vmem:[%s1] sm:$0xf]
    %v113 = vld [vmem:[%s1 + $0x4] sm:$0xf]
    %v114 = vld [vmem:[%s1 + $0x8] sm:$0xf]
    %v115 = vld [vmem:[%s1 + $0xc] sm:$0xf]
    %v116 = vld [vmem:[%s2] sm:$0x1]
    %v118 = vlaneseq
    %v119 = vshrl.u32 %v118, 7
    %v120 = vsub.s32 0, %v119
    %v121 = vrot.slane %v116, %v120
    %v127 = vunpack.c.l.b16 %v112
    %v128 = vunpack.c.l.b16 %v113
    %v129 = vunpack.c.l.b16 %v114
    %v130 = vunpack.c.l.b16 %v115
    %v131 = vpack.c.b16 %v128, %v127
    %v132 = vpack.c.b16 %v130, %v129
    %vm135 = vcmask 261120
    %v137 = vsel %vm135, %v111, 0
    %139 = vmatprep.subr.bf16.mxu0 0
    %140 = vmatpush1.bf16.msra.mxu0 %v131
    %141 = vmatprep.subr.bf16.mxu0 0
    %142 = vmatpush1.bf16.msra.mxu0 %v132
    %143 = vmatprep.subr.bf16.mxu0 0
    %144 = vmatpush1.bf16.msra.mxu0 0
    %145 = vmatprep.subr.bf16.mxu0 0
    %146 = vmatpush1.bf16.msra.mxu0 0
    %147 = vmatprep.subr.bf16.mxu0 0
    %148 = vmatpush1.bf16.msra.mxu0 0
    %149 = vmatprep.subr.bf16.mxu0 0
    %150 = vmatpush1.bf16.msra.mxu0 0
    %151 = vmatprep.subr.bf16.mxu0 0
    %152 = vmatpush1.bf16.msra.mxu0 0
    %153 = vmatprep.subr.bf16.mxu0 0
    %154 = vmatpush1.bf16.msra.mxu0 0
    %155 = vmatprep.subr.bf16.mxu0 0
    %156 = vmatpush1.bf16.msra.mxu0 0
    %157 = vmatprep.subr.bf16.mxu0 0
    %158 = vmatpush1.bf16.msra.mxu0 0
    %159 = vmatprep.subr.bf16.mxu0 0
    %160 = vmatpush1.bf16.msra.mxu0 0
    %161 = vmatprep.subr.bf16.mxu0 0
    %162 = vmatpush1.bf16.msra.mxu0 0
    %163 = vmatprep.subr.bf16.mxu0 0
    %164 = vmatpush1.bf16.msra.mxu0 0
    %165 = vmatprep.subr.bf16.mxu0 0
    %166 = vmatpush1.bf16.msra.mxu0 0
    %167 = vmatprep.subr.bf16.mxu0 0
    %168 = vmatpush1.bf16.msra.mxu0 0
    %169 = vmatprep.subr.bf16.mxu0 0
    %170 = vmatpush1.bf16.msra.mxu0 0
    %171 = vmatprep.mubr.bf16.mxu0 0
    %172 = vmatmul.mubr.bf16.gmra.mrb[0].mxu0 %v137
    %v173 = vpop.f32.mrb[0].mxu0
    %v174 = vadd.f32 %v121, %v173
    %v175 = vpop.f32.mrb[0].mxu0
    %v176 = vpop.f32.mrb[0].mxu0
    %v177 = vpop.f32.mrb[0].mxu0
    %178 = vdwg.mxu0
    %v179 = vmax.f32 %v174, 0.0
    %v180 = vpack.c.bf16 %v179, %v179
    %v181 = vld [vmem:[#allocation5] sm:$0xff]
    %v182 = vld [vmem:[#allocation5 + $0x8] sm:$0xff]
    %v183 = vld [vmem:[#allocation5 + $0x10] sm:$0xff]
    %v184 = vld [vmem:[#allocation5 + $0x18] sm:$0xff]
    %v185 = vld [vmem:[#allocation5 + $0x20] sm:$0xff]
    %v186 = vld [vmem:[#allocation5 + $0x28] sm:$0xff]
    %v187 = vld [vmem:[#allocation5 + $0x30] sm:$0xff]
    %v188 = vld [vmem:[#allocation5 + $0x38] sm:$0xff]
    %v189 = vld [vmem:[#allocation5 + $0x40] sm:$0xff]
    %v190 = vld [vmem:[#allocation5 + $0x48] sm:$0xff]
    %v191 = vld [vmem:[#allocation5 + $0x50] sm:$0xff]
    %v192 = vld [vmem:[#allocation5 + $0x58] sm:$0xff]
    %v193 = vld [vmem:[#allocation5 + $0x60] sm:$0xff]
    %v194 = vld [vmem:[#allocation5 + $0x68] sm:$0xff]
    %v195 = vld [vmem:[#allocation5 + $0x70] sm:$0xff]
    %v196 = vld [vmem:[#allocation5 + $0x78] sm:$0xff]
    %v197 = vld [vmem:[#allocation5 + $0x80] sm:$0xff]
    %v198 = vld [vmem:[#allocation5 + $0x88] sm:$0xff]
    %v199 = vld [vmem:[#allocation5 + $0x90] sm:$0xff]
    %v200 = vld [vmem:[#allocation5 + $0x98] sm:$0xff]
    %v201 = vld [vmem:[#allocation5 + $0xa0] sm:$0xff]
    %v202 = vld [vmem:[#allocation5 + $0xa8] sm:$0xff]
    %v203 = vld [vmem:[#allocation5 + $0xb0] sm:$0xff]
    %v204 = vld [vmem:[#allocation5 + $0xb8] sm:$0xff]
    %v205 = vld [vmem:[#allocation5 + $0xc0] sm:$0xff]
    %v206 = vld [vmem:[#allocation5 + $0xc8] sm:$0xff]
    %v207 = vld [vmem:[#allocation5 + $0xd0] sm:$0xff]
    %v208 = vld [vmem:[#allocation5 + $0xd8] sm:$0xff]
    %v209 = vld [vmem:[#allocation5 + $0xe0] sm:$0xff]
    %v210 = vld [vmem:[#allocation5 + $0xe8] sm:$0xff]
    %v211 = vld [vmem:[#allocation5 + $0xf0] sm:$0xff]
    %v212 = vld [vmem:[#allocation5 + $0xf8] sm:$0xff]
    %v213 = vld [vmem:[#allocation7] sm:$0xf]
    %v215 = vlaneseq
    %v216 = vshrl.u32 %v215, 7
    %v217 = vsub.s32 0, %v216
    %v218 = vrot.slane %v213, %v217
    %v219 = vlaneseq
    %v220 = vshrl.u32 %v219, 7
    %v221 = vsub.s32 1, %v220
    %v222 = vrot.slane %v213, %v221
    %v223 = vlaneseq
    %v224 = vshrl.u32 %v223, 7
    %v225 = vsub.s32 2, %v224
    %v226 = vrot.slane %v213, %v225
    %v227 = vlaneseq
    %v228 = vshrl.u32 %v227, 7
    %v229 = vsub.s32 3, %v228
    %v230 = vrot.slane %v213, %v229
    %v267 = vunpack.c.l.b16 %v181
    %v268 = vunpack.c.h.b16 %v181
    %v269 = vunpack.c.l.b16 %v182
    %v270 = vunpack.c.h.b16 %v182
    %v271 = vunpack.c.l.b16 %v183
    %v272 = vunpack.c.h.b16 %v183
    %v273 = vunpack.c.l.b16 %v184
    %v274 = vunpack.c.h.b16 %v184
    %v275 = vunpack.c.l.b16 %v185
    %v276 = vunpack.c.h.b16 %v185
    %v277 = vunpack.c.l.b16 %v186
    %v278 = vunpack.c.h.b16 %v186
    %v279 = vunpack.c.l.b16 %v187
    %v280 = vunpack.c.h.b16 %v187
    %v281 = vunpack.c.l.b16 %v188
    %v282 = vunpack.c.h.b16 %v188
    %v283 = vunpack.c.l.b16 %v189
    %v284 = vunpack.c.h.b16 %v189
    %v285 = vunpack.c.l.b16 %v190
    %v286 = vunpack.c.h.b16 %v190
    %v287 = vunpack.c.l.b16 %v191
    %v288 = vunpack.c.h.b16 %v191
    %v289 = vunpack.c.l.b16 %v192
    %v290 = vunpack.c.h.b16 %v192
    %v291 = vunpack.c.l.b16 %v193
    %v292 = vunpack.c.h.b16 %v193
    %v293 = vunpack.c.l.b16 %v194
    %v294 = vunpack.c.h.b16 %v194
    %v295 = vunpack.c.l.b16 %v195
    %v296 = vunpack.c.h.b16 %v195
    %v297 = vunpack.c.l.b16 %v196
    %v298 = vunpack.c.h.b16 %v196
    %v299 = vunpack.c.l.b16 %v197
    %v300 = vunpack.c.h.b16 %v197
    %v301 = vunpack.c.l.b16 %v198
    %v302 = vunpack.c.h.b16 %v198
    %v303 = vunpack.c.l.b16 %v199
    %v304 = vunpack.c.h.b16 %v199
    %v305 = vunpack.c.l.b16 %v200
    %v306 = vunpack.c.h.b16 %v200
    %v307 = vunpack.c.l.b16 %v201
    %v308 = vunpack.c.h.b16 %v201
    %v309 = vunpack.c.l.b16 %v202
    %v310 = vunpack.c.h.b16 %v202
    %v311 = vunpack.c.l.b16 %v203
    %v312 = vunpack.c.h.b16 %v203
    %v313 = vunpack.c.l.b16 %v204
    %v314 = vunpack.c.h.b16 %v204
    %v315 = vunpack.c.l.b16 %v205
    %v316 = vunpack.c.h.b16 %v205
    %v317 = vunpack.c.l.b16 %v206
    %v318 = vunpack.c.h.b16 %v206
    %v319 = vunpack.c.l.b16 %v207
    %v320 = vunpack.c.h.b16 %v207
    %v321 = vunpack.c.l.b16 %v208
    %v322 = vunpack.c.h.b16 %v208
    %v323 = vunpack.c.l.b16 %v209
    %v324 = vunpack.c.h.b16 %v209
    %v325 = vunpack.c.l.b16 %v210
    %v326 = vunpack.c.h.b16 %v210
    %v327 = vunpack.c.l.b16 %v211
    %v328 = vunpack.c.h.b16 %v211
    %v329 = vunpack.c.l.b16 %v212
    %v330 = vunpack.c.h.b16 %v212
    %v331 = vpack.c.b16 %v271, %v267
    %v332 = vpack.c.b16 %v272, %v268
    %v333 = vpack.c.b16 %v273, %v269
    %v334 = vpack.c.b16 %v274, %v270
    %v335 = vpack.c.b16 %v279, %v275
    %v336 = vpack.c.b16 %v280, %v276
    %v337 = vpack.c.b16 %v281, %v277
    %v338 = vpack.c.b16 %v282, %v278
    %v339 = vpack.c.b16 %v287, %v283
    %v340 = vpack.c.b16 %v288, %v284
    %v341 = vpack.c.b16 %v289, %v285
    %v342 = vpack.c.b16 %v290, %v286
    %v343 = vpack.c.b16 %v295, %v291
    %v344 = vpack.c.b16 %v296, %v292
    %v345 = vpack.c.b16 %v297, %v293
    %v346 = vpack.c.b16 %v298, %v294
    %v347 = vpack.c.b16 %v303, %v299
    %v348 = vpack.c.b16 %v304, %v300
    %v349 = vpack.c.b16 %v305, %v301
    %v350 = vpack.c.b16 %v306, %v302
    %v351 = vpack.c.b16 %v311, %v307
    %v352 = vpack.c.b16 %v312, %v308
    %v353 = vpack.c.b16 %v313, %v309
    %v354 = vpack.c.b16 %v314, %v310
    %v355 = vpack.c.b16 %v319, %v315
    %v356 = vpack.c.b16 %v320, %v316
    %v357 = vpack.c.b16 %v321, %v317
    %v358 = vpack.c.b16 %v322, %v318
    %v359 = vpack.c.b16 %v327, %v323
    %v360 = vpack.c.b16 %v328, %v324
    %v361 = vpack.c.b16 %v329, %v325
    %v362 = vpack.c.b16 %v330, %v326
    %395 = vmatprep.subr.bf16.mxu0 %v332
    %396 = vmatpush1.bf16.msra.mxu0 %v331
    %397 = vmatprep.subr.bf16.mxu0 %v336
    %398 = vmatpush1.bf16.msra.mxu0 %v335
    %399 = vmatprep.subr.bf16.mxu0 %v340
    %400 = vmatpush1.bf16.msra.mxu0 %v339
    %401 = vmatprep.subr.bf16.mxu0 %v344
    %402 = vmatpush1.bf16.msra.mxu0 %v343
    %403 = vmatprep.subr.bf16.mxu0 %v348
    %404 = vmatpush1.bf16.msra.mxu0 %v347
    %405 = vmatprep.subr.bf16.mxu0 %v352
    %406 = vmatpush1.bf16.msra.mxu0 %v351
    %407 = vmatprep.subr.bf16.mxu0 %v356
    %408 = vmatpush1.bf16.msra.mxu0 %v355
    %409 = vmatprep.subr.bf16.mxu0 %v360
    %410 = vmatpush1.bf16.msra.mxu0 %v359
    %411 = vmatprep.subr.bf16.mxu0 0
    %412 = vmatpush1.bf16.msra.mxu0 0
    %413 = vmatprep.subr.bf16.mxu0 0
    %414 = vmatpush1.bf16.msra.mxu0 0
    %415 = vmatprep.subr.bf16.mxu0 0
    %416 = vmatpush1.bf16.msra.mxu0 0
    %417 = vmatprep.subr.bf16.mxu0 0
    %418 = vmatpush1.bf16.msra.mxu0 0
    %419 = vmatprep.subr.bf16.mxu0 0
    %420 = vmatpush1.bf16.msra.mxu0 0
    %421 = vmatprep.subr.bf16.mxu0 0
    %422 = vmatpush1.bf16.msra.mxu0 0
    %423 = vmatprep.subr.bf16.mxu0 0
    %424 = vmatpush1.bf16.msra.mxu0 0
    %425 = vmatprep.subr.bf16.mxu0 0
    %426 = vmatpush1.bf16.msra.mxu0 0
    %427 = vmatprep.mubr.bf16.mxu0 0
    %428 = vmatmul.mubr.bf16.gmra.mrb[0].mxu0 %v180
    %v429 = vpop.f32.mrb[0].mxu0
    %v430 = vadd.f32 %v218, %v429
    %v431 = vpop.f32.mrb[0].mxu0
    %v432 = vadd.f32 %v222, %v431
    %v433 = vpop.f32.mrb[0].mxu0
    %v434 = vpop.f32.mrb[0].mxu0
    %435 = vdwg.mxu0
    %436 = vmatprep.subr.bf16.mxu0 %v334
    %437 = vmatpush1.bf16.msra.mxu0 %v333
    %438 = vmatprep.subr.bf16.mxu0 %v338
    %439 = vmatpush1.bf16.msra.mxu0 %v337
    %440 = vmatprep.subr.bf16.mxu0 %v342
    %441 = vmatpush1.bf16.msra.mxu0 %v341
    %442 = vmatprep.subr.bf16.mxu0 %v346
    %443 = vmatpush1.bf16.msra.mxu0 %v345
    %444 = vmatprep.subr.bf16.mxu0 %v350
    %445 = vmatpush1.bf16.msra.mxu0 %v349
    %446 = vmatprep.subr.bf16.mxu0 %v354
    %447 = vmatpush1.bf16.msra.mxu0 %v353
    %448 = vmatprep.subr.bf16.mxu0 %v358
    %449 = vmatpush1.bf16.msra.mxu0 %v357
    %450 = vmatprep.subr.bf16.mxu0 %v362
    %451 = vmatpush1.bf16.msra.mxu0 %v361
    %452 = vmatprep.subr.bf16.mxu0 0
    %453 = vmatpush1.bf16.msra.mxu0 0
    %454 = vmatprep.subr.bf16.mxu0 0
    %455 = vmatpush1.bf16.msra.mxu0 0
    %456 = vmatprep.subr.bf16.mxu0 0
    %457 = vmatpush1.bf16.msra.mxu0 0
    %458 = vmatprep.subr.bf16.mxu0 0
    %459 = vmatpush1.bf16.msra.mxu0 0
    %460 = vmatprep.subr.bf16.mxu0 0
    %461 = vmatpush1.bf16.msra.mxu0 0
    %462 = vmatprep.subr.bf16.mxu0 0
    %463 = vmatpush1.bf16.msra.mxu0 0
    %464 = vmatprep.subr.bf16.mxu0 0
    %465 = vmatpush1.bf16.msra.mxu0 0
    %466 = vmatprep.subr.bf16.mxu0 0
    %467 = vmatpush1.bf16.msra.mxu0 0
    %468 = vmatprep.mubr.bf16.mxu0 0
    %469 = vmatmul.mubr.bf16.gmra.mrb[0].mxu0 %v180
    %v470 = vpop.f32.mrb[0].mxu0
    %v471 = vadd.f32 %v226, %v470
    %v472 = vpop.f32.mrb[0].mxu0
    %v473 = vadd.f32 %v230, %v472
    %v474 = vpop.f32.mrb[0].mxu0
    %v475 = vpop.f32.mrb[0].mxu0
    %476 = vdwg.mxu0
    %v477 = vmax.f32 %v430, 0.0
    %v478 = vmax.f32 %v432, 0.0
    %v479 = vmax.f32 %v471, 0.0
    %v480 = vmax.f32 %v473, 0.0
    %v481 = vpack.c.bf16 %v477, %v477
    %v482 = vpack.c.bf16 %v478, %v478
    %v483 = vpack.c.bf16 %v479, %v479
    %v484 = vpack.c.bf16 %v480, %v480
    %v485 = vld [vmem:[#allocation8] sm:$0xff]
    %v486 = vld [vmem:[#allocation8 + $0x8] sm:$0xff]
    %v487 = vld [vmem:[#allocation8 + $0x10] sm:$0xff]
    %v488 = vld [vmem:[#allocation8 + $0x18] sm:$0xff]
    %v489 = vld [vmem:[#allocation8 + $0x20] sm:$0xff]
    %v490 = vld [vmem:[#allocation8 + $0x28] sm:$0xff]
    %v491 = vld [vmem:[#allocation8 + $0x30] sm:$0xff]
    %v492 = vld [vmem:[#allocation8 + $0x38] sm:$0xff]
    %v493 = vld [vmem:[#allocation8 + $0x40] sm:$0xff]
    %v494 = vld [vmem:[#allocation8 + $0x48] sm:$0xff]
    %v495 = vld [vmem:[#allocation8 + $0x50] sm:$0xff]
    %v496 = vld [vmem:[#allocation8 + $0x58] sm:$0xff]
    %v497 = vld [vmem:[#allocation8 + $0x60] sm:$0xff]
    %v498 = vld [vmem:[#allocation8 + $0x68] sm:$0xff]
    %v499 = vld [vmem:[#allocation8 + $0x70] sm:$0xff]
    %v500 = vld [vmem:[#allocation8 + $0x78] sm:$0xff]
    %v501 = vld [vmem:[#allocation8 + $0x80] sm:$0xff]
    %v502 = vld [vmem:[#allocation8 + $0x88] sm:$0xff]
    %v503 = vld [vmem:[#allocation8 + $0x90] sm:$0xff]
    %v504 = vld [vmem:[#allocation8 + $0x98] sm:$0xff]
    %v505 = vld [vmem:[#allocation8 + $0xa0] sm:$0xff]
    %v506 = vld [vmem:[#allocation8 + $0xa8] sm:$0xff]
    %v507 = vld [vmem:[#allocation8 + $0xb0] sm:$0xff]
    %v508 = vld [vmem:[#allocation8 + $0xb8] sm:$0xff]
    %v509 = vld [vmem:[#allocation8 + $0xc0] sm:$0xff]
    %v510 = vld [vmem:[#allocation8 + $0xc8] sm:$0xff]
    %v511 = vld [vmem:[#allocation8 + $0xd0] sm:$0xff]
    %v512 = vld [vmem:[#allocation8 + $0xd8] sm:$0xff]
    %v513 = vld [vmem:[#allocation8 + $0xe0] sm:$0xff]
    %v514 = vld [vmem:[#allocation8 + $0xe8] sm:$0xff]
    %v515 = vld [vmem:[#allocation8 + $0xf0] sm:$0xff]
    %v516 = vld [vmem:[#allocation8 + $0xf8] sm:$0xff]
    %v517 = vld [vmem:[#allocation8 + $0x100] sm:$0xff]
    %v518 = vld [vmem:[#allocation8 + $0x108] sm:$0xff]
    %v519 = vld [vmem:[#allocation8 + $0x110] sm:$0xff]
    %v520 = vld [vmem:[#allocation8 + $0x118] sm:$0xff]
    %v521 = vld [vmem:[#allocation8 + $0x120] sm:$0xff]
    %v522 = vld [vmem:[#allocation8 + $0x128] sm:$0xff]
    %v523 = vld [vmem:[#allocation8 + $0x130] sm:$0xff]
    %v524 = vld [vmem:[#allocation8 + $0x138] sm:$0xff]
    %v525 = vld [vmem:[#allocation8 + $0x140] sm:$0xff]
    %v526 = vld [vmem:[#allocation8 + $0x148] sm:$0xff]
    %v527 = vld [vmem:[#allocation8 + $0x150] sm:$0xff]
    %v528 = vld [vmem:[#allocation8 + $0x158] sm:$0xff]
    %v529 = vld [vmem:[#allocation8 + $0x160] sm:$0xff]
    %v530 = vld [vmem:[#allocation8 + $0x168] sm:$0xff]
    %v531 = vld [vmem:[#allocation8 + $0x170] sm:$0xff]
    %v532 = vld [vmem:[#allocation8 + $0x178] sm:$0xff]
    %v533 = vld [vmem:[#allocation8 + $0x180] sm:$0xff]
    %v534 = vld [vmem:[#allocation8 + $0x188] sm:$0xff]
    %v535 = vld [vmem:[#allocation8 + $0x190] sm:$0xff]
    %v536 = vld [vmem:[#allocation8 + $0x198] sm:$0xff]
    %v537 = vld [vmem:[#allocation8 + $0x1a0] sm:$0xff]
    %v538 = vld [vmem:[#allocation8 + $0x1a8] sm:$0xff]
    %v539 = vld [vmem:[#allocation8 + $0x1b0] sm:$0xff]
    %v540 = vld [vmem:[#allocation8 + $0x1b8] sm:$0xff]
    %v541 = vld [vmem:[#allocation8 + $0x1c0] sm:$0xff]
    %v542 = vld [vmem:[#allocation8 + $0x1c8] sm:$0xff]
    %v543 = vld [vmem:[#allocation8 + $0x1d0] sm:$0xff]
    %v544 = vld [vmem:[#allocation8 + $0x1d8] sm:$0xff]
    %v545 = vld [vmem:[#allocation8 + $0x1e0] sm:$0xff]
    %v546 = vld [vmem:[#allocation8 + $0x1e8] sm:$0xff]
    %v547 = vld [vmem:[#allocation8 + $0x1f0] sm:$0xff]
    %v548 = vld [vmem:[#allocation8 + $0x1f8] sm:$0xff]
    %v549 = vld [vmem:[#allocation8 + $0x200] sm:$0xff]
    %v550 = vld [vmem:[#allocation8 + $0x208] sm:$0xff]
    %v551 = vld [vmem:[#allocation8 + $0x210] sm:$0xff]
    %v552 = vld [vmem:[#allocation8 + $0x218] sm:$0xff]
    %v553 = vld [vmem:[#allocation8 + $0x220] sm:$0xff]
    %v554 = vld [vmem:[#allocation8 + $0x228] sm:$0xff]
    %v555 = vld [vmem:[#allocation8 + $0x230] sm:$0xff]
    %v556 = vld [vmem:[#allocation8 + $0x238] sm:$0xff]
    %v557 = vld [vmem:[#allocation8 + $0x240] sm:$0xff]
    %v558 = vld [vmem:[#allocation8 + $0x248] sm:$0xff]
    %v559 = vld [vmem:[#allocation8 + $0x250] sm:$0xff]
    %v560 = vld [vmem:[#allocation8 + $0x258] sm:$0xff]
    %v561 = vld [vmem:[#allocation8 + $0x260] sm:$0xff]
    %v562 = vld [vmem:[#allocation8 + $0x268] sm:$0xff]
    %v563 = vld [vmem:[#allocation8 + $0x270] sm:$0xff]
    %v564 = vld [vmem:[#allocation8 + $0x278] sm:$0xff]
    %v565 = vld [vmem:[#allocation8 + $0x280] sm:$0xff]
    %v566 = vld [vmem:[#allocation8 + $0x288] sm:$0xff]
    %v567 = vld [vmem:[#allocation8 + $0x290] sm:$0xff]
    %v568 = vld [vmem:[#allocation8 + $0x298] sm:$0xff]
    %v569 = vld [vmem:[#allocation8 + $0x2a0] sm:$0xff]
    %v570 = vld [vmem:[#allocation8 + $0x2a8] sm:$0xff]
    %v571 = vld [vmem:[#allocation8 + $0x2b0] sm:$0xff]
    %v572 = vld [vmem:[#allocation8 + $0x2b8] sm:$0xff]
    %v573 = vld [vmem:[#allocation8 + $0x2c0] sm:$0xff]
    %v574 = vld [vmem:[#allocation8 + $0x2c8] sm:$0xff]
    %v575 = vld [vmem:[#allocation8 + $0x2d0] sm:$0xff]
    %v576 = vld [vmem:[#allocation8 + $0x2d8] sm:$0xff]
    %v577 = vld [vmem:[#allocation8 + $0x2e0] sm:$0xff]
    %v578 = vld [vmem:[#allocation8 + $0x2e8] sm:$0xff]
    %v579 = vld [vmem:[#allocation8 + $0x2f0] sm:$0xff]
    %v580 = vld [vmem:[#allocation8 + $0x2f8] sm:$0xff]
    %v581 = vld [vmem:[#allocation8 + $0x300] sm:$0xff]
    %v582 = vld [vmem:[#allocation8 + $0x308] sm:$0xff]
    %v583 = vld [vmem:[#allocation8 + $0x310] sm:$0xff]
    %v584 = vld [vmem:[#allocation8 + $0x318] sm:$0xff]
    %v585 = vld [vmem:[#allocation8 + $0x320] sm:$0xff]
    %v586 = vld [vmem:[#allocation8 + $0x328] sm:$0xff]
    %v587 = vld [vmem:[#allocation8 + $0x330] sm:$0xff]
    %v588 = vld [vmem:[#allocation8 + $0x338] sm:$0xff]
    %v589 = vld [vmem:[#allocation8 + $0x340] sm:$0xff]
    %v590 = vld [vmem:[#allocation8 + $0x348] sm:$0xff]
    %v591 = vld [vmem:[#allocation8 + $0x350] sm:$0xff]
    %v592 = vld [vmem:[#allocation8 + $0x358] sm:$0xff]
    %v593 = vld [vmem:[#allocation8 + $0x360] sm:$0xff]
    %v594 = vld [vmem:[#allocation8 + $0x368] sm:$0xff]
    %v595 = vld [vmem:[#allocation8 + $0x370] sm:$0xff]
    %v596 = vld [vmem:[#allocation8 + $0x378] sm:$0xff]
    %v597 = vld [vmem:[#allocation8 + $0x380] sm:$0xff]
    %v598 = vld [vmem:[#allocation8 + $0x388] sm:$0xff]
    %v599 = vld [vmem:[#allocation8 + $0x390] sm:$0xff]
    %v600 = vld [vmem:[#allocation8 + $0x398] sm:$0xff]
    %v601 = vld [vmem:[#allocation8 + $0x3a0] sm:$0xff]
    %v602 = vld [vmem:[#allocation8 + $0x3a8] sm:$0xff]
    %v603 = vld [vmem:[#allocation8 + $0x3b0] sm:$0xff]
    %v604 = vld [vmem:[#allocation8 + $0x3b8] sm:$0xff]
    %v605 = vld [vmem:[#allocation8 + $0x3c0] sm:$0xff]
    %v606 = vld [vmem:[#allocation8 + $0x3c8] sm:$0xff]
    %v607 = vld [vmem:[#allocation8 + $0x3d0] sm:$0xff]
    %v608 = vld [vmem:[#allocation8 + $0x3d8] sm:$0xff]
    %v609 = vld [vmem:[#allocation8 + $0x3e0] sm:$0xff]
    %v610 = vld [vmem:[#allocation8 + $0x3e8] sm:$0xff]
    %v611 = vld [vmem:[#allocation8 + $0x3f0] sm:$0xff]
    %v612 = vld [vmem:[#allocation8 + $0x3f8] sm:$0xff]
    %v613 = vld [vmem:[#allocation10] sm:$0xf]
    %v615 = vlaneseq
    %v616 = vshrl.u32 %v615, 7
    %v617 = vsub.s32 0, %v616
    %v618 = vrot.slane %v613, %v617
    %v619 = vlaneseq
    %v620 = vshrl.u32 %v619, 7
    %v621 = vsub.s32 1, %v620
    %v622 = vrot.slane %v613, %v621
    %v623 = vlaneseq
    %v624 = vshrl.u32 %v623, 7
    %v625 = vsub.s32 2, %v624
    %v626 = vrot.slane %v613, %v625
    %v627 = vlaneseq
    %v628 = vshrl.u32 %v627, 7
    %v629 = vsub.s32 3, %v628
    %v630 = vrot.slane %v613, %v629
    %v763 = vunpack.c.l.b16 %v485
    %v764 = vunpack.c.h.b16 %v485
    %v765 = vunpack.c.l.b16 %v486
    %v766 = vunpack.c.h.b16 %v486
    %v767 = vunpack.c.l.b16 %v487
    %v768 = vunpack.c.h.b16 %v487
    %v769 = vunpack.c.l.b16 %v488
    %v770 = vunpack.c.h.b16 %v488
    %v771 = vunpack.c.l.b16 %v489
    %v772 = vunpack.c.h.b16 %v489
    %v773 = vunpack.c.l.b16 %v490
    %v774 = vunpack.c.h.b16 %v490
    %v775 = vunpack.c.l.b16 %v491
    %v776 = vunpack.c.h.b16 %v491
    %v777 = vunpack.c.l.b16 %v492
    %v778 = vunpack.c.h.b16 %v492
    %v779 = vunpack.c.l.b16 %v493
    %v780 = vunpack.c.h.b16 %v493
    %v781 = vunpack.c.l.b16 %v494
    %v782 = vunpack.c.h.b16 %v494
    %v783 = vunpack.c.l.b16 %v495
    %v784 = vunpack.c.h.b16 %v495
    %v785 = vunpack.c.l.b16 %v496
    %v786 = vunpack.c.h.b16 %v496
    %v787 = vunpack.c.l.b16 %v497
    %v788 = vunpack.c.h.b16 %v497
    %v789 = vunpack.c.l.b16 %v498
    %v790 = vunpack.c.h.b16 %v498
    %v791 = vunpack.c.l.b16 %v499
    %v792 = vunpack.c.h.b16 %v499
    %v793 = vunpack.c.l.b16 %v500
    %v794 = vunpack.c.h.b16 %v500
    %v795 = vunpack.c.l.b16 %v501
    %v796 = vunpack.c.h.b16 %v501
    %v797 = vunpack.c.l.b16 %v502
    %v798 = vunpack.c.h.b16 %v502
    %v799 = vunpack.c.l.b16 %v503
    %v800 = vunpack.c.h.b16 %v503
    %v801 = vunpack.c.l.b16 %v504
    %v802 = vunpack.c.h.b16 %v504
    %v803 = vunpack.c.l.b16 %v505
    %v804 = vunpack.c.h.b16 %v505
    %v805 = vunpack.c.l.b16 %v506
    %v806 = vunpack.c.h.b16 %v506
    %v807 = vunpack.c.l.b16 %v507
    %v808 = vunpack.c.h.b16 %v507
    %v809 = vunpack.c.l.b16 %v508
    %v810 = vunpack.c.h.b16 %v508
    %v811 = vunpack.c.l.b16 %v509
    %v812 = vunpack.c.h.b16 %v509
    %v813 = vunpack.c.l.b16 %v510
    %v814 = vunpack.c.h.b16 %v510
    %v815 = vunpack.c.l.b16 %v511
    %v816 = vunpack.c.h.b16 %v511
    %v817 = vunpack.c.l.b16 %v512
    %v818 = vunpack.c.h.b16 %v512
    %v819 = vunpack.c.l.b16 %v513
    %v820 = vunpack.c.h.b16 %v513
    %v821 = vunpack.c.l.b16 %v514
    %v822 = vunpack.c.h.b16 %v514
    %v823 = vunpack.c.l.b16 %v515
    %v824 = vunpack.c.h.b16 %v515
    %v825 = vunpack.c.l.b16 %v516
    %v826 = vunpack.c.h.b16 %v516
    %v827 = vunpack.c.l.b16 %v517
    %v828 = vunpack.c.h.b16 %v517
    %v829 = vunpack.c.l.b16 %v518
    %v830 = vunpack.c.h.b16 %v518
    %v831 = vunpack.c.l.b16 %v519
    %v832 = vunpack.c.h.b16 %v519
    %v833 = vunpack.c.l.b16 %v520
    %v834 = vunpack.c.h.b16 %v520
    %v835 = vunpack.c.l.b16 %v521
    %v836 = vunpack.c.h.b16 %v521
    %v837 = vunpack.c.l.b16 %v522
    %v838 = vunpack.c.h.b16 %v522
    %v839 = vunpack.c.l.b16 %v523
    %v840 = vunpack.c.h.b16 %v523
    %v841 = vunpack.c.l.b16 %v524
    %v842 = vunpack.c.h.b16 %v524
    %v843 = vunpack.c.l.b16 %v525
    %v844 = vunpack.c.h.b16 %v525
    %v845 = vunpack.c.l.b16 %v526
    %v846 = vunpack.c.h.b16 %v526
    %v847 = vunpack.c.l.b16 %v527
    %v848 = vunpack.c.h.b16 %v527
    %v849 = vunpack.c.l.b16 %v528
    %v850 = vunpack.c.h.b16 %v528
    %v851 = vunpack.c.l.b16 %v529
    %v852 = vunpack.c.h.b16 %v529
    %v853 = vunpack.c.l.b16 %v530
    %v854 = vunpack.c.h.b16 %v530
    %v855 = vunpack.c.l.b16 %v531
    %v856 = vunpack.c.h.b16 %v531
    %v857 = vunpack.c.l.b16 %v532
    %v858 = vunpack.c.h.b16 %v532
    %v859 = vunpack.c.l.b16 %v533
    %v860 = vunpack.c.h.b16 %v533
    %v861 = vunpack.c.l.b16 %v534
    %v862 = vunpack.c.h.b16 %v534
    %v863 = vunpack.c.l.b16 %v535
    %v864 = vunpack.c.h.b16 %v535
    %v865 = vunpack.c.l.b16 %v536
    %v866 = vunpack.c.h.b16 %v536
    %v867 = vunpack.c.l.b16 %v537
    %v868 = vunpack.c.h.b16 %v537
    %v869 = vunpack.c.l.b16 %v538
    %v870 = vunpack.c.h.b16 %v538
    %v871 = vunpack.c.l.b16 %v539
    %v872 = vunpack.c.h.b16 %v539
    %v873 = vunpack.c.l.b16 %v540
    %v874 = vunpack.c.h.b16 %v540
    %v875 = vunpack.c.l.b16 %v541
    %v876 = vunpack.c.h.b16 %v541
    %v877 = vunpack.c.l.b16 %v542
    %v878 = vunpack.c.h.b16 %v542
    %v879 = vunpack.c.l.b16 %v543
    %v880 = vunpack.c.h.b16 %v543
    %v881 = vunpack.c.l.b16 %v544
    %v882 = vunpack.c.h.b16 %v544
    %v883 = vunpack.c.l.b16 %v545
    %v884 = vunpack.c.h.b16 %v545
    %v885 = vunpack.c.l.b16 %v546
    %v886 = vunpack.c.h.b16 %v546
    %v887 = vunpack.c.l.b16 %v547
    %v888 = vunpack.c.h.b16 %v547
    %v889 = vunpack.c.l.b16 %v548
    %v890 = vunpack.c.h.b16 %v548
    %v891 = vunpack.c.l.b16 %v549
    %v892 = vunpack.c.h.b16 %v549
    %v893 = vunpack.c.l.b16 %v550
    %v894 = vunpack.c.h.b16 %v550
    %v895 = vunpack.c.l.b16 %v551
    %v896 = vunpack.c.h.b16 %v551
    %v897 = vunpack.c.l.b16 %v552
    %v898 = vunpack.c.h.b16 %v552
    %v899 = vunpack.c.l.b16 %v553
    %v900 = vunpack.c.h.b16 %v553
    %v901 = vunpack.c.l.b16 %v554
    %v902 = vunpack.c.h.b16 %v554
    %v903 = vunpack.c.l.b16 %v555
    %v904 = vunpack.c.h.b16 %v555
    %v905 = vunpack.c.l.b16 %v556
    %v906 = vunpack.c.h.b16 %v556
    %v907 = vunpack.c.l.b16 %v557
    %v908 = vunpack.c.h.b16 %v557
    %v909 = vunpack.c.l.b16 %v558
    %v910 = vunpack.c.h.b16 %v558
    %v911 = vunpack.c.l.b16 %v559
    %v912 = vunpack.c.h.b16 %v559
    %v913 = vunpack.c.l.b16 %v560
    %v914 = vunpack.c.h.b16 %v560
    %v915 = vunpack.c.l.b16 %v561
    %v916 = vunpack.c.h.b16 %v561
    %v917 = vunpack.c.l.b16 %v562
    %v918 = vunpack.c.h.b16 %v562
    %v919 = vunpack.c.l.b16 %v563
    %v920 = vunpack.c.h.b16 %v563
    %v921 = vunpack.c.l.b16 %v564
    %v922 = vunpack.c.h.b16 %v564
    %v923 = vunpack.c.l.b16 %v565
    %v924 = vunpack.c.h.b16 %v565
    %v925 = vunpack.c.l.b16 %v566
    %v926 = vunpack.c.h.b16 %v566
    %v927 = vunpack.c.l.b16 %v567
    %v928 = vunpack.c.h.b16 %v567
    %v929 = vunpack.c.l.b16 %v568
    %v930 = vunpack.c.h.b16 %v568
    %v931 = vunpack.c.l.b16 %v569
    %v932 = vunpack.c.h.b16 %v569
    %v933 = vunpack.c.l.b16 %v570
    %v934 = vunpack.c.h.b16 %v570
    %v935 = vunpack.c.l.b16 %v571
    %v936 = vunpack.c.h.b16 %v571
    %v937 = vunpack.c.l.b16 %v572
    %v938 = vunpack.c.h.b16 %v572
    %v939 = vunpack.c.l.b16 %v573
    %v940 = vunpack.c.h.b16 %v573
    %v941 = vunpack.c.l.b16 %v574
    %v942 = vunpack.c.h.b16 %v574
    %v943 = vunpack.c.l.b16 %v575
    %v944 = vunpack.c.h.b16 %v575
    %v945 = vunpack.c.l.b16 %v576
    %v946 = vunpack.c.h.b16 %v576
    %v947 = vunpack.c.l.b16 %v577
    %v948 = vunpack.c.h.b16 %v577
    %v949 = vunpack.c.l.b16 %v578
    %v950 = vunpack.c.h.b16 %v578
    %v951 = vunpack.c.l.b16 %v579
    %v952 = vunpack.c.h.b16 %v579
    %v953 = vunpack.c.l.b16 %v580
    %v954 = vunpack.c.h.b16 %v580
    %v955 = vunpack.c.l.b16 %v581
    %v956 = vunpack.c.h.b16 %v581
    %v957 = vunpack.c.l.b16 %v582
    %v958 = vunpack.c.h.b16 %v582
    %v959 = vunpack.c.l.b16 %v583
    %v960 = vunpack.c.h.b16 %v583
    %v961 = vunpack.c.l.b16 %v584
    %v962 = vunpack.c.h.b16 %v584
    %v963 = vunpack.c.l.b16 %v585
    %v964 = vunpack.c.h.b16 %v585
    %v965 = vunpack.c.l.b16 %v586
    %v966 = vunpack.c.h.b16 %v586
    %v967 = vunpack.c.l.b16 %v587
    %v968 = vunpack.c.h.b16 %v587
    %v969 = vunpack.c.l.b16 %v588
    %v970 = vunpack.c.h.b16 %v588
    %v971 = vunpack.c.l.b16 %v589
    %v972 = vunpack.c.h.b16 %v589
    %v973 = vunpack.c.l.b16 %v590
    %v974 = vunpack.c.h.b16 %v590
    %v975 = vunpack.c.l.b16 %v591
    %v976 = vunpack.c.h.b16 %v591
    %v977 = vunpack.c.l.b16 %v592
    %v978 = vunpack.c.h.b16 %v592
    %v979 = vunpack.c.l.b16 %v593
    %v980 = vunpack.c.h.b16 %v593
    %v981 = vunpack.c.l.b16 %v594
    %v982 = vunpack.c.h.b16 %v594
    %v983 = vunpack.c.l.b16 %v595
    %v984 = vunpack.c.h.b16 %v595
    %v985 = vunpack.c.l.b16 %v596
    %v986 = vunpack.c.h.b16 %v596
    %v987 = vunpack.c.l.b16 %v597
    %v988 = vunpack.c.h.b16 %v597
    %v989 = vunpack.c.l.b16 %v598
    %v990 = vunpack.c.h.b16 %v598
    %v991 = vunpack.c.l.b16 %v599
    %v992 = vunpack.c.h.b16 %v599
    %v993 = vunpack.c.l.b16 %v600
    %v994 = vunpack.c.h.b16 %v600
    %v995 = vunpack.c.l.b16 %v601
    %v996 = vunpack.c.h.b16 %v601
    %v997 = vunpack.c.l.b16 %v602
    %v998 = vunpack.c.h.b16 %v602
    %v999 = vunpack.c.l.b16 %v603
    %v1000 = vunpack.c.h.b16 %v603
    %v1001 = vunpack.c.l.b16 %v604
    %v1002 = vunpack.c.h.b16 %v604
    %v1003 = vunpack.c.l.b16 %v605
    %v1004 = vunpack.c.h.b16 %v605
    %v1005 = vunpack.c.l.b16 %v606
    %v1006 = vunpack.c.h.b16 %v606
    %v1007 = vunpack.c.l.b16 %v607
    %v1008 = vunpack.c.h.b16 %v607
    %v1009 = vunpack.c.l.b16 %v608
    %v1010 = vunpack.c.h.b16 %v608
    %v1011 = vunpack.c.l.b16 %v609
    %v1012 = vunpack.c.h.b16 %v609
    %v1013 = vunpack.c.l.b16 %v610
    %v1014 = vunpack.c.h.b16 %v610
    %v1015 = vunpack.c.l.b16 %v611
    %v1016 = vunpack.c.h.b16 %v611
    %v1017 = vunpack.c.l.b16 %v612
    %v1018 = vunpack.c.h.b16 %v612
    %v1019 = vpack.c.b16 %v767, %v763
    %v1020 = vpack.c.b16 %v768, %v764
    %v1021 = vpack.c.b16 %v769, %v765
    %v1022 = vpack.c.b16 %v770, %v766
    %v1023 = vpack.c.b16 %v775, %v771
    %v1024 = vpack.c.b16 %v776, %v772
    %v1025 = vpack.c.b16 %v777, %v773
    %v1026 = vpack.c.b16 %v778, %v774
    %v1027 = vpack.c.b16 %v783, %v779
    %v1028 = vpack.c.b16 %v784, %v780
    %v1029 = vpack.c.b16 %v785, %v781
    %v1030 = vpack.c.b16 %v786, %v782
    %v1031 = vpack.c.b16 %v791, %v787
    %v1032 = vpack.c.b16 %v792, %v788
    %v1033 = vpack.c.b16 %v793, %v789
    %v1034 = vpack.c.b16 %v794, %v790
    %v1035 = vpack.c.b16 %v799, %v795
    %v1036 = vpack.c.b16 %v800, %v796
    %v1037 = vpack.c.b16 %v801, %v797
    %v1038 = vpack.c.b16 %v802, %v798
    %v1039 = vpack.c.b16 %v807, %v803
    %v1040 = vpack.c.b16 %v808, %v804
    %v1041 = vpack.c.b16 %v809, %v805
    %v1042 = vpack.c.b16 %v810, %v806
    %v1043 = vpack.c.b16 %v815, %v811
    %v1044 = vpack.c.b16 %v816, %v812
    %v1045 = vpack.c.b16 %v817, %v813
    %v1046 = vpack.c.b16 %v818, %v814
    %v1047 = vpack.c.b16 %v823, %v819
    %v1048 = vpack.c.b16 %v824, %v820
    %v1049 = vpack.c.b16 %v825, %v821
    %v1050 = vpack.c.b16 %v826, %v822
    %v1051 = vpack.c.b16 %v831, %v827
    %v1052 = vpack.c.b16 %v832, %v828
    %v1053 = vpack.c.b16 %v833, %v829
    %v1054 = vpack.c.b16 %v834, %v830
    %v1055 = vpack.c.b16 %v839, %v835
    %v1056 = vpack.c.b16 %v840, %v836
    %v1057 = vpack.c.b16 %v841, %v837
    %v1058 = vpack.c.b16 %v842, %v838
    %v1059 = vpack.c.b16 %v847, %v843
    %v1060 = vpack.c.b16 %v848, %v844
    %v1061 = vpack.c.b16 %v849, %v845
    %v1062 = vpack.c.b16 %v850, %v846
    %v1063 = vpack.c.b16 %v855, %v851
    %v1064 = vpack.c.b16 %v856, %v852
    %v1065 = vpack.c.b16 %v857, %v853
    %v1066 = vpack.c.b16 %v858, %v854
    %v1067 = vpack.c.b16 %v863, %v859
    %v1068 = vpack.c.b16 %v864, %v860
    %v1069 = vpack.c.b16 %v865, %v861
    %v1070 = vpack.c.b16 %v866, %v862
    %v1071 = vpack.c.b16 %v871, %v867
    %v1072 = vpack.c.b16 %v872, %v868
    %v1073 = vpack.c.b16 %v873, %v869
    %v1074 = vpack.c.b16 %v874, %v870
    %v1075 = vpack.c.b16 %v879, %v875
    %v1076 = vpack.c.b16 %v880, %v876
    %v1077 = vpack.c.b16 %v881, %v877
    %v1078 = vpack.c.b16 %v882, %v878
    %v1079 = vpack.c.b16 %v887, %v883
    %v1080 = vpack.c.b16 %v888, %v884
    %v1081 = vpack.c.b16 %v889, %v885
    %v1082 = vpack.c.b16 %v890, %v886
    %v1083 = vpack.c.b16 %v895, %v891
    %v1084 = vpack.c.b16 %v896, %v892
    %v1085 = vpack.c.b16 %v897, %v893
    %v1086 = vpack.c.b16 %v898, %v894
    %v1087 = vpack.c.b16 %v903, %v899
    %v1088 = vpack.c.b16 %v904, %v900
    %v1089 = vpack.c.b16 %v905, %v901
    %v1090 = vpack.c.b16 %v906, %v902
    %v1091 = vpack.c.b16 %v911, %v907
    %v1092 = vpack.c.b16 %v912, %v908
    %v1093 = vpack.c.b16 %v913, %v909
    %v1094 = vpack.c.b16 %v914, %v910
    %v1095 = vpack.c.b16 %v919, %v915
    %v1096 = vpack.c.b16 %v920, %v916
    %v1097 = vpack.c.b16 %v921, %v917
    %v1098 = vpack.c.b16 %v922, %v918
    %v1099 = vpack.c.b16 %v927, %v923
    %v1100 = vpack.c.b16 %v928, %v924
    %v1101 = vpack.c.b16 %v929, %v925
    %v1102 = vpack.c.b16 %v930, %v926
    %v1103 = vpack.c.b16 %v935, %v931
    %v1104 = vpack.c.b16 %v936, %v932
    %v1105 = vpack.c.b16 %v937, %v933
    %v1106 = vpack.c.b16 %v938, %v934
    %v1107 = vpack.c.b16 %v943, %v939
    %v1108 = vpack.c.b16 %v944, %v940
    %v1109 = vpack.c.b16 %v945, %v941
    %v1110 = vpack.c.b16 %v946, %v942
    %v1111 = vpack.c.b16 %v951, %v947
    %v1112 = vpack.c.b16 %v952, %v948
    %v1113 = vpack.c.b16 %v953, %v949
    %v1114 = vpack.c.b16 %v954, %v950
    %v1115 = vpack.c.b16 %v959, %v955
    %v1116 = vpack.c.b16 %v960, %v956
    %v1117 = vpack.c.b16 %v961, %v957
    %v1118 = vpack.c.b16 %v962, %v958
    %v1119 = vpack.c.b16 %v967, %v963
    %v1120 = vpack.c.b16 %v968, %v964
    %v1121 = vpack.c.b16 %v969, %v965
    %v1122 = vpack.c.b16 %v970, %v966
    %v1123 = vpack.c.b16 %v975, %v971
    %v1124 = vpack.c.b16 %v976, %v972
    %v1125 = vpack.c.b16 %v977, %v973
    %v1126 = vpack.c.b16 %v978, %v974
    %v1127 = vpack.c.b16 %v983, %v979
    %v1128 = vpack.c.b16 %v984, %v980
    %v1129 = vpack.c.b16 %v985, %v981
    %v1130 = vpack.c.b16 %v986, %v982
    %v1131 = vpack.c.b16 %v991, %v987
    %v1132 = vpack.c.b16 %v992, %v988
    %v1133 = vpack.c.b16 %v993, %v989
    %v1134 = vpack.c.b16 %v994, %v990
    %v1135 = vpack.c.b16 %v999, %v995
    %v1136 = vpack.c.b16 %v1000, %v996
    %v1137 = vpack.c.b16 %v1001, %v997
    %v1138 = vpack.c.b16 %v1002, %v998
    %v1139 = vpack.c.b16 %v1007, %v1003
    %v1140 = vpack.c.b16 %v1008, %v1004
    %v1141 = vpack.c.b16 %v1009, %v1005
    %v1142 = vpack.c.b16 %v1010, %v1006
    %v1143 = vpack.c.b16 %v1015, %v1011
    %v1144 = vpack.c.b16 %v1016, %v1012
    %v1145 = vpack.c.b16 %v1017, %v1013
    %v1146 = vpack.c.b16 %v1018, %v1014
    %1275 = vmatprep.subr.bf16.mxu0 %v1020
    %1276 = vmatpush1.bf16.msra.mxu0 %v1019
    %1277 = vmatprep.subr.bf16.mxu0 %v1024
    %1278 = vmatpush1.bf16.msra.mxu0 %v1023
    %1279 = vmatprep.subr.bf16.mxu0 %v1028
    %1280 = vmatpush1.bf16.msra.mxu0 %v1027
    %1281 = vmatprep.subr.bf16.mxu0 %v1032
    %1282 = vmatpush1.bf16.msra.mxu0 %v1031
    %1283 = vmatprep.subr.bf16.mxu0 %v1036
    %1284 = vmatpush1.bf16.msra.mxu0 %v1035
    %1285 = vmatprep.subr.bf16.mxu0 %v1040
    %1286 = vmatpush1.bf16.msra.mxu0 %v1039
    %1287 = vmatprep.subr.bf16.mxu0 %v1044
    %1288 = vmatpush1.bf16.msra.mxu0 %v1043
    %1289 = vmatprep.subr.bf16.mxu0 %v1048
    %1290 = vmatpush1.bf16.msra.mxu0 %v1047
    %1291 = vmatprep.subr.bf16.mxu0 %v1052
    %1292 = vmatpush1.bf16.msra.mxu0 %v1051
    %1293 = vmatprep.subr.bf16.mxu0 %v1056
    %1294 = vmatpush1.bf16.msra.mxu0 %v1055
    %1295 = vmatprep.subr.bf16.mxu0 %v1060
    %1296 = vmatpush1.bf16.msra.mxu0 %v1059
    %1297 = vmatprep.subr.bf16.mxu0 %v1064
    %1298 = vmatpush1.bf16.msra.mxu0 %v1063
    %1299 = vmatprep.subr.bf16.mxu0 %v1068
    %1300 = vmatpush1.bf16.msra.mxu0 %v1067
    %1301 = vmatprep.subr.bf16.mxu0 %v1072
    %1302 = vmatpush1.bf16.msra.mxu0 %v1071
    %1303 = vmatprep.subr.bf16.mxu0 %v1076
    %1304 = vmatpush1.bf16.msra.mxu0 %v1075
    %1305 = vmatprep.subr.bf16.mxu0 %v1080
    %1306 = vmatpush1.bf16.msra.mxu0 %v1079
    %1307 = vmatprep.mubr.bf16.mxu0 %v482
    %1308 = vmatmul.mubr.bf16.gmra.mrb[0].mxu0 %v481
    %v1309 = vpop.f32.mrb[0].mxu0
    %v1310 = vadd.f32 %v618, %v1309
    %v1311 = vpop.f32.mrb[0].mxu0
    %v1312 = vadd.f32 %v622, %v1311
    %v1313 = vpop.f32.mrb[0].mxu0
    %v1314 = vpop.f32.mrb[0].mxu0
    %1315 = vdwg.mxu0
    %1316 = vmatprep.subr.bf16.mxu0 %v1084
    %1317 = vmatpush1.bf16.msra.mxu0 %v1083
    %1318 = vmatprep.subr.bf16.mxu0 %v1088
    %1319 = vmatpush1.bf16.msra.mxu0 %v1087
    %1320 = vmatprep.subr.bf16.mxu0 %v1092
    %1321 = vmatpush1.bf16.msra.mxu0 %v1091
    %1322 = vmatprep.subr.bf16.mxu0 %v1096
    %1323 = vmatpush1.bf16.msra.mxu0 %v1095
    %1324 = vmatprep.subr.bf16.mxu0 %v1100
    %1325 = vmatpush1.bf16.msra.mxu0 %v1099
    %1326 = vmatprep.subr.bf16.mxu0 %v1104
    %1327 = vmatpush1.bf16.msra.mxu0 %v1103
    %1328 = vmatprep.subr.bf16.mxu0 %v1108
    %1329 = vmatpush1.bf16.msra.mxu0 %v1107
    %1330 = vmatprep.subr.bf16.mxu0 %v1112
    %1331 = vmatpush1.bf16.msra.mxu0 %v1111
    %1332 = vmatprep.subr.bf16.mxu0 %v1116
    %1333 = vmatpush1.bf16.msra.mxu0 %v1115
    %1334 = vmatprep.subr.bf16.mxu0 %v1120
    %1335 = vmatpush1.bf16.msra.mxu0 %v1119
    %1336 = vmatprep.subr.bf16.mxu0 %v1124
    %1337 = vmatpush1.bf16.msra.mxu0 %v1123
    %1338 = vmatprep.subr.bf16.mxu0 %v1128
    %1339 = vmatpush1.bf16.msra.mxu0 %v1127
    %1340 = vmatprep.subr.bf16.mxu0 %v1132
    %1341 = vmatpush1.bf16.msra.mxu0 %v1131
    %1342 = vmatprep.subr.bf16.mxu0 %v1136
    %1343 = vmatpush1.bf16.msra.mxu0 %v1135
    %1344 = vmatprep.subr.bf16.mxu0 %v1140
    %1345 = vmatpush1.bf16.msra.mxu0 %v1139
    %1346 = vmatprep.subr.bf16.mxu0 %v1144
    %1347 = vmatpush1.bf16.msra.mxu0 %v1143
    %1348 = vmatprep.mubr.bf16.mxu0 %v484
    %1349 = vmatmul.mubr.bf16.gmra.mrb[0].mxu0 %v483
    %v1350 = vpop.f32.mrb[0].mxu0
    %v1351 = vadd.f32 %v1310, %v1350
    %v1352 = vpop.f32.mrb[0].mxu0
    %v1353 = vadd.f32 %v1312, %v1352
    %v1354 = vpop.f32.mrb[0].mxu0
    %v1355 = vpop.f32.mrb[0].mxu0
    %1356 = vdwg.mxu0
    %1357 = vmatprep.subr.bf16.mxu0 %v1022
    %1358 = vmatpush1.bf16.msra.mxu0 %v1021
    %1359 = vmatprep.subr.bf16.mxu0 %v1026
    %1360 = vmatpush1.bf16.msra.mxu0 %v1025
    %1361 = vmatprep.subr.bf16.mxu0 %v1030
    %1362 = vmatpush1.bf16.msra.mxu0 %v1029
    %1363 = vmatprep.subr.bf16.mxu0 %v1034
    %1364 = vmatpush1.bf16.msra.mxu0 %v1033
    %1365 = vmatprep.subr.bf16.mxu0 %v1038
    %1366 = vmatpush1.bf16.msra.mxu0 %v1037
    %1367 = vmatprep.subr.bf16.mxu0 %v1042
    %1368 = vmatpush1.bf16.msra.mxu0 %v1041
    %1369 = vmatprep.subr.bf16.mxu0 %v1046
    %1370 = vmatpush1.bf16.msra.mxu0 %v1045
    %1371 = vmatprep.subr.bf16.mxu0 %v1050
    %1372 = vmatpush1.bf16.msra.mxu0 %v1049
    %1373 = vmatprep.subr.bf16.mxu0 %v1054
    %1374 = vmatpush1.bf16.msra.mxu0 %v1053
    %1375 = vmatprep.subr.bf16.mxu0 %v1058
    %1376 = vmatpush1.bf16.msra.mxu0 %v1057
    %1377 = vmatprep.subr.bf16.mxu0 %v1062
    %1378 = vmatpush1.bf16.msra.mxu0 %v1061
    %1379 = vmatprep.subr.bf16.mxu0 %v1066
    %1380 = vmatpush1.bf16.msra.mxu0 %v1065
    %1381 = vmatprep.subr.bf16.mxu0 %v1070
    %1382 = vmatpush1.bf16.msra.mxu0 %v1069
    %1383 = vmatprep.subr.bf16.mxu0 %v1074
    %1384 = vmatpush1.bf16.msra.mxu0 %v1073
    %1385 = vmatprep.subr.bf16.mxu0 %v1078
    %1386 = vmatpush1.bf16.msra.mxu0 %v1077
    %1387 = vmatprep.subr.bf16.mxu0 %v1082
    %1388 = vmatpush1.bf16.msra.mxu0 %v1081
    %1389 = vmatprep.mubr.bf16.mxu0 %v482
    %1390 = vmatmul.mubr.bf16.gmra.mrb[0].mxu0 %v481
    %v1391 = vpop.f32.mrb[0].mxu0
    %v1392 = vadd.f32 %v626, %v1391
    %v1393 = vpop.f32.mrb[0].mxu0
    %v1394 = vadd.f32 %v630, %v1393
    %v1395 = vpop.f32.mrb[0].mxu0
    %v1396 = vpop.f32.mrb[0].mxu0
    %1397 = vdwg.mxu0
    %1398 = vmatprep.subr.bf16.mxu0 %v1086
    %1399 = vmatpush1.bf16.msra.mxu0 %v1085
    %1400 = vmatprep.subr.bf16.mxu0 %v1090
    %1401 = vmatpush1.bf16.msra.mxu0 %v1089
    %1402 = vmatprep.subr.bf16.mxu0 %v1094
    %1403 = vmatpush1.bf16.msra.mxu0 %v1093
    %1404 = vmatprep.subr.bf16.mxu0 %v1098
    %1405 = vmatpush1.bf16.msra.mxu0 %v1097
    %1406 = vmatprep.subr.bf16.mxu0 %v1102
    %1407 = vmatpush1.bf16.msra.mxu0 %v1101
    %1408 = vmatprep.subr.bf16.mxu0 %v1106
    %1409 = vmatpush1.bf16.msra.mxu0 %v1105
    %1410 = vmatprep.subr.bf16.mxu0 %v1110
    %1411 = vmatpush1.bf16.msra.mxu0 %v1109
    %1412 = vmatprep.subr.bf16.mxu0 %v1114
    %1413 = vmatpush1.bf16.msra.mxu0 %v1113
    %1414 = vmatprep.subr.bf16.mxu0 %v1118
    %1415 = vmatpush1.bf16.msra.mxu0 %v1117
    %1416 = vmatprep.subr.bf16.mxu0 %v1122
    %1417 = vmatpush1.bf16.msra.mxu0 %v1121
    %1418 = vmatprep.subr.bf16.mxu0 %v1126
    %1419 = vmatpush1.bf16.msra.mxu0 %v1125
    %1420 = vmatprep.subr.bf16.mxu0 %v1130
    %1421 = vmatpush1.bf16.msra.mxu0 %v1129
    %1422 = vmatprep.subr.bf16.mxu0 %v1134
    %1423 = vmatpush1.bf16.msra.mxu0 %v1133
    %1424 = vmatprep.subr.bf16.mxu0 %v1138
    %1425 = vmatpush1.bf16.msra.mxu0 %v1137
    %1426 = vmatprep.subr.bf16.mxu0 %v1142
    %1427 = vmatpush1.bf16.msra.mxu0 %v1141
    %1428 = vmatprep.subr.bf16.mxu0 %v1146
    %1429 = vmatpush1.bf16.msra.mxu0 %v1145
    %1430 = vmatprep.mubr.bf16.mxu0 %v484
    %1431 = vmatmul.mubr.bf16.gmra.mrb[0].mxu0 %v483
    %v1432 = vpop.f32.mrb[0].mxu0
    %v1433 = vadd.f32 %v1392, %v1432
    %v1434 = vpop.f32.mrb[0].mxu0
    %v1435 = vadd.f32 %v1394, %v1434
    %v1436 = vpop.f32.mrb[0].mxu0
    %v1437 = vpop.f32.mrb[0].mxu0
    %1438 = vdwg.mxu0
    %v1439 = vmax.f32 %v1351, 0.0
    %v1440 = vmax.f32 %v1353, 0.0
    %v1441 = vmax.f32 %v1433, 0.0
    %v1442 = vmax.f32 %v1435, 0.0
    %v1443 = vpack.c.bf16 %v1439, %v1439
    %v1444 = vpack.c.bf16 %v1440, %v1440
    %v1445 = vpack.c.bf16 %v1441, %v1441
    %v1446 = vpack.c.bf16 %v1442, %v1442
    %v1447 = vld [vmem:[#allocation11] sm:$0xf]
    %v1448 = vld [vmem:[#allocation11 + $0x4] sm:$0xf]
    %v1449 = vld [vmem:[#allocation11 + $0x8] sm:$0xf]
    %v1450 = vld [vmem:[#allocation11 + $0xc] sm:$0xf]
    %v1451 = vld [vmem:[#allocation11 + $0x10] sm:$0xf]
    %v1452 = vld [vmem:[#allocation11 + $0x14] sm:$0xf]
    %v1453 = vld [vmem:[#allocation11 + $0x18] sm:$0xf]
    %v1454 = vld [vmem:[#allocation11 + $0x1c] sm:$0xf]
    %v1455 = vld [vmem:[#allocation11 + $0x20] sm:$0xf]
    %v1456 = vld [vmem:[#allocation11 + $0x24] sm:$0xf]
    %v1457 = vld [vmem:[#allocation11 + $0x28] sm:$0xf]
    %v1458 = vld [vmem:[#allocation11 + $0x2c] sm:$0xf]
    %v1459 = vld [vmem:[#allocation11 + $0x30] sm:$0xf]
    %v1460 = vld [vmem:[#allocation11 + $0x34] sm:$0xf]
    %v1461 = vld [vmem:[#allocation11 + $0x38] sm:$0xf]
    %v1462 = vld [vmem:[#allocation11 + $0x3c] sm:$0xf]
    %v1463 = vld [vmem:[#allocation11 + $0x40] sm:$0xf]
    %v1464 = vld [vmem:[#allocation11 + $0x44] sm:$0xf]
    %v1465 = vld [vmem:[#allocation11 + $0x48] sm:$0xf]
    %v1466 = vld [vmem:[#allocation11 + $0x4c] sm:$0xf]
    %v1467 = vld [vmem:[#allocation11 + $0x50] sm:$0xf]
    %v1468 = vld [vmem:[#allocation11 + $0x54] sm:$0xf]
    %v1469 = vld [vmem:[#allocation11 + $0x58] sm:$0xf]
    %v1470 = vld [vmem:[#allocation11 + $0x5c] sm:$0xf]
    %v1471 = vld [vmem:[#allocation11 + $0x60] sm:$0xf]
    %v1472 = vld [vmem:[#allocation11 + $0x64] sm:$0xf]
    %v1473 = vld [vmem:[#allocation11 + $0x68] sm:$0xf]
    %v1474 = vld [vmem:[#allocation11 + $0x6c] sm:$0xf]
    %v1475 = vld [vmem:[#allocation11 + $0x70] sm:$0xf]
    %v1476 = vld [vmem:[#allocation11 + $0x74] sm:$0xf]
    %v1477 = vld [vmem:[#allocation11 + $0x78] sm:$0xf]
    %v1478 = vld [vmem:[#allocation11 + $0x7c] sm:$0xf]
    %v1479 = vld [vmem:[#allocation11 + $0x80] sm:$0xf]
    %v1480 = vld [vmem:[#allocation11 + $0x84] sm:$0xf]
    %v1481 = vld [vmem:[#allocation11 + $0x88] sm:$0xf]
    %v1482 = vld [vmem:[#allocation11 + $0x8c] sm:$0xf]
    %v1483 = vld [vmem:[#allocation11 + $0x90] sm:$0xf]
    %v1484 = vld [vmem:[#allocation11 + $0x94] sm:$0xf]
    %v1485 = vld [vmem:[#allocation11 + $0x98] sm:$0xf]
    %v1486 = vld [vmem:[#allocation11 + $0x9c] sm:$0xf]
    %v1487 = vld [vmem:[#allocation11 + $0xa0] sm:$0xf]
    %v1488 = vld [vmem:[#allocation11 + $0xa4] sm:$0xf]
    %v1489 = vld [vmem:[#allocation11 + $0xa8] sm:$0xf]
    %v1490 = vld [vmem:[#allocation11 + $0xac] sm:$0xf]
    %v1491 = vld [vmem:[#allocation11 + $0xb0] sm:$0xf]
    %v1492 = vld [vmem:[#allocation11 + $0xb4] sm:$0xf]
    %v1493 = vld [vmem:[#allocation11 + $0xb8] sm:$0xf]
    %v1494 = vld [vmem:[#allocation11 + $0xbc] sm:$0xf]
    %v1495 = vld [vmem:[#allocation11 + $0xc0] sm:$0xf]
    %v1496 = vld [vmem:[#allocation11 + $0xc4] sm:$0xf]
    %v1497 = vld [vmem:[#allocation11 + $0xc8] sm:$0xf]
    %v1498 = vld [vmem:[#allocation11 + $0xcc] sm:$0xf]
    %v1499 = vld [vmem:[#allocation11 + $0xd0] sm:$0xf]
    %v1500 = vld [vmem:[#allocation11 + $0xd4] sm:$0xf]
    %v1501 = vld [vmem:[#allocation11 + $0xd8] sm:$0xf]
    %v1502 = vld [vmem:[#allocation11 + $0xdc] sm:$0xf]
    %v1503 = vld [vmem:[#allocation11 + $0xe0] sm:$0xf]
    %v1504 = vld [vmem:[#allocation11 + $0xe4] sm:$0xf]
    %v1505 = vld [vmem:[#allocation11 + $0xe8] sm:$0xf]
    %v1506 = vld [vmem:[#allocation11 + $0xec] sm:$0xf]
    %v1507 = vld [vmem:[#allocation11 + $0xf0] sm:$0xf]
    %v1508 = vld [vmem:[#allocation11 + $0xf4] sm:$0xf]
    %v1509 = vld [vmem:[#allocation11 + $0xf8] sm:$0xf]
    %v1510 = vld [vmem:[#allocation11 + $0xfc] sm:$0xf]
    %v1511 = vld [vmem:[%s8] sm:$0x1]
    %v1513 = vlaneseq
    %v1514 = vshrl.u32 %v1513, 7
    %v1515 = vsub.s32 0, %v1514
    %v1516 = vrot.slane %v1511, %v1515
    %v1582 = vunpack.c.l.b16 %v1447
    %v1583 = vunpack.c.l.b16 %v1448
    %v1584 = vunpack.c.l.b16 %v1449
    %v1585 = vunpack.c.l.b16 %v1450
    %v1586 = vunpack.c.l.b16 %v1451
    %v1587 = vunpack.c.l.b16 %v1452
    %v1588 = vunpack.c.l.b16 %v1453
    %v1589 = vunpack.c.l.b16 %v1454
    %v1590 = vunpack.c.l.b16 %v1455
    %v1591 = vunpack.c.l.b16 %v1456
    %v1592 = vunpack.c.l.b16 %v1457
    %v1593 = vunpack.c.l.b16 %v1458
    %v1594 = vunpack.c.l.b16 %v1459
    %v1595 = vunpack.c.l.b16 %v1460
    %v1596 = vunpack.c.l.b16 %v1461
    %v1597 = vunpack.c.l.b16 %v1462
    %v1598 = vunpack.c.l.b16 %v1463
    %v1599 = vunpack.c.l.b16 %v1464
    %v1600 = vunpack.c.l.b16 %v1465
    %v1601 = vunpack.c.l.b16 %v1466
    %v1602 = vunpack.c.l.b16 %v1467
    %v1603 = vunpack.c.l.b16 %v1468
    %v1604 = vunpack.c.l.b16 %v1469
    %v1605 = vunpack.c.l.b16 %v1470
    %v1606 = vunpack.c.l.b16 %v1471
    %v1607 = vunpack.c.l.b16 %v1472
    %v1608 = vunpack.c.l.b16 %v1473
    %v1609 = vunpack.c.l.b16 %v1474
    %v1610 = vunpack.c.l.b16 %v1475
    %v1611 = vunpack.c.l.b16 %v1476
    %v1612 = vunpack.c.l.b16 %v1477
    %v1613 = vunpack.c.l.b16 %v1478
    %v1614 = vunpack.c.l.b16 %v1479
    %v1615 = vunpack.c.l.b16 %v1480
    %v1616 = vunpack.c.l.b16 %v1481
    %v1617 = vunpack.c.l.b16 %v1482
    %v1618 = vunpack.c.l.b16 %v1483
    %v1619 = vunpack.c.l.b16 %v1484
    %v1620 = vunpack.c.l.b16 %v1485
    %v1621 = vunpack.c.l.b16 %v1486
    %v1622 = vunpack.c.l.b16 %v1487
    %v1623 = vunpack.c.l.b16 %v1488
    %v1624 = vunpack.c.l.b16 %v1489
    %v1625 = vunpack.c.l.b16 %v1490
    %v1626 = vunpack.c.l.b16 %v1491
    %v1627 = vunpack.c.l.b16 %v1492
    %v1628 = vunpack.c.l.b16 %v1493
    %v1629 = vunpack.c.l.b16 %v1494
    %v1630 = vunpack.c.l.b16 %v1495
    %v1631 = vunpack.c.l.b16 %v1496
    %v1632 = vunpack.c.l.b16 %v1497
    %v1633 = vunpack.c.l.b16 %v1498
    %v1634 = vunpack.c.l.b16 %v1499
    %v1635 = vunpack.c.l.b16 %v1500
    %v1636 = vunpack.c.l.b16 %v1501
    %v1637 = vunpack.c.l.b16 %v1502
    %v1638 = vunpack.c.l.b16 %v1503
    %v1639 = vunpack.c.l.b16 %v1504
    %v1640 = vunpack.c.l.b16 %v1505
    %v1641 = vunpack.c.l.b16 %v1506
    %v1642 = vunpack.c.l.b16 %v1507
    %v1643 = vunpack.c.l.b16 %v1508
    %v1644 = vunpack.c.l.b16 %v1509
    %v1645 = vunpack.c.l.b16 %v1510
    %v1646 = vpack.c.b16 %v1583, %v1582
    %v1647 = vpack.c.b16 %v1585, %v1584
    %v1648 = vpack.c.b16 %v1587, %v1586
    %v1649 = vpack.c.b16 %v1589, %v1588
    %v1650 = vpack.c.b16 %v1591, %v1590
    %v1651 = vpack.c.b16 %v1593, %v1592
    %v1652 = vpack.c.b16 %v1595, %v1594
    %v1653 = vpack.c.b16 %v1597, %v1596
    %v1654 = vpack.c.b16 %v1599, %v1598
    %v1655 = vpack.c.b16 %v1601, %v1600
    %v1656 = vpack.c.b16 %v1603, %v1602
    %v1657 = vpack.c.b16 %v1605, %v1604
    %v1658 = vpack.c.b16 %v1607, %v1606
    %v1659 = vpack.c.b16 %v1609, %v1608
    %v1660 = vpack.c.b16 %v1611, %v1610
    %v1661 = vpack.c.b16 %v1613, %v1612
    %v1662 = vpack.c.b16 %v1615, %v1614
    %v1663 = vpack.c.b16 %v1617, %v1616
    %v1664 = vpack.c.b16 %v1619, %v1618
    %v1665 = vpack.c.b16 %v1621, %v1620
    %v1666 = vpack.c.b16 %v1623, %v1622
    %v1667 = vpack.c.b16 %v1625, %v1624
    %v1668 = vpack.c.b16 %v1627, %v1626
    %v1669 = vpack.c.b16 %v1629, %v1628
    %v1670 = vpack.c.b16 %v1631, %v1630
    %v1671 = vpack.c.b16 %v1633, %v1632
    %v1672 = vpack.c.b16 %v1635, %v1634
    %v1673 = vpack.c.b16 %v1637, %v1636
    %v1674 = vpack.c.b16 %v1639, %v1638
    %v1675 = vpack.c.b16 %v1641, %v1640
    %v1676 = vpack.c.b16 %v1643, %v1642
    %v1677 = vpack.c.b16 %v1645, %v1644
    %1710 = vmatprep.subr.bf16.mxu0 0
    %1711 = vmatpush1.bf16.msra.mxu0 %v1646
    %1712 = vmatprep.subr.bf16.mxu0 0
    %1713 = vmatpush1.bf16.msra.mxu0 %v1647
    %1714 = vmatprep.subr.bf16.mxu0 0
    %1715 = vmatpush1.bf16.msra.mxu0 %v1648
    %1716 = vmatprep.subr.bf16.mxu0 0
    %1717 = vmatpush1.bf16.msra.mxu0 %v1649
    %1718 = vmatprep.subr.bf16.mxu0 0
    %1719 = vmatpush1.bf16.msra.mxu0 %v1650
    %1720 = vmatprep.subr.bf16.mxu0 0
    %1721 = vmatpush1.bf16.msra.mxu0 %v1651
    %1722 = vmatprep.subr.bf16.mxu0 0
    %1723 = vmatpush1.bf16.msra.mxu0 %v1652
    %1724 = vmatprep.subr.bf16.mxu0 0
    %1725 = vmatpush1.bf16.msra.mxu0 %v1653
    %1726 = vmatprep.subr.bf16.mxu0 0
    %1727 = vmatpush1.bf16.msra.mxu0 %v1654
    %1728 = vmatprep.subr.bf16.mxu0 0
    %1729 = vmatpush1.bf16.msra.mxu0 %v1655
    %1730 = vmatprep.subr.bf16.mxu0 0
    %1731 = vmatpush1.bf16.msra.mxu0 %v1656
    %1732 = vmatprep.subr.bf16.mxu0 0
    %1733 = vmatpush1.bf16.msra.mxu0 %v1657
    %1734 = vmatprep.subr.bf16.mxu0 0
    %1735 = vmatpush1.bf16.msra.mxu0 %v1658
    %1736 = vmatprep.subr.bf16.mxu0 0
    %1737 = vmatpush1.bf16.msra.mxu0 %v1659
    %1738 = vmatprep.subr.bf16.mxu0 0
    %1739 = vmatpush1.bf16.msra.mxu0 %v1660
    %1740 = vmatprep.subr.bf16.mxu0 0
    %1741 = vmatpush1.bf16.msra.mxu0 %v1661
    %1742 = vmatprep.mubr.bf16.mxu0 %v1444
    %1743 = vmatmul.mubr.bf16.gmra.mrb[0].mxu0 %v1443
    %v1744 = vpop.f32.mrb[0].mxu0
    %v1745 = vadd.f32 %v1516, %v1744
    %v1746 = vpop.f32.mrb[0].mxu0
    %v1747 = vpop.f32.mrb[0].mxu0
    %v1748 = vpop.f32.mrb[0].mxu0
    %1749 = vdwg.mxu0
    %1750 = vmatprep.subr.bf16.mxu0 0
    %1751 = vmatpush1.bf16.msra.mxu0 %v1662
    %1752 = vmatprep.subr.bf16.mxu0 0
    %1753 = vmatpush1.bf16.msra.mxu0 %v1663
    %1754 = vmatprep.subr.bf16.mxu0 0
    %1755 = vmatpush1.bf16.msra.mxu0 %v1664
    %1756 = vmatprep.subr.bf16.mxu0 0
    %1757 = vmatpush1.bf16.msra.mxu0 %v1665
    %1758 = vmatprep.subr.bf16.mxu0 0
    %1759 = vmatpush1.bf16.msra.mxu0 %v1666
    %1760 = vmatprep.subr.bf16.mxu0 0
    %1761 = vmatpush1.bf16.msra.mxu0 %v1667
    %1762 = vmatprep.subr.bf16.mxu0 0
    %1763 = vmatpush1.bf16.msra.mxu0 %v1668
    %1764 = vmatprep.subr.bf16.mxu0 0
    %1765 = vmatpush1.bf16.msra.mxu0 %v1669
    %1766 = vmatprep.subr.bf16.mxu0 0
    %1767 = vmatpush1.bf16.msra.mxu0 %v1670
    %1768 = vmatprep.subr.bf16.mxu0 0
    %1769 = vmatpush1.bf16.msra.mxu0 %v1671
    %1770 = vmatprep.subr.bf16.mxu0 0
    %1771 = vmatpush1.bf16.msra.mxu0 %v1672
    %1772 = vmatprep.subr.bf16.mxu0 0
    %1773 = vmatpush1.bf16.msra.mxu0 %v1673
    %1774 = vmatprep.subr.bf16.mxu0 0
    %1775 = vmatpush1.bf16.msra.mxu0 %v1674
    %1776 = vmatprep.subr.bf16.mxu0 0
    %1777 = vmatpush1.bf16.msra.mxu0 %v1675
    %1778 = vmatprep.subr.bf16.mxu0 0
    %1779 = vmatpush1.bf16.msra.mxu0 %v1676
    %1780 = vmatprep.subr.bf16.mxu0 0
    %1781 = vmatpush1.bf16.msra.mxu0 %v1677
    %1782 = vmatprep.mubr.bf16.mxu0 %v1446
    %1783 = vmatmul.mubr.bf16.gmra.mrb[0].mxu0 %v1445
    %v1784 = vpop.f32.mrb[0].mxu0
    %v1785 = vadd.f32 %v1745, %v1784
    %v1786 = vpop.f32.mrb[0].mxu0
    %v1787 = vpop.f32.mrb[0].mxu0
    %v1788 = vpop.f32.mrb[0].mxu0
    %1789 = vdwg.mxu0
    %1790 = vst [vmem:[#allocation13] sm:$0xff] %v1785
    // Predicated region
    $region62: #{_nn_forward_impl.1} parent=1 // pred_check
      _
    $region63: #{_nn_forward_impl.1} parent=1 // pred_check_branch
      %1792 = sbr.rel (0) target = $region65
    $region64: #{_nn_forward_impl.1} parent=1 // pred_region
      %s1794 = ssub.s32 128, 128
      %1795 = vsyncadd [#allocation4], %s1794
      %s1797 = sshll.u32 [#allocation13], 4
      %s1798 = int_to_ptr.vmem [resolvable:$true] %s1797
      %1800 = dma.vmem_to_hbm [thread:$0]  %s1798, 128, %s9, [#allocation4]
    $region65: #{_nn_forward_impl.1} parent=1 // pred_fallthru
      _
    // Predicated region
    $region66: #{_nn_forward_impl.1} parent=1 // pred_check
      _
    $region67: #{_nn_forward_impl.1} parent=1 // pred_check_branch
      %1802 = sbr.rel (0) target = $region69
    $region68: #{_nn_forward_impl.1} parent=1 // pred_region
      %1803 = dma.done [#allocation4], 128
    $region69: #{_nn_forward_impl.1} parent=1 // pred_fallthru
      _
    %1804 = vsyncpa [#allocation3], 1
    %1805 = vsyncpa [#allocation6], 1
    %1806 = vsyncpa [#allocation9], 1
    %1807 = vsyncpa [#allocation12], 1
    %1808 = vsyncpa [#allocation4], 1

// kernel: _nn_forward_impl.1
$region0: #{_nn_forward_impl.1}
  #allocation0 [shape = 'u32[]', space=smem, size = 0x4, offset = 0x4, fixed_abs, tag = 'smem constant byte address 0x4 - core index']
  #allocation1 [shape = 'u32[144,128]{1,0:T(1,128)}', space=vmem, size = 0x12000, scoped, tag = 'internal scratch']
  %s0 = inlined_call_operand.hbm [shape: f32[8,32], index: 0, kind: input, shape index: {}]
  %s1 = inlined_call_operand.vmem [shape: bf16[32,128], index: 1, kind: input, shape index: {}]
  %s2 = inlined_call_operand.vmem [shape: f32[1,128], index: 2, kind: input, shape index: {}]
  %s3 = inlined_call_operand.hbm [shape: bf16[128,512], index: 3, kind: input, shape index: {}]
  %s4 = inlined_call_operand.hbm [shape: f32[1,512], index: 4, kind: input, shape index: {}]
  %s5 = inlined_call_operand.hbm [shape: bf16[512,512], index: 5, kind: input, shape index: {}]
  %s6 = inlined_call_operand.hbm [shape: f32[1,512], index: 6, kind: input, shape index: {}]
  %s7 = inlined_call_operand.hbm [shape: bf16[512,128], index: 7, kind: input, shape index: {}]
  %s8 = inlined_call_operand.vmem [shape: f32[1,128], index: 8, kind: input, shape index: {}]
  %s9 = inlined_call_operand.hbm [shape: f32[8,128], index: 9, kind: output, shape index: {}]
  %s10 = sld [smem:[#allocation0]]
  $region70: #{_nn_forward_impl.1} parent=0
    _
  %s12 = ssub.s32 1, %s10
  %s13 = scalar_select 0, %s12, %s10
  $region1: #{_nn_forward_impl.1} parent=0
    #allocation2 [shape = 'u8[4096]{0}', space=vmem, size = 0x1000, scoped, tag = 'input window, operand 0, single buffered']
    #allocation3 [shape = 's32[1]{0}', space=sflag, size = 0x4, scoped, tag = 'scoped memory for _nn_forward_impl.1']
    #allocation4 [shape = 's32[1]{0}', space=sflag, size = 0x4, scoped, tag = 'scoped memory for _nn_forward_impl.1']
    #allocation5 [shape = 'u8[131072]{0}', space=vmem, size = 0x20000, scoped, tag = 'input window, operand 3, single buffered']
    #allocation6 [shape = 's32[1]{0}', space=sflag, size = 0x4, scoped, tag = 'scoped memory for _nn_forward_impl.1']
    #allocation7 [shape = 'u8[2048]{0}', space=vmem, size = 0x800, scoped, tag = 'input window, operand 4, single buffered']
    #allocation8 [shape = 'u8[524288]{0}', space=vmem, size = 0x80000, scoped, tag = 'input window, operand 5, single buffered']
    #allocation9 [shape = 's32[1]{0}', space=sflag, size = 0x4, scoped, tag = 'scoped memory for _nn_forward_impl.1']
    #allocation10 [shape = 'u8[2048]{0}', space=vmem, size = 0x800, scoped, tag = 'input window, operand 6, single buffered']
    #allocation11 [shape = 'u8[131072]{0}', space=vmem, size = 0x20000, scoped, tag = 'input window, operand 7, single buffered']
    #allocation12 [shape = 's32[1]{0}', space=sflag, size = 0x4, scoped, tag = 'scoped memory for _nn_forward_impl.1']
    #allocation13 [shape = 'u8[4096]{0}', space=vmem, size = 0x1000, scoped, tag = 'output window, operand 0, single buffered']
    %14 = vsyncpa [#allocation3], 0
    %15 = vsyncpa [#allocation6], 0
    %16 = vsyncpa [#allocation9], 0
    %17 = vsyncpa [#allocation12], 0
    %18 = vsyncpa [#allocation4], 0
    // Predicated region
    $region2: #{_nn_forward_impl.1} parent=1 // pred_check
      _
    $region3: #{_nn_forward_impl.1} parent=1 // pred_check_branch
      %20 = sbr.rel (0) target = $region5
    $region4: #{_nn_forward_impl.1} parent=1 // pred_region
      %s22 = ssub.s32 128, 128
      %23 = vsyncadd [#allocation3], %s22
      %s25 = sshll.u32 [#allocation2], 4
      %s26 = int_to_ptr.vmem [resolvable:$true] %s25
      %28 = dma.hbm_to_vmem [thread:$0]  %s0, 128, %s26, [#allocation3]
    $region5: #{_nn_forward_impl.1} parent=1 // pred_fallthru
      _
    // Predicated region
    $region6: #{_nn_forward_impl.1} parent=1 // pred_check
      _
    $region7: #{_nn_forward_impl.1} parent=1 // pred_check_branch
      %30 = sbr.rel (0) target = $region9
    $region8: #{_nn_forward_impl.1} parent=1 // pred_region
      _
    $region9: #{_nn_forward_impl.1} parent=1 // pred_fallthru
      _
    // Predicated region
    $region10: #{_nn_forward_impl.1} parent=1 // pred_check
      _
    $region11: #{_nn_forward_impl.1} parent=1 // pred_check_branch
      %32 = sbr.rel (0) target = $region13
    $region12: #{_nn_forward_impl.1} parent=1 // pred_region
      _
    $region13: #{_nn_forward_impl.1} parent=1 // pred_fallthru
      _
    // Predicated region
    $region14: #{_nn_forward_impl.1} parent=1 // pred_check
      _
    $region15: #{_nn_forward_impl.1} parent=1 // pred_check_branch
      %34 = sbr.rel (0) target = $region17
    $region16: #{_nn_forward_impl.1} parent=1 // pred_region
      %s36 = ssub.s32 4096, 4096
      %37 = vsyncadd [#allocation6], %s36
      %s38 = sshll.u32 [#allocation5], 4
      %s39 = int_to_ptr.vmem [resolvable:$true] %s38
      %44 = dma.hbm_to_vmem [thread:$0]  %s3, 4096, %s39, [#allocation6], 256, 256, 16
    $region17: #{_nn_forward_impl.1} parent=1 // pred_fallthru
      _
    // Predicated region
    $region18: #{_nn_forward_impl.1} parent=1 // pred_check
      _
    $region19: #{_nn_forward_impl.1} parent=1 // pred_check_branch
      %46 = sbr.rel (0) target = $region21
    $region20: #{_nn_forward_impl.1} parent=1 // pred_region
      %s48 = ssub.s32 64, 64
      %49 = vsyncadd [#allocation6], %s48
      %s51 = sshll.u32 [#allocation7], 4
      %s52 = int_to_ptr.vmem [resolvable:$true] %s51
      %54 = dma.hbm_to_vmem [thread:$0]  %s4, 64, %s52, [#allocation6]
    $region21: #{_nn_forward_impl.1} parent=1 // pred_fallthru
      _
    // Predicated region
    $region22: #{_nn_forward_impl.1} parent=1 // pred_check
      _
    $region23: #{_nn_forward_impl.1} parent=1 // pred_check_branch
      %56 = sbr.rel (0) target = $region25
    $region24: #{_nn_forward_impl.1} parent=1 // pred_region
      %s58 = ssub.s32 16384, 16384
      %59 = vsyncadd [#allocation9], %s58
      %s60 = sshll.u32 [#allocation8], 4
      %s61 = int_to_ptr.vmem [resolvable:$true] %s60
      %66 = dma.hbm_to_vmem [thread:$0]  %s5, 16384, %s61, [#allocation9], 256, 256, 16
    $region25: #{_nn_forward_impl.1} parent=1 // pred_fallthru
      _
    // Predicated region
    $region26: #{_nn_forward_impl.1} parent=1 // pred_check
      _
    $region27: #{_nn_forward_impl.1} parent=1 // pred_check_branch
      %68 = sbr.rel (0) target = $region29
    $region28: #{_nn_forward_impl.1} parent=1 // pred_region
      %s70 = ssub.s32 64, 64
      %71 = vsyncadd [#allocation9], %s70
      %s73 = sshll.u32 [#allocation10], 4
      %s74 = int_to_ptr.vmem [resolvable:$true] %s73
      %76 = dma.hbm_to_vmem [thread:$0]  %s6, 64, %s74, [#allocation9]
    $region29: #{_nn_forward_impl.1} parent=1 // pred_fallthru
      _
    // Predicated region
    $region30: #{_nn_forward_impl.1} parent=1 // pred_check
      _
    $region31: #{_nn_forward_impl.1} parent=1 // pred_check_branch
      %78 = sbr.rel (0) target = $region33
    $region32: #{_nn_forward_impl.1} parent=1 // pred_region
      %s80 = ssub.s32 4096, 4096
      %81 = vsyncadd [#allocation12], %s80
      %s82 = sshll.u32 [#allocation11], 4
      %s83 = int_to_ptr.vmem [resolvable:$true] %s82
      %88 = dma.hbm_to_vmem [thread:$0]  %s7, 4096, %s83, [#allocation12], 64, 64, 4
    $region33: #{_nn_forward_impl.1} parent=1 // pred_fallthru
      _
    // Predicated region
    $region34: #{_nn_forward_impl.1} parent=1 // pred_check
      _
    $region35: #{_nn_forward_impl.1} parent=1 // pred_check_branch
      %90 = sbr.rel (0) target = $region37
    $region36: #{_nn_forward_impl.1} parent=1 // pred_region
      _
    $region37: #{_nn_forward_impl.1} parent=1 // pred_fallthru
      _
    // Predicated region
    $region38: #{_nn_forward_impl.1} parent=1 // pred_check
      _
    $region39: #{_nn_forward_impl.1} parent=1 // pred_check_branch
      %92 = sbr.rel (0) target = $region41
    $region40: #{_nn_forward_impl.1} parent=1 // pred_region
      %93 = dma.done [#allocation3], 128
    $region41: #{_nn_forward_impl.1} parent=1 // pred_fallthru
      _
    // Predicated region
    $region42: #{_nn_forward_impl.1} parent=1 // pred_check
      _
    $region43: #{_nn_forward_impl.1} parent=1 // pred_check_branch
      %95 = sbr.rel (0) target = $region45
    $region44: #{_nn_forward_impl.1} parent=1 // pred_region
      %96 = dma.done [#allocation6], 4096
    $region45: #{_nn_forward_impl.1} parent=1 // pred_fallthru
      _
    // Predicated region
    $region46: #{_nn_forward_impl.1} parent=1 // pred_check
      _
    $region47: #{_nn_forward_impl.1} parent=1 // pred_check_branch
      %98 = sbr.rel (0) target = $region49
    $region48: #{_nn_forward_impl.1} parent=1 // pred_region
      %99 = dma.done [#allocation6], 64
    $region49: #{_nn_forward_impl.1} parent=1 // pred_fallthru
      _
    // Predicated region
    $region50: #{_nn_forward_impl.1} parent=1 // pred_check
      _
    $region51: #{_nn_forward_impl.1} parent=1 // pred_check_branch
      %101 = sbr.rel (0) target = $region53
    $region52: #{_nn_forward_impl.1} parent=1 // pred_region
      %102 = dma.done [#allocation9], 16384
    $region53: #{_nn_forward_impl.1} parent=1 // pred_fallthru
      _
    // Predicated region
    $region54: #{_nn_forward_impl.1} parent=1 // pred_check
      _
    $region55: #{_nn_forward_impl.1} parent=1 // pred_check_branch
      %104 = sbr.rel (0) target = $region57
    $region56: #{_nn_forward_impl.1} parent=1 // pred_region
      %105 = dma.done [#allocation9], 64
    $region57: #{_nn_forward_impl.1} parent=1 // pred_fallthru
      _
    // Predicated region
    $region58: #{_nn_forward_impl.1} parent=1 // pred_check
      _
    $region59: #{_nn_forward_impl.1} parent=1 // pred_check_branch
      %107 = sbr.rel (0) target = $region61
    $region60: #{_nn_forward_impl.1} parent=1 // pred_region
      %108 = dma.done [#allocation12], 4096
    $region61: #{_nn_forward_impl.1} parent=1 // pred_fallthru
      _
    %v110 = vld [vmem:[#allocation2] sm:$0xff]
    %v111 = vpack.c.bf16 %v110, %v110
    %v112 = vld [vmem:[%s1] sm:$0xf]
    %v113 = vld [vmem:[%s1 + $0x4] sm:$0xf]
    %v114 = vld [vmem:[%s1 + $0x8] sm:$0xf]
    %v115 = vld [vmem:[%s1 + $0xc] sm:$0xf]
    %v116 = vld [vmem:[%s2] sm:$0x1]
    %v118 = vlaneseq
    %v119 = vshrl.u32 %v118, 7
    %v120 = vsub.s32 0, %v119
    %v121 = vrot.slane %v116, %v120
    %v127 = vunpack.c.l.b16 %v112
    %v128 = vunpack.c.l.b16 %v113
    %v129 = vunpack.c.l.b16 %v114
    %v130 = vunpack.c.l.b16 %v115
    %v131 = vpack.c.b16 %v128, %v127
    %v132 = vpack.c.b16 %v130, %v129
    %vm135 = vcmask 261120
    %v137 = vsel %vm135, %v111, 0
    %139 = vmatprep.subr.bf16.mxu0 0
    %140 = vmatpush1.bf16.msra.mxu0 %v131
    %141 = vmatprep.subr.bf16.mxu0 0
    %142 = vmatpush1.bf16.msra.mxu0 %v132
    %143 = vmatprep.subr.bf16.mxu0 0
    %144 = vmatpush1.bf16.msra.mxu0 0
    %145 = vmatprep.subr.bf16.mxu0 0
    %146 = vmatpush1.bf16.msra.mxu0 0
    %147 = vmatprep.subr.bf16.mxu0 0
    %148 = vmatpush1.bf16.msra.mxu0 0
    %149 = vmatprep.subr.bf16.mxu0 0
    %150 = vmatpush1.bf16.msra.mxu0 0
    %151 = vmatprep.subr.bf16.mxu0 0
    %152 = vmatpush1.bf16.msra.mxu0 0
    %153 = vmatprep.subr.bf16.mxu0 0
    %154 = vmatpush1.bf16.msra.mxu0 0
    %155 = vmatprep.subr.bf16.mxu0 0
    %156 = vmatpush1.bf16.msra.mxu0 0
    %157 = vmatprep.subr.bf16.mxu0 0
    %158 = vmatpush1.bf16.msra.mxu0 0
    %159 = vmatprep.subr.bf16.mxu0 0
    %160 = vmatpush1.bf16.msra.mxu0 0
    %161 = vmatprep.subr.bf16.mxu0 0
    %162 = vmatpush1.bf16.msra.mxu0 0
    %163 = vmatprep.subr.bf16.mxu0 0
    %164 = vmatpush1.bf16.msra.mxu0 0
    %165 = vmatprep.subr.bf16.mxu0 0
    %166 = vmatpush1.bf16.msra.mxu0 0
    %167 = vmatprep.subr.bf16.mxu0 0
    %168 = vmatpush1.bf16.msra.mxu0 0
    %169 = vmatprep.subr.bf16.mxu0 0
    %170 = vmatpush1.bf16.msra.mxu0 0
    %171 = vmatprep.mubr.bf16.mxu0 0
    %172 = vmatmul.mubr.bf16.gmra.mrb[0].mxu0 %v137
    %v173 = vpop.f32.mrb[0].mxu0
    %v174 = vadd.f32 %v121, %v173
    %v175 = vpop.f32.mrb[0].mxu0
    %v176 = vpop.f32.mrb[0].mxu0
    %v177 = vpop.f32.mrb[0].mxu0
    %178 = vdwg.mxu0
    %v179 = vmax.f32 %v174, 0.0
    %v180 = vpack.c.bf16 %v179, %v179
    %v181 = vld [vmem:[#allocation5] sm:$0xff]
    %v182 = vld [vmem:[#allocation5 + $0x8] sm:$0xff]
    %v183 = vld [vmem:[#allocation5 + $0x10] sm:$0xff]
    %v184 = vld [vmem:[#allocation5 + $0x18] sm:$0xff]
    %v185 = vld [vmem:[#allocation5 + $0x20] sm:$0xff]
    %v186 = vld [vmem:[#allocation5 + $0x28] sm:$0xff]
    %v187 = vld [vmem:[#allocation5 + $0x30] sm:$0xff]
    %v188 = vld [vmem:[#allocation5 + $0x38] sm:$0xff]
    %v189 = vld [vmem:[#allocation5 + $0x40] sm:$0xff]
    %v190 = vld [vmem:[#allocation5 + $0x48] sm:$0xff]
    %v191 = vld [vmem:[#allocation5 + $0x50] sm:$0xff]
    %v192 = vld [vmem:[#allocation5 + $0x58] sm:$0xff]
    %v193 = vld [vmem:[#allocation5 + $0x60] sm:$0xff]
    %v194 = vld [vmem:[#allocation5 + $0x68] sm:$0xff]
    %v195 = vld [vmem:[#allocation5 + $0x70] sm:$0xff]
    %v196 = vld [vmem:[#allocation5 + $0x78] sm:$0xff]
    %v197 = vld [vmem:[#allocation5 + $0x80] sm:$0xff]
    %v198 = vld [vmem:[#allocation5 + $0x88] sm:$0xff]
    %v199 = vld [vmem:[#allocation5 + $0x90] sm:$0xff]
    %v200 = vld [vmem:[#allocation5 + $0x98] sm:$0xff]
    %v201 = vld [vmem:[#allocation5 + $0xa0] sm:$0xff]
    %v202 = vld [vmem:[#allocation5 + $0xa8] sm:$0xff]
    %v203 = vld [vmem:[#allocation5 + $0xb0] sm:$0xff]
    %v204 = vld [vmem:[#allocation5 + $0xb8] sm:$0xff]
    %v205 = vld [vmem:[#allocation5 + $0xc0] sm:$0xff]
    %v206 = vld [vmem:[#allocation5 + $0xc8] sm:$0xff]
    %v207 = vld [vmem:[#allocation5 + $0xd0] sm:$0xff]
    %v208 = vld [vmem:[#allocation5 + $0xd8] sm:$0xff]
    %v209 = vld [vmem:[#allocation5 + $0xe0] sm:$0xff]
    %v210 = vld [vmem:[#allocation5 + $0xe8] sm:$0xff]
    %v211 = vld [vmem:[#allocation5 + $0xf0] sm:$0xff]
    %v212 = vld [vmem:[#allocation5 + $0xf8] sm:$0xff]
    %v213 = vld [vmem:[#allocation7] sm:$0xf]
    %v215 = vlaneseq
    %v216 = vshrl.u32 %v215, 7
    %v217 = vsub.s32 0, %v216
    %v218 = vrot.slane %v213, %v217
    %v219 = vlaneseq
    %v220 = vshrl.u32 %v219, 7
    %v221 = vsub.s32 1, %v220
    %v222 = vrot.slane %v213, %v221
    %v223 = vlaneseq
    %v224 = vshrl.u32 %v223, 7
    %v225 = vsub.s32 2, %v224
    %v226 = vrot.slane %v213, %v225
    %v227 = vlaneseq
    %v228 = vshrl.u32 %v227, 7
    %v229 = vsub.s32 3, %v228
    %v230 = vrot.slane %v213, %v229
    %v267 = vunpack.c.l.b16 %v181
    %v268 = vunpack.c.h.b16 %v181
    %v269 = vunpack.c.l.b16 %v182
    %v270 = vunpack.c.h.b16 %v182
    %v271 = vunpack.c.l.b16 %v183
    %v272 = vunpack.c.h.b16 %v183
    %v273 = vunpack.c.l.b16 %v184
    %v274 = vunpack.c.h.b16 %v184
    %v275 = vunpack.c.l.b16 %v185
    %v276 = vunpack.c.h.b16 %v185
    %v277 = vunpack.c.l.b16 %v186
    %v278 = vunpack.c.h.b16 %v186
    %v279 = vunpack.c.l.b16 %v187
    %v280 = vunpack.c.h.b16 %v187
    %v281 = vunpack.c.l.b16 %v188
    %v282 = vunpack.c.h.b16 %v188
    %v283 = vunpack.c.l.b16 %v189
    %v284 = vunpack.c.h.b16 %v189
    %v285 = vunpack.c.l.b16 %v190
    %v286 = vunpack.c.h.b16 %v190
    %v287 = vunpack.c.l.b16 %v191
    %v288 = vunpack.c.h.b16 %v191
    %v289 = vunpack.c.l.b16 %v192
    %v290 = vunpack.c.h.b16 %v192
    %v291 = vunpack.c.l.b16 %v193
    %v292 = vunpack.c.h.b16 %v193
    %v293 = vunpack.c.l.b16 %v194
    %v294 = vunpack.c.h.b16 %v194
    %v295 = vunpack.c.l.b16 %v195
    %v296 = vunpack.c.h.b16 %v195
    %v297 = vunpack.c.l.b16 %v196
    %v298 = vunpack.c.h.b16 %v196
    %v299 = vunpack.c.l.b16 %v197
    %v300 = vunpack.c.h.b16 %v197
    %v301 = vunpack.c.l.b16 %v198
    %v302 = vunpack.c.h.b16 %v198
    %v303 = vunpack.c.l.b16 %v199
    %v304 = vunpack.c.h.b16 %v199
    %v305 = vunpack.c.l.b16 %v200
    %v306 = vunpack.c.h.b16 %v200
    %v307 = vunpack.c.l.b16 %v201
    %v308 = vunpack.c.h.b16 %v201
    %v309 = vunpack.c.l.b16 %v202
    %v310 = vunpack.c.h.b16 %v202
    %v311 = vunpack.c.l.b16 %v203
    %v312 = vunpack.c.h.b16 %v203
    %v313 = vunpack.c.l.b16 %v204
    %v314 = vunpack.c.h.b16 %v204
    %v315 = vunpack.c.l.b16 %v205
    %v316 = vunpack.c.h.b16 %v205
    %v317 = vunpack.c.l.b16 %v206
    %v318 = vunpack.c.h.b16 %v206
    %v319 = vunpack.c.l.b16 %v207
    %v320 = vunpack.c.h.b16 %v207
    %v321 = vunpack.c.l.b16 %v208
    %v322 = vunpack.c.h.b16 %v208
    %v323 = vunpack.c.l.b16 %v209
    %v324 = vunpack.c.h.b16 %v209
    %v325 = vunpack.c.l.b16 %v210
    %v326 = vunpack.c.h.b16 %v210
    %v327 = vunpack.c.l.b16 %v211
    %v328 = vunpack.c.h.b16 %v211
    %v329 = vunpack.c.l.b16 %v212
    %v330 = vunpack.c.h.b16 %v212
    %v331 = vpack.c.b16 %v271, %v267
    %v332 = vpack.c.b16 %v272, %v268
    %v333 = vpack.c.b16 %v273, %v269
    %v334 = vpack.c.b16 %v274, %v270
    %v335 = vpack.c.b16 %v279, %v275
    %v336 = vpack.c.b16 %v280, %v276
    %v337 = vpack.c.b16 %v281, %v277
    %v338 = vpack.c.b16 %v282, %v278
    %v339 = vpack.c.b16 %v287, %v283
    %v340 = vpack.c.b16 %v288, %v284
    %v341 = vpack.c.b16 %v289, %v285
    %v342 = vpack.c.b16 %v290, %v286
    %v343 = vpack.c.b16 %v295, %v291
    %v344 = vpack.c.b16 %v296, %v292
    %v345 = vpack.c.b16 %v297, %v293
    %v346 = vpack.c.b16 %v298, %v294
    %v347 = vpack.c.b16 %v303, %v299
    %v348 = vpack.c.b16 %v304, %v300
    %v349 = vpack.c.b16 %v305, %v301
    %v350 = vpack.c.b16 %v306, %v302
    %v351 = vpack.c.b16 %v311, %v307
    %v352 = vpack.c.b16 %v312, %v308
    %v353 = vpack.c.b16 %v313, %v309
    %v354 = vpack.c.b16 %v314, %v310
    %v355 = vpack.c.b16 %v319, %v315
    %v356 = vpack.c.b16 %v320, %v316
    %v357 = vpack.c.b16 %v321, %v317
    %v358 = vpack.c.b16 %v322, %v318
    %v359 = vpack.c.b16 %v327, %v323
    %v360 = vpack.c.b16 %v328, %v324
    %v361 = vpack.c.b16 %v329, %v325
    %v362 = vpack.c.b16 %v330, %v326
    %395 = vmatprep.subr.bf16.mxu0 %v332
    %396 = vmatpush1.bf16.msra.mxu0 %v331
    %397 = vmatprep.subr.bf16.mxu0 %v336
    %398 = vmatpush1.bf16.msra.mxu0 %v335
    %399 = vmatprep.subr.bf16.mxu0 %v340
    %400 = vmatpush1.bf16.msra.mxu0 %v339
    %401 = vmatprep.subr.bf16.mxu0 %v344
    %402 = vmatpush1.bf16.msra.mxu0 %v343
    %403 = vmatprep.subr.bf16.mxu0 %v348
    %404 = vmatpush1.bf16.msra.mxu0 %v347
    %405 = vmatprep.subr.bf16.mxu0 %v352
    %406 = vmatpush1.bf16.msra.mxu0 %v351
    %407 = vmatprep.subr.bf16.mxu0 %v356
    %408 = vmatpush1.bf16.msra.mxu0 %v355
    %409 = vmatprep.subr.bf16.mxu0 %v360
    %410 = vmatpush1.bf16.msra.mxu0 %v359
    %411 = vmatprep.subr.bf16.mxu0 0
    %412 = vmatpush1.bf16.msra.mxu0 0
    %413 = vmatprep.subr.bf16.mxu0 0
    %414 = vmatpush1.bf16.msra.mxu0 0
    %415 = vmatprep.subr.bf16.mxu0 0
    %416 = vmatpush1.bf16.msra.mxu0 0
    %417 = vmatprep.subr.bf16.mxu0 0
    %418 = vmatpush1.bf16.msra.mxu0 0
    %419 = vmatprep.subr.bf16.mxu0 0
    %420 = vmatpush1.bf16.msra.mxu0 0
    %421 = vmatprep.subr.bf16.mxu0 0
    %422 = vmatpush1.bf16.msra.mxu0 0
    %423 = vmatprep.subr.bf16.mxu0 0
    %424 = vmatpush1.bf16.msra.mxu0 0
    %425 = vmatprep.subr.bf16.mxu0 0
    %426 = vmatpush1.bf16.msra.mxu0 0
    %427 = vmatprep.mubr.bf16.mxu0 0
    %428 = vmatmul.mubr.bf16.gmra.mrb[0].mxu0 %v180
    %v429 = vpop.f32.mrb[0].mxu0
    %v430 = vadd.f32 %v218, %v429
    %v431 = vpop.f32.mrb[0].mxu0
    %v432 = vadd.f32 %v222, %v431
    %v433 = vpop.f32.mrb[0].mxu0
    %v434 = vpop.f32.mrb[0].mxu0
    %435 = vdwg.mxu0
    %436 = vmatprep.subr.bf16.mxu0 %v334
    %437 = vmatpush1.bf16.msra.mxu0 %v333
    %438 = vmatprep.subr.bf16.mxu0 %v338
    %439 = vmatpush1.bf16.msra.mxu0 %v337
    %440 = vmatprep.subr.bf16.mxu0 %v342
    %441 = vmatpush1.bf16.msra.mxu0 %v341
    %442 = vmatprep.subr.bf16.mxu0 %v346
    %443 = vmatpush1.bf16.msra.mxu0 %v345
    %444 = vmatprep.subr.bf16.mxu0 %v350
    %445 = vmatpush1.bf16.msra.mxu0 %v349
    %446 = vmatprep.subr.bf16.mxu0 %v354
    %447 = vmatpush1.bf16.msra.mxu0 %v353
    %448 = vmatprep.subr.bf16.mxu0 %v358
    %449 = vmatpush1.bf16.msra.mxu0 %v357
    %450 = vmatprep.subr.bf16.mxu0 %v362
    %451 = vmatpush1.bf16.msra.mxu0 %v361
    %452 = vmatprep.subr.bf16.mxu0 0
    %453 = vmatpush1.bf16.msra.mxu0 0
    %454 = vmatprep.subr.bf16.mxu0 0
    %455 = vmatpush1.bf16.msra.mxu0 0
    %456 = vmatprep.subr.bf16.mxu0 0
    %457 = vmatpush1.bf16.msra.mxu0 0
    %458 = vmatprep.subr.bf16.mxu0 0
    %459 = vmatpush1.bf16.msra.mxu0 0
    %460 = vmatprep.subr.bf16.mxu0 0
    %461 = vmatpush1.bf16.msra.mxu0 0
    %462 = vmatprep.subr.bf16.mxu0 0
    %463 = vmatpush1.bf16.msra.mxu0 0
    %464 = vmatprep.subr.bf16.mxu0 0
    %465 = vmatpush1.bf16.msra.mxu0 0
    %466 = vmatprep.subr.bf16.mxu0 0
    %467 = vmatpush1.bf16.msra.mxu0 0
    %468 = vmatprep.mubr.bf16.mxu0 0
    %469 = vmatmul.mubr.bf16.gmra.mrb[0].mxu0 %v180
    %v470 = vpop.f32.mrb[0].mxu0
    %v471 = vadd.f32 %v226, %v470
    %v472 = vpop.f32.mrb[0].mxu0
    %v473 = vadd.f32 %v230, %v472
    %v474 = vpop.f32.mrb[0].mxu0
    %v475 = vpop.f32.mrb[0].mxu0
    %476 = vdwg.mxu0
    %v477 = vmax.f32 %v430, 0.0
    %v478 = vmax.f32 %v432, 0.0
    %v479 = vmax.f32 %v471, 0.0
    %v480 = vmax.f32 %v473, 0.0
    %v481 = vpack.c.bf16 %v477, %v477
    %v482 = vpack.c.bf16 %v478, %v478
    %v483 = vpack.c.bf16 %v479, %v479
    %v484 = vpack.c.bf16 %v480, %v480
    %v485 = vld [vmem:[#allocation8] sm:$0xff]
    %v486 = vld [vmem:[#allocation8 + $0x8] sm:$0xff]
    %v487 = vld [vmem:[#allocation8 + $0x10] sm:$0xff]
    %v488 = vld [vmem:[#allocation8 + $0x18] sm:$0xff]
    %v489 = vld [vmem:[#allocation8 + $0x20] sm:$0xff]
    %v490 = vld [vmem:[#allocation8 + $0x28] sm:$0xff]
    %v491 = vld [vmem:[#allocation8 + $0x30] sm:$0xff]
    %v492 = vld [vmem:[#allocation8 + $0x38] sm:$0xff]
    %v493 = vld [vmem:[#allocation8 + $0x40] sm:$0xff]
    %v494 = vld [vmem:[#allocation8 + $0x48] sm:$0xff]
    %v495 = vld [vmem:[#allocation8 + $0x50] sm:$0xff]
    %v496 = vld [vmem:[#allocation8 + $0x58] sm:$0xff]
    %v497 = vld [vmem:[#allocation8 + $0x60] sm:$0xff]
    %v498 = vld [vmem:[#allocation8 + $0x68] sm:$0xff]
    %v499 = vld [vmem:[#allocation8 + $0x70] sm:$0xff]
    %v500 = vld [vmem:[#allocation8 + $0x78] sm:$0xff]
    %v501 = vld [vmem:[#allocation8 + $0x80] sm:$0xff]
    %v502 = vld [vmem:[#allocation8 + $0x88] sm:$0xff]
    %v503 = vld [vmem:[#allocation8 + $0x90] sm:$0xff]
    %v504 = vld [vmem:[#allocation8 + $0x98] sm:$0xff]
    %v505 = vld [vmem:[#allocation8 + $0xa0] sm:$0xff]
    %v506 = vld [vmem:[#allocation8 + $0xa8] sm:$0xff]
    %v507 = vld [vmem:[#allocation8 + $0xb0] sm:$0xff]
    %v508 = vld [vmem:[#allocation8 + $0xb8] sm:$0xff]
    %v509 = vld [vmem:[#allocation8 + $0xc0] sm:$0xff]
    %v510 = vld [vmem:[#allocation8 + $0xc8] sm:$0xff]
    %v511 = vld [vmem:[#allocation8 + $0xd0] sm:$0xff]
    %v512 = vld [vmem:[#allocation8 + $0xd8] sm:$0xff]
    %v513 = vld [vmem:[#allocation8 + $0xe0] sm:$0xff]
    %v514 = vld [vmem:[#allocation8 + $0xe8] sm:$0xff]
    %v515 = vld [vmem:[#allocation8 + $0xf0] sm:$0xff]
    %v516 = vld [vmem:[#allocation8 + $0xf8] sm:$0xff]
    %v517 = vld [vmem:[#allocation8 + $0x100] sm:$0xff]
    %v518 = vld [vmem:[#allocation8 + $0x108] sm:$0xff]
    %v519 = vld [vmem:[#allocation8 + $0x110] sm:$0xff]
    %v520 = vld [vmem:[#allocation8 + $0x118] sm:$0xff]
    %v521 = vld [vmem:[#allocation8 + $0x120] sm:$0xff]
    %v522 = vld [vmem:[#allocation8 + $0x128] sm:$0xff]
    %v523 = vld [vmem:[#allocation8 + $0x130] sm:$0xff]
    %v524 = vld [vmem:[#allocation8 + $0x138] sm:$0xff]
    %v525 = vld [vmem:[#allocation8 + $0x140] sm:$0xff]
    %v526 = vld [vmem:[#allocation8 + $0x148] sm:$0xff]
    %v527 = vld [vmem:[#allocation8 + $0x150] sm:$0xff]
    %v528 = vld [vmem:[#allocation8 + $0x158] sm:$0xff]
    %v529 = vld [vmem:[#allocation8 + $0x160] sm:$0xff]
    %v530 = vld [vmem:[#allocation8 + $0x168] sm:$0xff]
    %v531 = vld [vmem:[#allocation8 + $0x170] sm:$0xff]
    %v532 = vld [vmem:[#allocation8 + $0x178] sm:$0xff]
    %v533 = vld [vmem:[#allocation8 + $0x180] sm:$0xff]
    %v534 = vld [vmem:[#allocation8 + $0x188] sm:$0xff]
    %v535 = vld [vmem:[#allocation8 + $0x190] sm:$0xff]
    %v536 = vld [vmem:[#allocation8 + $0x198] sm:$0xff]
    %v537 = vld [vmem:[#allocation8 + $0x1a0] sm:$0xff]
    %v538 = vld [vmem:[#allocation8 + $0x1a8] sm:$0xff]
    %v539 = vld [vmem:[#allocation8 + $0x1b0] sm:$0xff]
    %v540 = vld [vmem:[#allocation8 + $0x1b8] sm:$0xff]
    %v541 = vld [vmem:[#allocation8 + $0x1c0] sm:$0xff]
    %v542 = vld [vmem:[#allocation8 + $0x1c8] sm:$0xff]
    %v543 = vld [vmem:[#allocation8 + $0x1d0] sm:$0xff]
    %v544 = vld [vmem:[#allocation8 + $0x1d8] sm:$0xff]
    %v545 = vld [vmem:[#allocation8 + $0x1e0] sm:$0xff]
    %v546 = vld [vmem:[#allocation8 + $0x1e8] sm:$0xff]
    %v547 = vld [vmem:[#allocation8 + $0x1f0] sm:$0xff]
    %v548 = vld [vmem:[#allocation8 + $0x1f8] sm:$0xff]
    %v549 = vld [vmem:[#allocation8 + $0x200] sm:$0xff]
    %v550 = vld [vmem:[#allocation8 + $0x208] sm:$0xff]
    %v551 = vld [vmem:[#allocation8 + $0x210] sm:$0xff]
    %v552 = vld [vmem:[#allocation8 + $0x218] sm:$0xff]
    %v553 = vld [vmem:[#allocation8 + $0x220] sm:$0xff]
    %v554 = vld [vmem:[#allocation8 + $0x228] sm:$0xff]
    %v555 = vld [vmem:[#allocation8 + $0x230] sm:$0xff]
    %v556 = vld [vmem:[#allocation8 + $0x238] sm:$0xff]
    %v557 = vld [vmem:[#allocation8 + $0x240] sm:$0xff]
    %v558 = vld [vmem:[#allocation8 + $0x248] sm:$0xff]
    %v559 = vld [vmem:[#allocation8 + $0x250] sm:$0xff]
    %v560 = vld [vmem:[#allocation8 + $0x258] sm:$0xff]
    %v561 = vld [vmem:[#allocation8 + $0x260] sm:$0xff]
    %v562 = vld [vmem:[#allocation8 + $0x268] sm:$0xff]
    %v563 = vld [vmem:[#allocation8 + $0x270] sm:$0xff]
    %v564 = vld [vmem:[#allocation8 + $0x278] sm:$0xff]
    %v565 = vld [vmem:[#allocation8 + $0x280] sm:$0xff]
    %v566 = vld [vmem:[#allocation8 + $0x288] sm:$0xff]
    %v567 = vld [vmem:[#allocation8 + $0x290] sm:$0xff]
    %v568 = vld [vmem:[#allocation8 + $0x298] sm:$0xff]
    %v569 = vld [vmem:[#allocation8 + $0x2a0] sm:$0xff]
    %v570 = vld [vmem:[#allocation8 + $0x2a8] sm:$0xff]
    %v571 = vld [vmem:[#allocation8 + $0x2b0] sm:$0xff]
    %v572 = vld [vmem:[#allocation8 + $0x2b8] sm:$0xff]
    %v573 = vld [vmem:[#allocation8 + $0x2c0] sm:$0xff]
    %v574 = vld [vmem:[#allocation8 + $0x2c8] sm:$0xff]
    %v575 = vld [vmem:[#allocation8 + $0x2d0] sm:$0xff]
    %v576 = vld [vmem:[#allocation8 + $0x2d8] sm:$0xff]
    %v577 = vld [vmem:[#allocation8 + $0x2e0] sm:$0xff]
    %v578 = vld [vmem:[#allocation8 + $0x2e8] sm:$0xff]
    %v579 = vld [vmem:[#allocation8 + $0x2f0] sm:$0xff]
    %v580 = vld [vmem:[#allocation8 + $0x2f8] sm:$0xff]
    %v581 = vld [vmem:[#allocation8 + $0x300] sm:$0xff]
    %v582 = vld [vmem:[#allocation8 + $0x308] sm:$0xff]
    %v583 = vld [vmem:[#allocation8 + $0x310] sm:$0xff]
    %v584 = vld [vmem:[#allocation8 + $0x318] sm:$0xff]
    %v585 = vld [vmem:[#allocation8 + $0x320] sm:$0xff]
    %v586 = vld [vmem:[#allocation8 + $0x328] sm:$0xff]
    %v587 = vld [vmem:[#allocation8 + $0x330] sm:$0xff]
    %v588 = vld [vmem:[#allocation8 + $0x338] sm:$0xff]
    %v589 = vld [vmem:[#allocation8 + $0x340] sm:$0xff]
    %v590 = vld [vmem:[#allocation8 + $0x348] sm:$0xff]
    %v591 = vld [vmem:[#allocation8 + $0x350] sm:$0xff]
    %v592 = vld [vmem:[#allocation8 + $0x358] sm:$0xff]
    %v593 = vld [vmem:[#allocation8 + $0x360] sm:$0xff]
    %v594 = vld [vmem:[#allocation8 + $0x368] sm:$0xff]
    %v595 = vld [vmem:[#allocation8 + $0x370] sm:$0xff]
    %v596 = vld [vmem:[#allocation8 + $0x378] sm:$0xff]
    %v597 = vld [vmem:[#allocation8 + $0x380] sm:$0xff]
    %v598 = vld [vmem:[#allocation8 + $0x388] sm:$0xff]
    %v599 = vld [vmem:[#allocation8 + $0x390] sm:$0xff]
    %v600 = vld [vmem:[#allocation8 + $0x398] sm:$0xff]
    %v601 = vld [vmem:[#allocation8 + $0x3a0] sm:$0xff]
    %v602 = vld [vmem:[#allocation8 + $0x3a8] sm:$0xff]
    %v603 = vld [vmem:[#allocation8 + $0x3b0] sm:$0xff]
    %v604 = vld [vmem:[#allocation8 + $0x3b8] sm:$0xff]
    %v605 = vld [vmem:[#allocation8 + $0x3c0] sm:$0xff]
    %v606 = vld [vmem:[#allocation8 + $0x3c8] sm:$0xff]
    %v607 = vld [vmem:[#allocation8 + $0x3d0] sm:$0xff]
    %v608 = vld [vmem:[#allocation8 + $0x3d8] sm:$0xff]
    %v609 = vld [vmem:[#allocation8 + $0x3e0] sm:$0xff]
    %v610 = vld [vmem:[#allocation8 + $0x3e8] sm:$0xff]
    %v611 = vld [vmem:[#allocation8 + $0x3f0] sm:$0xff]
    %v612 = vld [vmem:[#allocation8 + $0x3f8] sm:$0xff]
    %v613 = vld [vmem:[#allocation10] sm:$0xf]
    %v615 = vlaneseq
    %v616 = vshrl.u32 %v615, 7
    %v617 = vsub.s32 0, %v616
    %v618 = vrot.slane %v613, %v617
    %v619 = vlaneseq
    %v620 = vshrl.u32 %v619, 7
    %v621 = vsub.s32 1, %v620
    %v622 = vrot.slane %v613, %v621
    %v623 = vlaneseq
    %v624 = vshrl.u32 %v623, 7
    %v625 = vsub.s32 2, %v624
    %v626 = vrot.slane %v613, %v625
    %v627 = vlaneseq
    %v628 = vshrl.u32 %v627, 7
    %v629 = vsub.s32 3, %v628
    %v630 = vrot.slane %v613, %v629
    %v763 = vunpack.c.l.b16 %v485
    %v764 = vunpack.c.h.b16 %v485
    %v765 = vunpack.c.l.b16 %v486
    %v766 = vunpack.c.h.b16 %v486
    %v767 = vunpack.c.l.b16 %v487
    %v768 = vunpack.c.h.b16 %v487
    %v769 = vunpack.c.l.b16 %v488
    %v770 = vunpack.c.h.b16 %v488
    %v771 = vunpack.c.l.b16 %v489
    %v772 = vunpack.c.h.b16 %v489
    %v773 = vunpack.c.l.b16 %v490
    %v774 = vunpack.c.h.b16 %v490
    %v775 = vunpack.c.l.b16 %v491
    %v776 = vunpack.c.h.b16 %v491
    %v777 = vunpack.c.l.b16 %v492
    %v778 = vunpack.c.h.b16 %v492
    %v779 = vunpack.c.l.b16 %v493
    %v780 = vunpack.c.h.b16 %v493
    %v781 = vunpack.c.l.b16 %v494
    %v782 = vunpack.c.h.b16 %v494
    %v783 = vunpack.c.l.b16 %v495
    %v784 = vunpack.c.h.b16 %v495
    %v785 = vunpack.c.l.b16 %v496
    %v786 = vunpack.c.h.b16 %v496
    %v787 = vunpack.c.l.b16 %v497
    %v788 = vunpack.c.h.b16 %v497
    %v789 = vunpack.c.l.b16 %v498
    %v790 = vunpack.c.h.b16 %v498
    %v791 = vunpack.c.l.b16 %v499
    %v792 = vunpack.c.h.b16 %v499
    %v793 = vunpack.c.l.b16 %v500
    %v794 = vunpack.c.h.b16 %v500
    %v795 = vunpack.c.l.b16 %v501
    %v796 = vunpack.c.h.b16 %v501
    %v797 = vunpack.c.l.b16 %v502
    %v798 = vunpack.c.h.b16 %v502
    %v799 = vunpack.c.l.b16 %v503
    %v800 = vunpack.c.h.b16 %v503
    %v801 = vunpack.c.l.b16 %v504
    %v802 = vunpack.c.h.b16 %v504
    %v803 = vunpack.c.l.b16 %v505
    %v804 = vunpack.c.h.b16 %v505
    %v805 = vunpack.c.l.b16 %v506
    %v806 = vunpack.c.h.b16 %v506
    %v807 = vunpack.c.l.b16 %v507
    %v808 = vunpack.c.h.b16 %v507
    %v809 = vunpack.c.l.b16 %v508
    %v810 = vunpack.c.h.b16 %v508
    %v811 = vunpack.c.l.b16 %v509
    %v812 = vunpack.c.h.b16 %v509
    %v813 = vunpack.c.l.b16 %v510
    %v814 = vunpack.c.h.b16 %v510
    %v815 = vunpack.c.l.b16 %v511
    %v816 = vunpack.c.h.b16 %v511
    %v817 = vunpack.c.l.b16 %v512
    %v818 = vunpack.c.h.b16 %v512
    %v819 = vunpack.c.l.b16 %v513
    %v820 = vunpack.c.h.b16 %v513
    %v821 = vunpack.c.l.b16 %v514
    %v822 = vunpack.c.h.b16 %v514
    %v823 = vunpack.c.l.b16 %v515
    %v824 = vunpack.c.h.b16 %v515
    %v825 = vunpack.c.l.b16 %v516
    %v826 = vunpack.c.h.b16 %v516
    %v827 = vunpack.c.l.b16 %v517
    %v828 = vunpack.c.h.b16 %v517
    %v829 = vunpack.c.l.b16 %v518
    %v830 = vunpack.c.h.b16 %v518
    %v831 = vunpack.c.l.b16 %v519
    %v832 = vunpack.c.h.b16 %v519
    %v833 = vunpack.c.l.b16 %v520
    %v834 = vunpack.c.h.b16 %v520
    %v835 = vunpack.c.l.b16 %v521
    %v836 = vunpack.c.h.b16 %v521
    %v837 = vunpack.c.l.b16 %v522
    %v838 = vunpack.c.h.b16 %v522
    %v839 = vunpack.c.l.b16 %v523
    %v840 = vunpack.c.h.b16 %v523
    %v841 = vunpack.c.l.b16 %v524
    %v842 = vunpack.c.h.b16 %v524
    %v843 = vunpack.c.l.b16 %v525
    %v844 = vunpack.c.h.b16 %v525
    %v845 = vunpack.c.l.b16 %v526
    %v846 = vunpack.c.h.b16 %v526
    %v847 = vunpack.c.l.b16 %v527
    %v848 = vunpack.c.h.b16 %v527
    %v849 = vunpack.c.l.b16 %v528
    %v850 = vunpack.c.h.b16 %v528
    %v851 = vunpack.c.l.b16 %v529
    %v852 = vunpack.c.h.b16 %v529
    %v853 = vunpack.c.l.b16 %v530
    %v854 = vunpack.c.h.b16 %v530
    %v855 = vunpack.c.l.b16 %v531
    %v856 = vunpack.c.h.b16 %v531
    %v857 = vunpack.c.l.b16 %v532
    %v858 = vunpack.c.h.b16 %v532
    %v859 = vunpack.c.l.b16 %v533
    %v860 = vunpack.c.h.b16 %v533
    %v861 = vunpack.c.l.b16 %v534
    %v862 = vunpack.c.h.b16 %v534
    %v863 = vunpack.c.l.b16 %v535
    %v864 = vunpack.c.h.b16 %v535
    %v865 = vunpack.c.l.b16 %v536
    %v866 = vunpack.c.h.b16 %v536
    %v867 = vunpack.c.l.b16 %v537
    %v868 = vunpack.c.h.b16 %v537
    %v869 = vunpack.c.l.b16 %v538
    %v870 = vunpack.c.h.b16 %v538
    %v871 = vunpack.c.l.b16 %v539
    %v872 = vunpack.c.h.b16 %v539
    %v873 = vunpack.c.l.b16 %v540
    %v874 = vunpack.c.h.b16 %v540
    %v875 = vunpack.c.l.b16 %v541
    %v876 = vunpack.c.h.b16 %v541
    %v877 = vunpack.c.l.b16 %v542
    %v878 = vunpack.c.h.b16 %v542
    %v879 = vunpack.c.l.b16 %v543
    %v880 = vunpack.c.h.b16 %v543
    %v881 = vunpack.c.l.b16 %v544
    %v882 = vunpack.c.h.b16 %v544
    %v883 = vunpack.c.l.b16 %v545
    %v884 = vunpack.c.h.b16 %v545
    %v885 = vunpack.c.l.b16 %v546
    %v886 = vunpack.c.h.b16 %v546
    %v887 = vunpack.c.l.b16 %v547
    %v888 = vunpack.c.h.b16 %v547
    %v889 = vunpack.c.l.b16 %v548
    %v890 = vunpack.c.h.b16 %v548
    %v891 = vunpack.c.l.b16 %v549
    %v892 = vunpack.c.h.b16 %v549
    %v893 = vunpack.c.l.b16 %v550
    %v894 = vunpack.c.h.b16 %v550
    %v895 = vunpack.c.l.b16 %v551
    %v896 = vunpack.c.h.b16 %v551
    %v897 = vunpack.c.l.b16 %v552
    %v898 = vunpack.c.h.b16 %v552
    %v899 = vunpack.c.l.b16 %v553
    %v900 = vunpack.c.h.b16 %v553
    %v901 = vunpack.c.l.b16 %v554
    %v902 = vunpack.c.h.b16 %v554
    %v903 = vunpack.c.l.b16 %v555
    %v904 = vunpack.c.h.b16 %v555
    %v905 = vunpack.c.l.b16 %v556
    %v906 = vunpack.c.h.b16 %v556
    %v907 = vunpack.c.l.b16 %v557
    %v908 = vunpack.c.h.b16 %v557
    %v909 = vunpack.c.l.b16 %v558
    %v910 = vunpack.c.h.b16 %v558
    %v911 = vunpack.c.l.b16 %v559
    %v912 = vunpack.c.h.b16 %v559
    %v913 = vunpack.c.l.b16 %v560
    %v914 = vunpack.c.h.b16 %v560
    %v915 = vunpack.c.l.b16 %v561
    %v916 = vunpack.c.h.b16 %v561
    %v917 = vunpack.c.l.b16 %v562
    %v918 = vunpack.c.h.b16 %v562
    %v919 = vunpack.c.l.b16 %v563
    %v920 = vunpack.c.h.b16 %v563
    %v921 = vunpack.c.l.b16 %v564
    %v922 = vunpack.c.h.b16 %v564
    %v923 = vunpack.c.l.b16 %v565
    %v924 = vunpack.c.h.b16 %v565
    %v925 = vunpack.c.l.b16 %v566
    %v926 = vunpack.c.h.b16 %v566
    %v927 = vunpack.c.l.b16 %v567
    %v928 = vunpack.c.h.b16 %v567
    %v929 = vunpack.c.l.b16 %v568
    %v930 = vunpack.c.h.b16 %v568
    %v931 = vunpack.c.l.b16 %v569
    %v932 = vunpack.c.h.b16 %v569
    %v933 = vunpack.c.l.b16 %v570
    %v934 = vunpack.c.h.b16 %v570
    %v935 = vunpack.c.l.b16 %v571
    %v936 = vunpack.c.h.b16 %v571
    %v937 = vunpack.c.l.b16 %v572
    %v938 = vunpack.c.h.b16 %v572
    %v939 = vunpack.c.l.b16 %v573
    %v940 = vunpack.c.h.b16 %v573
    %v941 = vunpack.c.l.b16 %v574
    %v942 = vunpack.c.h.b16 %v574
    %v943 = vunpack.c.l.b16 %v575
    %v944 = vunpack.c.h.b16 %v575
    %v945 = vunpack.c.l.b16 %v576
    %v946 = vunpack.c.h.b16 %v576
    %v947 = vunpack.c.l.b16 %v577
    %v948 = vunpack.c.h.b16 %v577
    %v949 = vunpack.c.l.b16 %v578
    %v950 = vunpack.c.h.b16 %v578
    %v951 = vunpack.c.l.b16 %v579
    %v952 = vunpack.c.h.b16 %v579
    %v953 = vunpack.c.l.b16 %v580
    %v954 = vunpack.c.h.b16 %v580
    %v955 = vunpack.c.l.b16 %v581
    %v956 = vunpack.c.h.b16 %v581
    %v957 = vunpack.c.l.b16 %v582
    %v958 = vunpack.c.h.b16 %v582
    %v959 = vunpack.c.l.b16 %v583
    %v960 = vunpack.c.h.b16 %v583
    %v961 = vunpack.c.l.b16 %v584
    %v962 = vunpack.c.h.b16 %v584
    %v963 = vunpack.c.l.b16 %v585
    %v964 = vunpack.c.h.b16 %v585
    %v965 = vunpack.c.l.b16 %v586
    %v966 = vunpack.c.h.b16 %v586
    %v967 = vunpack.c.l.b16 %v587
    %v968 = vunpack.c.h.b16 %v587
    %v969 = vunpack.c.l.b16 %v588
    %v970 = vunpack.c.h.b16 %v588
    %v971 = vunpack.c.l.b16 %v589
    %v972 = vunpack.c.h.b16 %v589
    %v973 = vunpack.c.l.b16 %v590
    %v974 = vunpack.c.h.b16 %v590
    %v975 = vunpack.c.l.b16 %v591
    %v976 = vunpack.c.h.b16 %v591
    %v977 = vunpack.c.l.b16 %v592
    %v978 = vunpack.c.h.b16 %v592
    %v979 = vunpack.c.l.b16 %v593
    %v980 = vunpack.c.h.b16 %v593
    %v981 = vunpack.c.l.b16 %v594
    %v982 = vunpack.c.h.b16 %v594
    %v983 = vunpack.c.l.b16 %v595
    %v984 = vunpack.c.h.b16 %v595
    %v985 = vunpack.c.l.b16 %v596
    %v986 = vunpack.c.h.b16 %v596
    %v987 = vunpack.c.l.b16 %v597
    %v988 = vunpack.c.h.b16 %v597
    %v989 = vunpack.c.l.b16 %v598
    %v990 = vunpack.c.h.b16 %v598
    %v991 = vunpack.c.l.b16 %v599
    %v992 = vunpack.c.h.b16 %v599
    %v993 = vunpack.c.l.b16 %v600
    %v994 = vunpack.c.h.b16 %v600
    %v995 = vunpack.c.l.b16 %v601
    %v996 = vunpack.c.h.b16 %v601
    %v997 = vunpack.c.l.b16 %v602
    %v998 = vunpack.c.h.b16 %v602
    %v999 = vunpack.c.l.b16 %v603
    %v1000 = vunpack.c.h.b16 %v603
    %v1001 = vunpack.c.l.b16 %v604
    %v1002 = vunpack.c.h.b16 %v604
    %v1003 = vunpack.c.l.b16 %v605
    %v1004 = vunpack.c.h.b16 %v605
    %v1005 = vunpack.c.l.b16 %v606
    %v1006 = vunpack.c.h.b16 %v606
    %v1007 = vunpack.c.l.b16 %v607
    %v1008 = vunpack.c.h.b16 %v607
    %v1009 = vunpack.c.l.b16 %v608
    %v1010 = vunpack.c.h.b16 %v608
    %v1011 = vunpack.c.l.b16 %v609
    %v1012 = vunpack.c.h.b16 %v609
    %v1013 = vunpack.c.l.b16 %v610
    %v1014 = vunpack.c.h.b16 %v610
    %v1015 = vunpack.c.l.b16 %v611
    %v1016 = vunpack.c.h.b16 %v611
    %v1017 = vunpack.c.l.b16 %v612
    %v1018 = vunpack.c.h.b16 %v612
    %v1019 = vpack.c.b16 %v767, %v763
    %v1020 = vpack.c.b16 %v768, %v764
    %v1021 = vpack.c.b16 %v769, %v765
    %v1022 = vpack.c.b16 %v770, %v766
    %v1023 = vpack.c.b16 %v775, %v771
    %v1024 = vpack.c.b16 %v776, %v772
    %v1025 = vpack.c.b16 %v777, %v773
    %v1026 = vpack.c.b16 %v778, %v774
    %v1027 = vpack.c.b16 %v783, %v779
    %v1028 = vpack.c.b16 %v784, %v780
    %v1029 = vpack.c.b16 %v785, %v781
    %v1030 = vpack.c.b16 %v786, %v782
    %v1031 = vpack.c.b16 %v791, %v787
    %v1032 = vpack.c.b16 %v792, %v788
    %v1033 = vpack.c.b16 %v793, %v789
    %v1034 = vpack.c.b16 %v794, %v790
    %v1035 = vpack.c.b16 %v799, %v795
    %v1036 = vpack.c.b16 %v800, %v796
    %v1037 = vpack.c.b16 %v801, %v797
    %v1038 = vpack.c.b16 %v802, %v798
    %v1039 = vpack.c.b16 %v807, %v803
    %v1040 = vpack.c.b16 %v808, %v804
    %v1041 = vpack.c.b16 %v809, %v805
    %v1042 = vpack.c.b16 %v810, %v806
    %v1043 = vpack.c.b16 %v815, %v811
    %v1044 = vpack.c.b16 %v816, %v812
    %v1045 = vpack.c.b16 %v817, %v813
    %v1046 = vpack.c.b16 %v818, %v814
    %v1047 = vpack.c.b16 %v823, %v819
    %v1048 = vpack.c.b16 %v824, %v820
    %v1049 = vpack.c.b16 %v825, %v821
    %v1050 = vpack.c.b16 %v826, %v822
    %v1051 = vpack.c.b16 %v831, %v827
    %v1052 = vpack.c.b16 %v832, %v828
    %v1053 = vpack.c.b16 %v833, %v829
    %v1054 = vpack.c.b16 %v834, %v830
    %v1055 = vpack.c.b16 %v839, %v835
    %v1056 = vpack.c.b16 %v840, %v836
    %v1057 = vpack.c.b16 %v841, %v837
    %v1058 = vpack.c.b16 %v842, %v838
    %v1059 = vpack.c.b16 %v847, %v843
    %v1060 = vpack.c.b16 %v848, %v844
    %v1061 = vpack.c.b16 %v849, %v845
    %v1062 = vpack.c.b16 %v850, %v846
    %v1063 = vpack.c.b16 %v855, %v851
    %v1064 = vpack.c.b16 %v856, %v852
    %v1065 = vpack.c.b16 %v857, %v853
    %v1066 = vpack.c.b16 %v858, %v854
    %v1067 = vpack.c.b16 %v863, %v859
    %v1068 = vpack.c.b16 %v864, %v860
    %v1069 = vpack.c.b16 %v865, %v861
    %v1070 = vpack.c.b16 %v866, %v862
    %v1071 = vpack.c.b16 %v871, %v867
    %v1072 = vpack.c.b16 %v872, %v868
    %v1073 = vpack.c.b16 %v873, %v869
    %v1074 = vpack.c.b16 %v874, %v870
    %v1075 = vpack.c.b16 %v879, %v875
    %v1076 = vpack.c.b16 %v880, %v876
    %v1077 = vpack.c.b16 %v881, %v877
    %v1078 = vpack.c.b16 %v882, %v878
    %v1079 = vpack.c.b16 %v887, %v883
    %v1080 = vpack.c.b16 %v888, %v884
    %v1081 = vpack.c.b16 %v889, %v885
    %v1082 = vpack.c.b16 %v890, %v886
    %v1083 = vpack.c.b16 %v895, %v891
    %v1084 = vpack.c.b16 %v896, %v892
    %v1085 = vpack.c.b16 %v897, %v893
    %v1086 = vpack.c.b16 %v898, %v894
    %v1087 = vpack.c.b16 %v903, %v899
    %v1088 = vpack.c.b16 %v904, %v900
    %v1089 = vpack.c.b16 %v905, %v901
    %v1090 = vpack.c.b16 %v906, %v902
    %v1091 = vpack.c.b16 %v911, %v907
    %v1092 = vpack.c.b16 %v912, %v908
    %v1093 = vpack.c.b16 %v913, %v909
    %v1094 = vpack.c.b16 %v914, %v910
    %v1095 = vpack.c.b16 %v919, %v915
    %v1096 = vpack.c.b16 %v920, %v916
    %v1097 = vpack.c.b16 %v921, %v917
    %v1098 = vpack.c.b16 %v922, %v918
    %v1099 = vpack.c.b16 %v927, %v923
    %v1100 = vpack.c.b16 %v928, %v924
    %v1101 = vpack.c.b16 %v929, %v925
    %v1102 = vpack.c.b16 %v930, %v926
    %v1103 = vpack.c.b16 %v935, %v931
    %v1104 = vpack.c.b16 %v936, %v932
    %v1105 = vpack.c.b16 %v937, %v933
    %v1106 = vpack.c.b16 %v938, %v934
    %v1107 = vpack.c.b16 %v943, %v939
    %v1108 = vpack.c.b16 %v944, %v940
    %v1109 = vpack.c.b16 %v945, %v941
    %v1110 = vpack.c.b16 %v946, %v942
    %v1111 = vpack.c.b16 %v951, %v947
    %v1112 = vpack.c.b16 %v952, %v948
    %v1113 = vpack.c.b16 %v953, %v949
    %v1114 = vpack.c.b16 %v954, %v950
    %v1115 = vpack.c.b16 %v959, %v955
    %v1116 = vpack.c.b16 %v960, %v956
    %v1117 = vpack.c.b16 %v961, %v957
    %v1118 = vpack.c.b16 %v962, %v958
    %v1119 = vpack.c.b16 %v967, %v963
    %v1120 = vpack.c.b16 %v968, %v964
    %v1121 = vpack.c.b16 %v969, %v965
    %v1122 = vpack.c.b16 %v970, %v966
    %v1123 = vpack.c.b16 %v975, %v971
    %v1124 = vpack.c.b16 %v976, %v972
    %v1125 = vpack.c.b16 %v977, %v973
    %v1126 = vpack.c.b16 %v978, %v974
    %v1127 = vpack.c.b16 %v983, %v979
    %v1128 = vpack.c.b16 %v984, %v980
    %v1129 = vpack.c.b16 %v985, %v981
    %v1130 = vpack.c.b16 %v986, %v982
    %v1131 = vpack.c.b16 %v991, %v987
    %v1132 = vpack.c.b16 %v992, %v988
    %v1133 = vpack.c.b16 %v993, %v989
    %v1134 = vpack.c.b16 %v994, %v990
    %v1135 = vpack.c.b16 %v999, %v995
    %v1136 = vpack.c.b16 %v1000, %v996
    %v1137 = vpack.c.b16 %v1001, %v997
    %v1138 = vpack.c.b16 %v1002, %v998
    %v1139 = vpack.c.b16 %v1007, %v1003
    %v1140 = vpack.c.b16 %v1008, %v1004
    %v1141 = vpack.c.b16 %v1009, %v1005
    %v1142 = vpack.c.b16 %v1010, %v1006
    %v1143 = vpack.c.b16 %v1015, %v1011
    %v1144 = vpack.c.b16 %v1016, %v1012
    %v1145 = vpack.c.b16 %v1017, %v1013
    %v1146 = vpack.c.b16 %v1018, %v1014
    %1275 = vmatprep.subr.bf16.mxu0 %v1020
    %1276 = vmatpush1.bf16.msra.mxu0 %v1019
    %1277 = vmatprep.subr.bf16.mxu0 %v1024
    %1278 = vmatpush1.bf16.msra.mxu0 %v1023
    %1279 = vmatprep.subr.bf16.mxu0 %v1028
    %1280 = vmatpush1.bf16.msra.mxu0 %v1027
    %1281 = vmatprep.subr.bf16.mxu0 %v1032
    %1282 = vmatpush1.bf16.msra.mxu0 %v1031
    %1283 = vmatprep.subr.bf16.mxu0 %v1036
    %1284 = vmatpush1.bf16.msra.mxu0 %v1035
    %1285 = vmatprep.subr.bf16.mxu0 %v1040
    %1286 = vmatpush1.bf16.msra.mxu0 %v1039
    %1287 = vmatprep.subr.bf16.mxu0 %v1044
    %1288 = vmatpush1.bf16.msra.mxu0 %v1043
    %1289 = vmatprep.subr.bf16.mxu0 %v1048
    %1290 = vmatpush1.bf16.msra.mxu0 %v1047
    %1291 = vmatprep.subr.bf16.mxu0 %v1052
    %1292 = vmatpush1.bf16.msra.mxu0 %v1051
    %1293 = vmatprep.subr.bf16.mxu0 %v1056
    %1294 = vmatpush1.bf16.msra.mxu0 %v1055
    %1295 = vmatprep.subr.bf16.mxu0 %v1060
    %1296 = vmatpush1.bf16.msra.mxu0 %v1059
    %1297 = vmatprep.subr.bf16.mxu0 %v1064
    %1298 = vmatpush1.bf16.msra.mxu0 %v1063
    %1299 = vmatprep.subr.bf16.mxu0 %v1068
    %1300 = vmatpush1.bf16.msra.mxu0 %v1067
    %1301 = vmatprep.subr.bf16.mxu0 %v1072
    %1302 = vmatpush1.bf16.msra.mxu0 %v1071
    %1303 = vmatprep.subr.bf16.mxu0 %v1076
    %1304 = vmatpush1.bf16.msra.mxu0 %v1075
    %1305 = vmatprep.subr.bf16.mxu0 %v1080
    %1306 = vmatpush1.bf16.msra.mxu0 %v1079
    %1307 = vmatprep.mubr.bf16.mxu0 %v482
    %1308 = vmatmul.mubr.bf16.gmra.mrb[0].mxu0 %v481
    %v1309 = vpop.f32.mrb[0].mxu0
    %v1310 = vadd.f32 %v618, %v1309
    %v1311 = vpop.f32.mrb[0].mxu0
    %v1312 = vadd.f32 %v622, %v1311
    %v1313 = vpop.f32.mrb[0].mxu0
    %v1314 = vpop.f32.mrb[0].mxu0
    %1315 = vdwg.mxu0
    %1316 = vmatprep.subr.bf16.mxu0 %v1084
    %1317 = vmatpush1.bf16.msra.mxu0 %v1083
    %1318 = vmatprep.subr.bf16.mxu0 %v1088
    %1319 = vmatpush1.bf16.msra.mxu0 %v1087
    %1320 = vmatprep.subr.bf16.mxu0 %v1092
    %1321 = vmatpush1.bf16.msra.mxu0 %v1091
    %1322 = vmatprep.subr.bf16.mxu0 %v1096
    %1323 = vmatpush1.bf16.msra.mxu0 %v1095
    %1324 = vmatprep.subr.bf16.mxu0 %v1100
    %1325 = vmatpush1.bf16.msra.mxu0 %v1099
    %1326 = vmatprep.subr.bf16.mxu0 %v1104
    %1327 = vmatpush1.bf16.msra.mxu0 %v1103
    %1328 = vmatprep.subr.bf16.mxu0 %v1108
    %1329 = vmatpush1.bf16.msra.mxu0 %v1107
    %1330 = vmatprep.subr.bf16.mxu0 %v1112
    %1331 = vmatpush1.bf16.msra.mxu0 %v1111
    %1332 = vmatprep.subr.bf16.mxu0 %v1116
    %1333 = vmatpush1.bf16.msra.mxu0 %v1115
    %1334 = vmatprep.subr.bf16.mxu0 %v1120
    %1335 = vmatpush1.bf16.msra.mxu0 %v1119
    %1336 = vmatprep.subr.bf16.mxu0 %v1124
    %1337 = vmatpush1.bf16.msra.mxu0 %v1123
    %1338 = vmatprep.subr.bf16.mxu0 %v1128
    %1339 = vmatpush1.bf16.msra.mxu0 %v1127
    %1340 = vmatprep.subr.bf16.mxu0 %v1132
    %1341 = vmatpush1.bf16.msra.mxu0 %v1131
    %1342 = vmatprep.subr.bf16.mxu0 %v1136
    %1343 = vmatpush1.bf16.msra.mxu0 %v1135
    %1344 = vmatprep.subr.bf16.mxu0 %v1140
    %1345 = vmatpush1.bf16.msra.mxu0 %v1139
    %1346 = vmatprep.subr.bf16.mxu0 %v1144
    %1347 = vmatpush1.bf16.msra.mxu0 %v1143
    %1348 = vmatprep.mubr.bf16.mxu0 %v484
    %1349 = vmatmul.mubr.bf16.gmra.mrb[0].mxu0 %v483
    %v1350 = vpop.f32.mrb[0].mxu0
    %v1351 = vadd.f32 %v1310, %v1350
    %v1352 = vpop.f32.mrb[0].mxu0
    %v1353 = vadd.f32 %v1312, %v1352
    %v1354 = vpop.f32.mrb[0].mxu0
    %v1355 = vpop.f32.mrb[0].mxu0
    %1356 = vdwg.mxu0
    %1357 = vmatprep.subr.bf16.mxu0 %v1022
    %1358 = vmatpush1.bf16.msra.mxu0 %v1021
    %1359 = vmatprep.subr.bf16.mxu0 %v1026
    %1360 = vmatpush1.bf16.msra.mxu0 %v1025
    %1361 = vmatprep.subr.bf16.mxu0 %v1030
    %1362 = vmatpush1.bf16.msra.mxu0 %v1029
    %1363 = vmatprep.subr.bf16.mxu0 %v1034
    %1364 = vmatpush1.bf16.msra.mxu0 %v1033
    %1365 = vmatprep.subr.bf16.mxu0 %v1038
    %1366 = vmatpush1.bf16.msra.mxu0 %v1037
    %1367 = vmatprep.subr.bf16.mxu0 %v1042
    %1368 = vmatpush1.bf16.msra.mxu0 %v1041
    %1369 = vmatprep.subr.bf16.mxu0 %v1046
    %1370 = vmatpush1.bf16.msra.mxu0 %v1045
    %1371 = vmatprep.subr.bf16.mxu0 %v1050
    %1372 = vmatpush1.bf16.msra.mxu0 %v1049
    %1373 = vmatprep.subr.bf16.mxu0 %v1054
    %1374 = vmatpush1.bf16.msra.mxu0 %v1053
    %1375 = vmatprep.subr.bf16.mxu0 %v1058
    %1376 = vmatpush1.bf16.msra.mxu0 %v1057
    %1377 = vmatprep.subr.bf16.mxu0 %v1062
    %1378 = vmatpush1.bf16.msra.mxu0 %v1061
    %1379 = vmatprep.subr.bf16.mxu0 %v1066
    %1380 = vmatpush1.bf16.msra.mxu0 %v1065
    %1381 = vmatprep.subr.bf16.mxu0 %v1070
    %1382 = vmatpush1.bf16.msra.mxu0 %v1069
    %1383 = vmatprep.subr.bf16.mxu0 %v1074
    %1384 = vmatpush1.bf16.msra.mxu0 %v1073
    %1385 = vmatprep.subr.bf16.mxu0 %v1078
    %1386 = vmatpush1.bf16.msra.mxu0 %v1077
    %1387 = vmatprep.subr.bf16.mxu0 %v1082
    %1388 = vmatpush1.bf16.msra.mxu0 %v1081
    %1389 = vmatprep.mubr.bf16.mxu0 %v482
    %1390 = vmatmul.mubr.bf16.gmra.mrb[0].mxu0 %v481
    %v1391 = vpop.f32.mrb[0].mxu0
    %v1392 = vadd.f32 %v626, %v1391
    %v1393 = vpop.f32.mrb[0].mxu0
    %v1394 = vadd.f32 %v630, %v1393
    %v1395 = vpop.f32.mrb[0].mxu0
    %v1396 = vpop.f32.mrb[0].mxu0
    %1397 = vdwg.mxu0
    %1398 = vmatprep.subr.bf16.mxu0 %v1086
    %1399 = vmatpush1.bf16.msra.mxu0 %v1085
    %1400 = vmatprep.subr.bf16.mxu0 %v1090
    %1401 = vmatpush1.bf16.msra.mxu0 %v1089
    %1402 = vmatprep.subr.bf16.mxu0 %v1094
    %1403 = vmatpush1.bf16.msra.mxu0 %v1093
    %1404 = vmatprep.subr.bf16.mxu0 %v1098
    %1405 = vmatpush1.bf16.msra.mxu0 %v1097
    %1406 = vmatprep.subr.bf16.mxu0 %v1102
    %1407 = vmatpush1.bf16.msra.mxu0 %v1101
    %1408 = vmatprep.subr.bf16.mxu0 %v1106
    %1409 = vmatpush1.bf16.msra.mxu0 %v1105
    %1410 = vmatprep.subr.bf16.mxu0 %v1110
    %1411 = vmatpush1.bf16.msra.mxu0 %v1109
    %1412 = vmatprep.subr.bf16.mxu0 %v1114
    %1413 = vmatpush1.bf16.msra.mxu0 %v1113
    %1414 = vmatprep.subr.bf16.mxu0 %v1118
    %1415 = vmatpush1.bf16.msra.mxu0 %v1117
    %1416 = vmatprep.subr.bf16.mxu0 %v1122
    %1417 = vmatpush1.bf16.msra.mxu0 %v1121
    %1418 = vmatprep.subr.bf16.mxu0 %v1126
    %1419 = vmatpush1.bf16.msra.mxu0 %v1125
    %1420 = vmatprep.subr.bf16.mxu0 %v1130
    %1421 = vmatpush1.bf16.msra.mxu0 %v1129
    %1422 = vmatprep.subr.bf16.mxu0 %v1134
    %1423 = vmatpush1.bf16.msra.mxu0 %v1133
    %1424 = vmatprep.subr.bf16.mxu0 %v1138
    %1425 = vmatpush1.bf16.msra.mxu0 %v1137
    %1426 = vmatprep.subr.bf16.mxu0 %v1142
    %1427 = vmatpush1.bf16.msra.mxu0 %v1141
    %1428 = vmatprep.subr.bf16.mxu0 %v1146
    %1429 = vmatpush1.bf16.msra.mxu0 %v1145
    %1430 = vmatprep.mubr.bf16.mxu0 %v484
    %1431 = vmatmul.mubr.bf16.gmra.mrb[0].mxu0 %v483
    %v1432 = vpop.f32.mrb[0].mxu0
    %v1433 = vadd.f32 %v1392, %v1432
    %v1434 = vpop.f32.mrb[0].mxu0
    %v1435 = vadd.f32 %v1394, %v1434
    %v1436 = vpop.f32.mrb[0].mxu0
    %v1437 = vpop.f32.mrb[0].mxu0
    %1438 = vdwg.mxu0
    %v1439 = vmax.f32 %v1351, 0.0
    %v1440 = vmax.f32 %v1353, 0.0
    %v1441 = vmax.f32 %v1433, 0.0
    %v1442 = vmax.f32 %v1435, 0.0
    %v1443 = vpack.c.bf16 %v1439, %v1439
    %v1444 = vpack.c.bf16 %v1440, %v1440
    %v1445 = vpack.c.bf16 %v1441, %v1441
    %v1446 = vpack.c.bf16 %v1442, %v1442
    %v1447 = vld [vmem:[#allocation11] sm:$0xf]
    %v1448 = vld [vmem:[#allocation11 + $0x4] sm:$0xf]
    %v1449 = vld [vmem:[#allocation11 + $0x8] sm:$0xf]
    %v1450 = vld [vmem:[#allocation11 + $0xc] sm:$0xf]
    %v1451 = vld [vmem:[#allocation11 + $0x10] sm:$0xf]
    %v1452 = vld [vmem:[#allocation11 + $0x14] sm:$0xf]
    %v1453 = vld [vmem:[#allocation11 + $0x18] sm:$0xf]
    %v1454 = vld [vmem:[#allocation11 + $0x1c] sm:$0xf]
    %v1455 = vld [vmem:[#allocation11 + $0x20] sm:$0xf]
    %v1456 = vld [vmem:[#allocation11 + $0x24] sm:$0xf]
    %v1457 = vld [vmem:[#allocation11 + $0x28] sm:$0xf]
    %v1458 = vld [vmem:[#allocation11 + $0x2c] sm:$0xf]
    %v1459 = vld [vmem:[#allocation11 + $0x30] sm:$0xf]
    %v1460 = vld [vmem:[#allocation11 + $0x34] sm:$0xf]
    %v1461 = vld [vmem:[#allocation11 + $0x38] sm:$0xf]
    %v1462 = vld [vmem:[#allocation11 + $0x3c] sm:$0xf]
    %v1463 = vld [vmem:[#allocation11 + $0x40] sm:$0xf]
    %v1464 = vld [vmem:[#allocation11 + $0x44] sm:$0xf]
    %v1465 = vld [vmem:[#allocation11 + $0x48] sm:$0xf]
    %v1466 = vld [vmem:[#allocation11 + $0x4c] sm:$0xf]
    %v1467 = vld [vmem:[#allocation11 + $0x50] sm:$0xf]
    %v1468 = vld [vmem:[#allocation11 + $0x54] sm:$0xf]
    %v1469 = vld [vmem:[#allocation11 + $0x58] sm:$0xf]
    %v1470 = vld [vmem:[#allocation11 + $0x5c] sm:$0xf]
    %v1471 = vld [vmem:[#allocation11 + $0x60] sm:$0xf]
    %v1472 = vld [vmem:[#allocation11 + $0x64] sm:$0xf]
    %v1473 = vld [vmem:[#allocation11 + $0x68] sm:$0xf]
    %v1474 = vld [vmem:[#allocation11 + $0x6c] sm:$0xf]
    %v1475 = vld [vmem:[#allocation11 + $0x70] sm:$0xf]
    %v1476 = vld [vmem:[#allocation11 + $0x74] sm:$0xf]
    %v1477 = vld [vmem:[#allocation11 + $0x78] sm:$0xf]
    %v1478 = vld [vmem:[#allocation11 + $0x7c] sm:$0xf]
    %v1479 = vld [vmem:[#allocation11 + $0x80] sm:$0xf]
    %v1480 = vld [vmem:[#allocation11 + $0x84] sm:$0xf]
    %v1481 = vld [vmem:[#allocation11 + $0x88] sm:$0xf]
    %v1482 = vld [vmem:[#allocation11 + $0x8c] sm:$0xf]
    %v1483 = vld [vmem:[#allocation11 + $0x90] sm:$0xf]
    %v1484 = vld [vmem:[#allocation11 + $0x94] sm:$0xf]
    %v1485 = vld [vmem:[#allocation11 + $0x98] sm:$0xf]
    %v1486 = vld [vmem:[#allocation11 + $0x9c] sm:$0xf]
    %v1487 = vld [vmem:[#allocation11 + $0xa0] sm:$0xf]
    %v1488 = vld [vmem:[#allocation11 + $0xa4] sm:$0xf]
    %v1489 = vld [vmem:[#allocation11 + $0xa8] sm:$0xf]
    %v1490 = vld [vmem:[#allocation11 + $0xac] sm:$0xf]
    %v1491 = vld [vmem:[#allocation11 + $0xb0] sm:$0xf]
    %v1492 = vld [vmem:[#allocation11 + $0xb4] sm:$0xf]
    %v1493 = vld [vmem:[#allocation11 + $0xb8] sm:$0xf]
    %v1494 = vld [vmem:[#allocation11 + $0xbc] sm:$0xf]
    %v1495 = vld [vmem:[#allocation11 + $0xc0] sm:$0xf]
    %v1496 = vld [vmem:[#allocation11 + $0xc4] sm:$0xf]
    %v1497 = vld [vmem:[#allocation11 + $0xc8] sm:$0xf]
    %v1498 = vld [vmem:[#allocation11 + $0xcc] sm:$0xf]
    %v1499 = vld [vmem:[#allocation11 + $0xd0] sm:$0xf]
    %v1500 = vld [vmem:[#allocation11 + $0xd4] sm:$0xf]
    %v1501 = vld [vmem:[#allocation11 + $0xd8] sm:$0xf]
    %v1502 = vld [vmem:[#allocation11 + $0xdc] sm:$0xf]
    %v1503 = vld [vmem:[#allocation11 + $0xe0] sm:$0xf]
    %v1504 = vld [vmem:[#allocation11 + $0xe4] sm:$0xf]
    %v1505 = vld [vmem:[#allocation11 + $0xe8] sm:$0xf]
    %v1506 = vld [vmem:[#allocation11 + $0xec] sm:$0xf]
    %v1507 = vld [vmem:[#allocation11 + $0xf0] sm:$0xf]
    %v1508 = vld [vmem:[#allocation11 + $0xf4] sm:$0xf]
    %v1509 = vld [vmem:[#allocation11 + $0xf8] sm:$0xf]
    %v1510 = vld [vmem:[#allocation11 + $0xfc] sm:$0xf]
    %v1511 = vld [vmem:[%s8] sm:$0x1]
    %v1513 = vlaneseq
    %v1514 = vshrl.u32 %v1513, 7
    %v1515 = vsub.s32 0, %v1514
    %v1516 = vrot.slane %v1511, %v1515
    %v1582 = vunpack.c.l.b16 %v1447
    %v1583 = vunpack.c.l.b16 %v1448
    %v1584 = vunpack.c.l.b16 %v1449
    %v1585 = vunpack.c.l.b16 %v1450
    %v1586 = vunpack.c.l.b16 %v1451
    %v1587 = vunpack.c.l.b16 %v1452
    %v1588 = vunpack.c.l.b16 %v1453
    %v1589 = vunpack.c.l.b16 %v1454
    %v1590 = vunpack.c.l.b16 %v1455
    %v1591 = vunpack.c.l.b16 %v1456
    %v1592 = vunpack.c.l.b16 %v1457
    %v1593 = vunpack.c.l.b16 %v1458
    %v1594 = vunpack.c.l.b16 %v1459
    %v1595 = vunpack.c.l.b16 %v1460
    %v1596 = vunpack.c.l.b16 %v1461
    %v1597 = vunpack.c.l.b16 %v1462
    %v1598 = vunpack.c.l.b16 %v1463
    %v1599 = vunpack.c.l.b16 %v1464
    %v1600 = vunpack.c.l.b16 %v1465
    %v1601 = vunpack.c.l.b16 %v1466
    %v1602 = vunpack.c.l.b16 %v1467
    %v1603 = vunpack.c.l.b16 %v1468
    %v1604 = vunpack.c.l.b16 %v1469
    %v1605 = vunpack.c.l.b16 %v1470
    %v1606 = vunpack.c.l.b16 %v1471
    %v1607 = vunpack.c.l.b16 %v1472
    %v1608 = vunpack.c.l.b16 %v1473
    %v1609 = vunpack.c.l.b16 %v1474
    %v1610 = vunpack.c.l.b16 %v1475
    %v1611 = vunpack.c.l.b16 %v1476
    %v1612 = vunpack.c.l.b16 %v1477
    %v1613 = vunpack.c.l.b16 %v1478
    %v1614 = vunpack.c.l.b16 %v1479
    %v1615 = vunpack.c.l.b16 %v1480
    %v1616 = vunpack.c.l.b16 %v1481
    %v1617 = vunpack.c.l.b16 %v1482
    %v1618 = vunpack.c.l.b16 %v1483
    %v1619 = vunpack.c.l.b16 %v1484
    %v1620 = vunpack.c.l.b16 %v1485
    %v1621 = vunpack.c.l.b16 %v1486
    %v1622 = vunpack.c.l.b16 %v1487
    %v1623 = vunpack.c.l.b16 %v1488
    %v1624 = vunpack.c.l.b16 %v1489
    %v1625 = vunpack.c.l.b16 %v1490
    %v1626 = vunpack.c.l.b16 %v1491
    %v1627 = vunpack.c.l.b16 %v1492
    %v1628 = vunpack.c.l.b16 %v1493
    %v1629 = vunpack.c.l.b16 %v1494
    %v1630 = vunpack.c.l.b16 %v1495
    %v1631 = vunpack.c.l.b16 %v1496
    %v1632 = vunpack.c.l.b16 %v1497
    %v1633 = vunpack.c.l.b16 %v1498
    %v1634 = vunpack.c.l.b16 %v1499
    %v1635 = vunpack.c.l.b16 %v1500
    %v1636 = vunpack.c.l.b16 %v1501
    %v1637 = vunpack.c.l.b16 %v1502
    %v1638 = vunpack.c.l.b16 %v1503
    %v1639 = vunpack.c.l.b16 %v1504
    %v1640 = vunpack.c.l.b16 %v1505
    %v1641 = vunpack.c.l.b16 %v1506
    %v1642 = vunpack.c.l.b16 %v1507
    %v1643 = vunpack.c.l.b16 %v1508
    %v1644 = vunpack.c.l.b16 %v1509
    %v1645 = vunpack.c.l.b16 %v1510
    %v1646 = vpack.c.b16 %v1583, %v1582
    %v1647 = vpack.c.b16 %v1585, %v1584
    %v1648 = vpack.c.b16 %v1587, %v1586
    %v1649 = vpack.c.b16 %v1589, %v1588
    %v1650 = vpack.c.b16 %v1591, %v1590
    %v1651 = vpack.c.b16 %v1593, %v1592
    %v1652 = vpack.c.b16 %v1595, %v1594
    %v1653 = vpack.c.b16 %v1597, %v1596
    %v1654 = vpack.c.b16 %v1599, %v1598
    %v1655 = vpack.c.b16 %v1601, %v1600
    %v1656 = vpack.c.b16 %v1603, %v1602
    %v1657 = vpack.c.b16 %v1605, %v1604
    %v1658 = vpack.c.b16 %v1607, %v1606
    %v1659 = vpack.c.b16 %v1609, %v1608
    %v1660 = vpack.c.b16 %v1611, %v1610
    %v1661 = vpack.c.b16 %v1613, %v1612
    %v1662 = vpack.c.b16 %v1615, %v1614
    %v1663 = vpack.c.b16 %v1617, %v1616
    %v1664 = vpack.c.b16 %v1619, %v1618
    %v1665 = vpack.c.b16 %v1621, %v1620
    %v1666 = vpack.c.b16 %v1623, %v1622
    %v1667 = vpack.c.b16 %v1625, %v1624
    %v1668 = vpack.c.b16 %v1627, %v1626
    %v1669 = vpack.c.b16 %v1629, %v1628
    %v1670 = vpack.c.b16 %v1631, %v1630
    %v1671 = vpack.c.b16 %v1633, %v1632
    %v1672 = vpack.c.b16 %v1635, %v1634
    %v1673 = vpack.c.b16 %v1637, %v1636
    %v1674 = vpack.c.b16 %v1639, %v1638
    %v1675 = vpack.c.b16 %v1641, %v1640
    %v1676 = vpack.c.b16 %v1643, %v1642
    %v1677 = vpack.c.b16 %v1645, %v1644
    %1710 = vmatprep.subr.bf16.mxu0 0
    %1711 = vmatpush1.bf16.msra.mxu0 %v1646
    %1712 = vmatprep.subr.bf16.mxu0 0
    %1713 = vmatpush1.bf16.msra.mxu0 %v1647
    %1714 = vmatprep.subr.bf16.mxu0 0
    %1715 = vmatpush1.bf16.msra.mxu0 %v1648
    %1716 = vmatprep.subr.bf16.mxu0 0
    %1717 = vmatpush1.bf16.msra.mxu0 %v1649
    %1718 = vmatprep.subr.bf16.mxu0 0
    %1719 = vmatpush1.bf16.msra.mxu0 %v1650
    %1720 = vmatprep.subr.bf16.mxu0 0
    %1721 = vmatpush1.bf16.msra.mxu0 %v1651
    %1722 = vmatprep.subr.bf16.mxu0 0
    %1723 = vmatpush1.bf16.msra.mxu0 %v1652
    %1724 = vmatprep.subr.bf16.mxu0 0
    %1725 = vmatpush1.bf16.msra.mxu0 %v1653
    %1726 = vmatprep.subr.bf16.mxu0 0
    %1727 = vmatpush1.bf16.msra.mxu0 %v1654
    %1728 = vmatprep.subr.bf16.mxu0 0
    %1729 = vmatpush1.bf16.msra.mxu0 %v1655
    %1730 = vmatprep.subr.bf16.mxu0 0
    %1731 = vmatpush1.bf16.msra.mxu0 %v1656
    %1732 = vmatprep.subr.bf16.mxu0 0
    %1733 = vmatpush1.bf16.msra.mxu0 %v1657
    %1734 = vmatprep.subr.bf16.mxu0 0
    %1735 = vmatpush1.bf16.msra.mxu0 %v1658
    %1736 = vmatprep.subr.bf16.mxu0 0
    %1737 = vmatpush1.bf16.msra.mxu0 %v1659
    %1738 = vmatprep.subr.bf16.mxu0 0
    %1739 = vmatpush1.bf16.msra.mxu0 %v1660
    %1740 = vmatprep.subr.bf16.mxu0 0
    %1741 = vmatpush1.bf16.msra.mxu0 %v1661
    %1742 = vmatprep.mubr.bf16.mxu0 %v1444
    %1743 = vmatmul.mubr.bf16.gmra.mrb[0].mxu0 %v1443
    %v1744 = vpop.f32.mrb[0].mxu0
    %v1745 = vadd.f32 %v1516, %v1744
    %v1746 = vpop.f32.mrb[0].mxu0
    %v1747 = vpop.f32.mrb[0].mxu0
    %v1748 = vpop.f32.mrb[0].mxu0
    %1749 = vdwg.mxu0
    %1750 = vmatprep.subr.bf16.mxu0 0
    %1751 = vmatpush1.bf16.msra.mxu0 %v1662
    %1752 = vmatprep.subr.bf16.mxu0 0
    %1753 = vmatpush1.bf16.msra.mxu0 %v1663
    %1754 = vmatprep.subr.bf16.mxu0 0
    %1755 = vmatpush1.bf16.msra.mxu0 %v1664
    %1756 = vmatprep.subr.bf16.mxu0 0
    %1757 = vmatpush1.bf16.msra.mxu0 %v1665
    %1758 = vmatprep.subr.bf16.mxu0 0
    %1759 = vmatpush1.bf16.msra.mxu0 %v1666
    %1760 = vmatprep.subr.bf16.mxu0 0
    %1761 = vmatpush1.bf16.msra.mxu0 %v1667
    %1762 = vmatprep.subr.bf16.mxu0 0
    %1763 = vmatpush1.bf16.msra.mxu0 %v1668
    %1764 = vmatprep.subr.bf16.mxu0 0
    %1765 = vmatpush1.bf16.msra.mxu0 %v1669
    %1766 = vmatprep.subr.bf16.mxu0 0
    %1767 = vmatpush1.bf16.msra.mxu0 %v1670
    %1768 = vmatprep.subr.bf16.mxu0 0
    %1769 = vmatpush1.bf16.msra.mxu0 %v1671
    %1770 = vmatprep.subr.bf16.mxu0 0
    %1771 = vmatpush1.bf16.msra.mxu0 %v1672
    %1772 = vmatprep.subr.bf16.mxu0 0
    %1773 = vmatpush1.bf16.msra.mxu0 %v1673
    %1774 = vmatprep.subr.bf16.mxu0 0
    %1775 = vmatpush1.bf16.msra.mxu0 %v1674
    %1776 = vmatprep.subr.bf16.mxu0 0
    %1777 = vmatpush1.bf16.msra.mxu0 %v1675
    %1778 = vmatprep.subr.bf16.mxu0 0
    %1779 = vmatpush1.bf16.msra.mxu0 %v1676
    %1780 = vmatprep.subr.bf16.mxu0 0
    %1781 = vmatpush1.bf16.msra.mxu0 %v1677
    %1782 = vmatprep.mubr.bf16.mxu0 %v1446
    %1783 = vmatmul.mubr.bf16.gmra.mrb[0].mxu0 %v1445
    %v1784 = vpop.f32.mrb[0].mxu0
    %v1785 = vadd.f32 %v1745, %v1784
    %v1786 = vpop.f32.mrb[0].mxu0
    %v1787 = vpop.f32.mrb[0].mxu0
    %v1788 = vpop.f32.mrb[0].mxu0
    %1789 = vdwg.mxu0
    %1790 = vst [vmem:[#allocation13] sm:$0xff] %v1785
    // Predicated region
    $region62: #{_nn_forward_impl.1} parent=1 // pred_check
      _
    $region63: #{_nn_forward_impl.1} parent=1 // pred_check_branch
      %1792 = sbr.rel (0) target = $region65
    $region64: #{_nn_forward_impl.1} parent=1 // pred_region
      %s1794 = ssub.s32 128, 128
      %1795 = vsyncadd [#allocation4], %s1794
      %s1797 = sshll.u32 [#allocation13], 4
      %s1798 = int_to_ptr.vmem [resolvable:$true] %s1797
      %1800 = dma.vmem_to_hbm [thread:$0]  %s1798, 128, %s9, [#allocation4]
    $region65: #{_nn_forward_impl.1} parent=1 // pred_fallthru
      _
    // Predicated region
    $region66: #{_nn_forward_impl.1} parent=1 // pred_check
      _
    $region67: #{_nn_forward_impl.1} parent=1 // pred_check_branch
      %1802 = sbr.rel (0) target = $region69
    $region68: #{_nn_forward_impl.1} parent=1 // pred_region
      %1803 = dma.done [#allocation4], 128
    $region69: #{_nn_forward_impl.1} parent=1 // pred_fallthru
      _
    %1804 = vsyncpa [#allocation3], 1
    %1805 = vsyncpa [#allocation6], 1
    %1806 = vsyncpa [#allocation9], 1
    %1807 = vsyncpa [#allocation12], 1
    %1808 = vsyncpa [#allocation4], 1

</llo_original>
